<compile_context>
chip_gen: v7x
topology: tpu7x:2x2x1
jax: 0.10.0
libtpu: 0.0.40
codegen_flags: <defaults>
</compile_context>

<pallas_src>
import math

import jax
import jax.numpy as jnp
from jax.experimental import pallas as pl
from jax.experimental.pallas import tpu as pltpu


# ---------------------------------------------------------------------------
# Fused kernel: 1x1 conv + PixelShuffle in one pass (small C_in).
# ---------------------------------------------------------------------------

def _make_fused_kernel(c_in, c_grp, r, n_chunks, cw):
    """Build the fused conv+shuffle kernel body (static shapes baked in)."""

    def kernel(w_ref, b_ref, e_ref, f_ref, x_ref, o_ref):
        # w_ref: SMEM (c_grp*r*r, c_in)   b_ref: SMEM (c_grp*r*r,)
        # e_ref: VMEM (r, cw, r*cw)       f_ref: VMEM (r, r*Th, Th)
        # x_ref: VMEM (c_in, Th, W)       o_ref: VMEM (c_grp, r*Th, r*W)
        xs = [x_ref[ic].astype(jnp.float32) for ic in range(c_in)]
        es = [e_ref[j] for j in range(r)]
        fs = [f_ref[i] for i in range(r)]

        for c in range(c_grp):
            # 1x1 conv planes for this output-channel group (VPU, scalar bcast).
            planes = []
            for i in range(r):
                for j in range(r):
                    oc = c * r * r + i * r + j
                    p = w_ref[oc, 0] * xs[0]
                    for ic in range(1, c_in):
                        p = p + w_ref[oc, ic] * xs[ic]
                    planes.append(p + b_ref[oc])
            # PixelShuffle interleave via 0/1 spread matmuls (MXU):
            #   out[r*t+i, r*w+j] = plane_{i,j}[t, w]
            for k in range(n_chunks):
                sl = slice(k * cw, (k + 1) * cw)
                blk = None
                for i in range(r):
                    row_i = None
                    for j in range(r):
                        t = jnp.dot(planes[i * r + j][:, sl], es[j],
                                    preferred_element_type=jnp.float32)
                        row_i = t if row_i is None else row_i + t
                    t = jnp.dot(fs[i], row_i, preferred_element_type=jnp.float32)
                    blk = t if blk is None else blk + t
                o_ref[c, :, k * r * cw:(k + 1) * r * cw] = blk.astype(o_ref.dtype)

    return kernel


def _choose_row_tile(h, w, c_in, c_out, elem_bytes=4, budget=6 * 1024 * 1024):
    """Largest layout-legal row tile whose in+out blocks fit a ~6 MiB budget."""
    per_row = (c_in + c_out) * w * elem_bytes
    if h * per_row <= budget:
        return h                      # whole image: always (8,128)-legal
    best = None
    th = 8
    while th <= h:
        if h % th == 0 and th * per_row <= budget:
            best = th
        th += 8
    return best if best is not None else h


def upsample_fused_pallas(x_nchw, weight_oc_ic, bias, factor):
    """Fused 1x1 conv + PixelShuffle. x: (N, C, H, W) -> (N, C, H*r, W*r)."""
    N, c_in, H, W = x_nchw.shape
    r = factor
    c_out = weight_oc_ic.shape[0]
    c_grp = c_out // (r * r)
    assert c_grp * r * r == c_out and c_grp == c_in

    th = _choose_row_tile(H, W, c_in, c_out)
    cw = 128 if (W % 128 == 0) else W          # lane chunk for the E matmul
    n_chunks = W // cw

    f32 = jnp.float32
    # E[j] (cw, r*cw): E[j][w, r*w + j] = 1  -> spreads lanes w -> r*w+j.
    ww = jnp.arange(r * cw)[None, :]
    wsrc = jnp.arange(cw)[:, None]
    e = jnp.stack([(ww == r * wsrc + j).astype(f32) for j in range(r)])
    # F[i] (r*th, th): F[i][r*t + i, t] = 1  -> spreads sublanes t -> r*t+i.
    ss = jnp.arange(r * th)[:, None]
    tsrc = jnp.arange(th)[None, :]
    f = jnp.stack([(ss == r * tsrc + i).astype(f32) for i in range(r)])

    kernel = _make_fused_kernel(c_in, c_grp, r, n_chunks, cw)

    return pl.pallas_call(
        kernel,
        out_shape=jax.ShapeDtypeStruct((N, c_grp, r * H, r * W), x_nchw.dtype),
        grid_spec=pltpu.PrefetchScalarGridSpec(
            num_scalar_prefetch=0,
            grid=(N, H // th),
            in_specs=[
                pl.BlockSpec(memory_space=pltpu.MemorySpace.SMEM),      # weight
                pl.BlockSpec(memory_space=pltpu.MemorySpace.SMEM),      # bias
                pl.BlockSpec((r, cw, r * cw), lambda n, t: (0, 0, 0)),  # E
                pl.BlockSpec((r, r * th, th), lambda n, t: (0, 0, 0)),  # F
                pl.BlockSpec((None, c_in, th, W), lambda n, t: (n, 0, t, 0)),
            ],
            out_specs=pl.BlockSpec((None, c_grp, r * th, r * W),
                                   lambda n, t: (n, 0, t, 0)),
        ),
        compiler_params=pltpu.CompilerParams(
            dimension_semantics=("parallel", "parallel")),
    )(weight_oc_ic.astype(f32), bias.astype(f32), e, f, x_nchw)


# ---------------------------------------------------------------------------
# Fallback path for larger C_in: lane-dense MXU conv kernel + XLA shuffle
# (unchanged from the previous, verified version).
# ---------------------------------------------------------------------------

def _proj_kernel(x_ref, w_ref, b_ref, o_ref):
    # x_ref: (C_in, TM)  w_ref: (C_out, C_in)  b_ref: (C_out, 1)  o_ref: (C_out, TM)
    acc = jnp.dot(w_ref[...], x_ref[...], preferred_element_type=jnp.float32)
    o_ref[...] = (acc + b_ref[...]).astype(o_ref.dtype)


def _choose_spatial_tile(hw, target=8192):
    if hw <= target:
        return hw, hw
    for cand in range(target, 1023, -128):
        if hw % cand == 0:
            return cand, hw
    tm = 1024
    return tm, pl.cdiv(hw, tm) * tm


def conv1x1_nchw_pallas(x_nchw3, weight_oc_ic, bias, *, target_tm=8192):
    N, C_in, HW = x_nchw3.shape
    C_out = weight_oc_ic.shape[0]
    tm, hw_pad = _choose_spatial_tile(HW, target_tm)
    x_in = x_nchw3
    if hw_pad != HW:
        x_in = jnp.pad(x_nchw3, ((0, 0), (0, 0), (0, hw_pad - HW)))
    bias2d = bias.reshape(C_out, 1)
    n_tiles = hw_pad // tm
    out = pl.pallas_call(
        _proj_kernel,
        out_shape=jax.ShapeDtypeStruct((N, C_out, hw_pad), x_nchw3.dtype),
        grid_spec=pltpu.PrefetchScalarGridSpec(
            num_scalar_prefetch=0,
            grid=(N, n_tiles),
            in_specs=[
                pl.BlockSpec((None, C_in, tm), lambda n, m: (n, 0, m)),
                pl.BlockSpec((C_out, C_in), lambda n, m: (0, 0)),
                pl.BlockSpec((C_out, 1), lambda n, m: (0, 0)),
            ],
            out_specs=pl.BlockSpec((None, C_out, tm), lambda n, m: (n, 0, m)),
        ),
        compiler_params=pltpu.CompilerParams(
            dimension_semantics=("parallel", "parallel")),
    )(x_in, weight_oc_ic, bias2d)
    if hw_pad != HW:
        out = out[:, :, :HW]
    return out


def pixel_shuffle_nchw(feat, factor):
    N, Crr, H, W = feat.shape
    r = factor
    C = Crr // (r * r)
    f = feat.reshape(N, C, r, r, H, W)
    f = jnp.transpose(f, (0, 1, 4, 2, 5, 3))
    return f.reshape(N, C, H * r, W * r)


# ---------------------------------------------------------------------------
# Public forward + init + reference
# ---------------------------------------------------------------------------

def upsample_forward(x_nchw, weight_oc_ic, bias, factor=2):
    """Equivalent of UpSample.forward: (N, C, H, W) -> (N, C, H*r, W*r)."""
    N, C, H, W = x_nchw.shape
    if C <= 8:
        # Fused conv + pixel-shuffle kernel: single HBM pass over the output.
        return upsample_fused_pallas(x_nchw, weight_oc_ic, bias, factor)
    # TODO(synk): extend the fused interleave path to large C_in by doing the
    # conv per-row on the MXU instead of VPU scalar broadcasts.
    x3 = x_nchw.reshape(N, C, H * W)
    feat3 = conv1x1_nchw_pallas(x3, weight_oc_ic, bias)
    feat = feat3.reshape(N, weight_oc_ic.shape[0], H, W)
    return pixel_shuffle_nchw(feat, factor)


def init_upsample_params(key, n_chan, factor=2, dtype=jnp.float32):
    """Deterministic init matching nn.Conv2d + xavier_normal_(weight, gain=1)."""
    out_chan = n_chan * factor * factor
    k_w, k_b = jax.random.split(key)
    fan_in = n_chan      # 1x1 kernel
    fan_out = out_chan
    std = math.sqrt(2.0 / (fan_in + fan_out))
    weight = std * jax.random.normal(k_w, (out_chan, n_chan), dtype=dtype)
    bound = 1.0 / math.sqrt(fan_in)   # Conv2d default bias init
    bias = jax.random.uniform(k_b, (out_chan,), dtype=dtype,
                              minval=-bound, maxval=bound)
    return weight, bias


def upsample_reference(x_nchw, weight_oc_ic, bias, factor=2):
    """Pure-JAX reference (1x1 conv as einsum + pixel shuffle)."""
    feat = jnp.einsum("nchw,oc->nohw", x_nchw, weight_oc_ic) + bias[None, :, None, None]
    return pixel_shuffle_nchw(feat, factor)


if __name__ == "__main__":
    key = jax.random.PRNGKey(0)
    k_x, k_p = jax.random.split(key)

    N, C, H, W = 2, 4, 16, 16
    factor = 2

    x = jax.random.normal(k_x, (N, C, H, W), dtype=jnp.float32)
    weight, bias = init_upsample_params(k_p, C, factor)

    out = jax.block_until_ready(upsample_forward(x, weight, bias, factor))

    ref = upsample_reference(x, weight, bias, factor)
    assert out.shape == (N, C, H * factor, W * factor), out.shape
    assert jnp.allclose(out, ref, atol=1e-5, rtol=1e-5), "mismatch vs reference"

    print("KERNEL_OK")
</pallas_src>

<mosaic_0001>
module attributes {stable_mosaic.version = 11 : i64} {
  func.func @kernel(%arg0: i32, %arg1: i32, %arg2: memref<16x4xf32, #tpu.memory_space<smem>>, %arg3: memref<16xf32, #tpu.memory_space<smem>>, %arg4: memref<2x16x32xf32, #tpu.memory_space<vmem>>, %arg5: memref<2x32x16xf32, #tpu.memory_space<vmem>>, %arg6: memref<1x4x16x16xf32, #tpu.memory_space<vmem>>, %arg7: memref<1x4x32x32xf32, #tpu.memory_space<vmem>>) attributes {dimension_semantics = [#tpu.dimension_semantics<parallel>, #tpu.dimension_semantics<parallel>], iteration_bounds = array<i64: 2, 1>, scalar_prefetch = 0 : i64, scratch_operands = 0 : i64, tpu.core_type = #tpu.core_type<tc>, window_params = [{transform_indices = @transform_0, window_bounds = array<i64: 16, 4>}, {transform_indices = @transform_1, window_bounds = array<i64: 16>}, {pipeline_mode = #tpu.pipeline_mode<synchronous>, transform_indices = @transform_2, window_bounds = array<i64: 2, 16, 32>}, {pipeline_mode = #tpu.pipeline_mode<synchronous>, transform_indices = @transform_3, window_bounds = array<i64: 2, 32, 16>}, {transform_indices = @transform_4, window_bounds = array<i64: 1, 4, 16, 16>}, {transform_indices = @transform_5, window_bounds = array<i64: 1, 4, 32, 32>}]} {
    %c0 = arith.constant 0 : index
    %c0_0 = arith.constant 0 : index
    %c0_1 = arith.constant 0 : index
    %c0_2 = arith.constant 0 : index
    %0 = vector.load %arg6[%c0, %c0_0, %c0_1, %c0_2] : memref<1x4x16x16xf32, #tpu.memory_space<vmem>>, vector<1x1x16x16xf32>
    %1 = vector.shape_cast %0 : vector<1x1x16x16xf32> to vector<16x16xf32>
    %c0_3 = arith.constant 0 : index
    %c1 = arith.constant 1 : index
    %c0_4 = arith.constant 0 : index
    %c0_5 = arith.constant 0 : index
    %2 = vector.load %arg6[%c0_3, %c1, %c0_4, %c0_5] : memref<1x4x16x16xf32, #tpu.memory_space<vmem>>, vector<1x1x16x16xf32>
    %3 = vector.shape_cast %2 : vector<1x1x16x16xf32> to vector<16x16xf32>
    %c0_6 = arith.constant 0 : index
    %c2 = arith.constant 2 : index
    %c0_7 = arith.constant 0 : index
    %c0_8 = arith.constant 0 : index
    %4 = vector.load %arg6[%c0_6, %c2, %c0_7, %c0_8] : memref<1x4x16x16xf32, #tpu.memory_space<vmem>>, vector<1x1x16x16xf32>
    %5 = vector.shape_cast %4 : vector<1x1x16x16xf32> to vector<16x16xf32>
    %c0_9 = arith.constant 0 : index
    %c3 = arith.constant 3 : index
    %c0_10 = arith.constant 0 : index
    %c0_11 = arith.constant 0 : index
    %6 = vector.load %arg6[%c0_9, %c3, %c0_10, %c0_11] : memref<1x4x16x16xf32, #tpu.memory_space<vmem>>, vector<1x1x16x16xf32>
    %7 = vector.shape_cast %6 : vector<1x1x16x16xf32> to vector<16x16xf32>
    %c0_12 = arith.constant 0 : index
    %c0_13 = arith.constant 0 : index
    %c0_14 = arith.constant 0 : index
    %8 = vector.load %arg4[%c0_12, %c0_13, %c0_14] : memref<2x16x32xf32, #tpu.memory_space<vmem>>, vector<1x16x32xf32>
    %9 = vector.shape_cast %8 : vector<1x16x32xf32> to vector<16x32xf32>
    %c1_15 = arith.constant 1 : index
    %c0_16 = arith.constant 0 : index
    %c0_17 = arith.constant 0 : index
    %10 = vector.load %arg4[%c1_15, %c0_16, %c0_17] : memref<2x16x32xf32, #tpu.memory_space<vmem>>, vector<1x16x32xf32>
    %11 = vector.shape_cast %10 : vector<1x16x32xf32> to vector<16x32xf32>
    %c0_18 = arith.constant 0 : index
    %c0_19 = arith.constant 0 : index
    %c0_20 = arith.constant 0 : index
    %12 = vector.load %arg5[%c0_18, %c0_19, %c0_20] : memref<2x32x16xf32, #tpu.memory_space<vmem>>, vector<1x32x16xf32>
    %13 = vector.shape_cast %12 : vector<1x32x16xf32> to vector<32x16xf32>
    %c1_21 = arith.constant 1 : index
    %c0_22 = arith.constant 0 : index
    %c0_23 = arith.constant 0 : index
    %14 = vector.load %arg5[%c1_21, %c0_22, %c0_23] : memref<2x32x16xf32, #tpu.memory_space<vmem>>, vector<1x32x16xf32>
    %15 = vector.shape_cast %14 : vector<1x32x16xf32> to vector<32x16xf32>
    %c0_24 = arith.constant 0 : index
    %c0_25 = arith.constant 0 : index
    %16 = memref.load %arg2[%c0_24, %c0_25] : memref<16x4xf32, #tpu.memory_space<smem>>
    %17 = vector.broadcast %16 : f32 to vector<16x16xf32>
    %18 = arith.mulf %17, %1 : vector<16x16xf32>
    %c0_26 = arith.constant 0 : index
    %c1_27 = arith.constant 1 : index
    %19 = memref.load %arg2[%c0_26, %c1_27] : memref<16x4xf32, #tpu.memory_space<smem>>
    %20 = vector.broadcast %19 : f32 to vector<16x16xf32>
    %21 = arith.mulf %20, %3 : vector<16x16xf32>
    %22 = arith.addf %18, %21 : vector<16x16xf32>
    %c0_28 = arith.constant 0 : index
    %c2_29 = arith.constant 2 : index
    %23 = memref.load %arg2[%c0_28, %c2_29] : memref<16x4xf32, #tpu.memory_space<smem>>
    %24 = vector.broadcast %23 : f32 to vector<16x16xf32>
    %25 = arith.mulf %24, %5 : vector<16x16xf32>
    %26 = arith.addf %22, %25 : vector<16x16xf32>
    %c0_30 = arith.constant 0 : index
    %c3_31 = arith.constant 3 : index
    %27 = memref.load %arg2[%c0_30, %c3_31] : memref<16x4xf32, #tpu.memory_space<smem>>
    %28 = vector.broadcast %27 : f32 to vector<16x16xf32>
    %29 = arith.mulf %28, %7 : vector<16x16xf32>
    %30 = arith.addf %26, %29 : vector<16x16xf32>
    %c0_32 = arith.constant 0 : index
    %31 = memref.load %arg3[%c0_32] : memref<16xf32, #tpu.memory_space<smem>>
    %32 = vector.broadcast %31 : f32 to vector<16x16xf32>
    %33 = arith.addf %30, %32 : vector<16x16xf32>
    %c1_33 = arith.constant 1 : index
    %c0_34 = arith.constant 0 : index
    %34 = memref.load %arg2[%c1_33, %c0_34] : memref<16x4xf32, #tpu.memory_space<smem>>
    %35 = vector.broadcast %34 : f32 to vector<16x16xf32>
    %36 = arith.mulf %35, %1 : vector<16x16xf32>
    %c1_35 = arith.constant 1 : index
    %c1_36 = arith.constant 1 : index
    %37 = memref.load %arg2[%c1_35, %c1_36] : memref<16x4xf32, #tpu.memory_space<smem>>
    %38 = vector.broadcast %37 : f32 to vector<16x16xf32>
    %39 = arith.mulf %38, %3 : vector<16x16xf32>
    %40 = arith.addf %36, %39 : vector<16x16xf32>
    %c1_37 = arith.constant 1 : index
    %c2_38 = arith.constant 2 : index
    %41 = memref.load %arg2[%c1_37, %c2_38] : memref<16x4xf32, #tpu.memory_space<smem>>
    %42 = vector.broadcast %41 : f32 to vector<16x16xf32>
    %43 = arith.mulf %42, %5 : vector<16x16xf32>
    %44 = arith.addf %40, %43 : vector<16x16xf32>
    %c1_39 = arith.constant 1 : index
    %c3_40 = arith.constant 3 : index
    %45 = memref.load %arg2[%c1_39, %c3_40] : memref<16x4xf32, #tpu.memory_space<smem>>
    %46 = vector.broadcast %45 : f32 to vector<16x16xf32>
    %47 = arith.mulf %46, %7 : vector<16x16xf32>
    %48 = arith.addf %44, %47 : vector<16x16xf32>
    %c1_41 = arith.constant 1 : index
    %49 = memref.load %arg3[%c1_41] : memref<16xf32, #tpu.memory_space<smem>>
    %50 = vector.broadcast %49 : f32 to vector<16x16xf32>
    %51 = arith.addf %48, %50 : vector<16x16xf32>
    %c2_42 = arith.constant 2 : index
    %c0_43 = arith.constant 0 : index
    %52 = memref.load %arg2[%c2_42, %c0_43] : memref<16x4xf32, #tpu.memory_space<smem>>
    %53 = vector.broadcast %52 : f32 to vector<16x16xf32>
    %54 = arith.mulf %53, %1 : vector<16x16xf32>
    %c2_44 = arith.constant 2 : index
    %c1_45 = arith.constant 1 : index
    %55 = memref.load %arg2[%c2_44, %c1_45] : memref<16x4xf32, #tpu.memory_space<smem>>
    %56 = vector.broadcast %55 : f32 to vector<16x16xf32>
    %57 = arith.mulf %56, %3 : vector<16x16xf32>
    %58 = arith.addf %54, %57 : vector<16x16xf32>
    %c2_46 = arith.constant 2 : index
    %c2_47 = arith.constant 2 : index
    %59 = memref.load %arg2[%c2_46, %c2_47] : memref<16x4xf32, #tpu.memory_space<smem>>
    %60 = vector.broadcast %59 : f32 to vector<16x16xf32>
    %61 = arith.mulf %60, %5 : vector<16x16xf32>
    %62 = arith.addf %58, %61 : vector<16x16xf32>
    %c2_48 = arith.constant 2 : index
    %c3_49 = arith.constant 3 : index
    %63 = memref.load %arg2[%c2_48, %c3_49] : memref<16x4xf32, #tpu.memory_space<smem>>
    %64 = vector.broadcast %63 : f32 to vector<16x16xf32>
    %65 = arith.mulf %64, %7 : vector<16x16xf32>
    %66 = arith.addf %62, %65 : vector<16x16xf32>
    %c2_50 = arith.constant 2 : index
    %67 = memref.load %arg3[%c2_50] : memref<16xf32, #tpu.memory_space<smem>>
    %68 = vector.broadcast %67 : f32 to vector<16x16xf32>
    %69 = arith.addf %66, %68 : vector<16x16xf32>
    %c3_51 = arith.constant 3 : index
    %c0_52 = arith.constant 0 : index
    %70 = memref.load %arg2[%c3_51, %c0_52] : memref<16x4xf32, #tpu.memory_space<smem>>
    %71 = vector.broadcast %70 : f32 to vector<16x16xf32>
    %72 = arith.mulf %71, %1 : vector<16x16xf32>
    %c3_53 = arith.constant 3 : index
    %c1_54 = arith.constant 1 : index
    %73 = memref.load %arg2[%c3_53, %c1_54] : memref<16x4xf32, #tpu.memory_space<smem>>
    %74 = vector.broadcast %73 : f32 to vector<16x16xf32>
    %75 = arith.mulf %74, %3 : vector<16x16xf32>
    %76 = arith.addf %72, %75 : vector<16x16xf32>
    %c3_55 = arith.constant 3 : index
    %c2_56 = arith.constant 2 : index
    %77 = memref.load %arg2[%c3_55, %c2_56] : memref<16x4xf32, #tpu.memory_space<smem>>
    %78 = vector.broadcast %77 : f32 to vector<16x16xf32>
    %79 = arith.mulf %78, %5 : vector<16x16xf32>
    %80 = arith.addf %76, %79 : vector<16x16xf32>
    %c3_57 = arith.constant 3 : index
    %c3_58 = arith.constant 3 : index
    %81 = memref.load %arg2[%c3_57, %c3_58] : memref<16x4xf32, #tpu.memory_space<smem>>
    %82 = vector.broadcast %81 : f32 to vector<16x16xf32>
    %83 = arith.mulf %82, %7 : vector<16x16xf32>
    %84 = arith.addf %80, %83 : vector<16x16xf32>
    %c3_59 = arith.constant 3 : index
    %85 = memref.load %arg3[%c3_59] : memref<16xf32, #tpu.memory_space<smem>>
    %86 = vector.broadcast %85 : f32 to vector<16x16xf32>
    %87 = arith.addf %84, %86 : vector<16x16xf32>
    %cst = arith.constant dense<0.000000e+00> : vector<16x32xf32>
    %88 = tpu.matmul %33, %9, %cst {dimension_numbers = #tpu.dot_dimension_numbers<[1], [0], [0], [1], [0, 0, 1, 1], [], []>} : vector<16x16xf32>, vector<16x32xf32>, vector<16x32xf32> -> vector<16x32xf32>
    %cst_60 = arith.constant dense<0.000000e+00> : vector<16x32xf32>
    %89 = tpu.matmul %51, %11, %cst_60 {dimension_numbers = #tpu.dot_dimension_numbers<[1], [0], [0], [1], [0, 0, 1, 1], [], []>} : vector<16x16xf32>, vector<16x32xf32>, vector<16x32xf32> -> vector<16x32xf32>
    %90 = arith.addf %88, %89 : vector<16x32xf32>
    %cst_61 = arith.constant dense<0.000000e+00> : vector<32x32xf32>
    %91 = tpu.matmul %13, %90, %cst_61 {dimension_numbers = #tpu.dot_dimension_numbers<[1], [0], [0], [1], [0, 0, 1, 1], [], []>} : vector<32x16xf32>, vector<16x32xf32>, vector<32x32xf32> -> vector<32x32xf32>
    %cst_62 = arith.constant dense<0.000000e+00> : vector<16x32xf32>
    %92 = tpu.matmul %69, %9, %cst_62 {dimension_numbers = #tpu.dot_dimension_numbers<[1], [0], [0], [1], [0, 0, 1, 1], [], []>} : vector<16x16xf32>, vector<16x32xf32>, vector<16x32xf32> -> vector<16x32xf32>
    %cst_63 = arith.constant dense<0.000000e+00> : vector<16x32xf32>
    %93 = tpu.matmul %87, %11, %cst_63 {dimension_numbers = #tpu.dot_dimension_numbers<[1], [0], [0], [1], [0, 0, 1, 1], [], []>} : vector<16x16xf32>, vector<16x32xf32>, vector<16x32xf32> -> vector<16x32xf32>
    %94 = arith.addf %92, %93 : vector<16x32xf32>
    %cst_64 = arith.constant dense<0.000000e+00> : vector<32x32xf32>
    %95 = tpu.matmul %15, %94, %cst_64 {dimension_numbers = #tpu.dot_dimension_numbers<[1], [0], [0], [1], [0, 0, 1, 1], [], []>} : vector<32x16xf32>, vector<16x32xf32>, vector<32x32xf32> -> vector<32x32xf32>
    %96 = arith.addf %91, %95 : vector<32x32xf32>
    %c0_65 = arith.constant 0 : index
    %c0_66 = arith.constant 0 : index
    %c0_67 = arith.constant 0 : index
    %c0_68 = arith.constant 0 : index
    %97 = vector.load %arg7[%c0_65, %c0_66, %c0_67, %c0_68] : memref<1x4x32x32xf32, #tpu.memory_space<vmem>>, vector<1x1x32x32xf32>
    %98 = vector.shape_cast %97 : vector<1x1x32x32xf32> to vector<32x32xf32>
    %99 = vector.shape_cast %96 : vector<32x32xf32> to vector<1x1x32x32xf32>
    tpu.vector_store %arg7[%c0_65, %c0_66, %c0_67, %c0_68], %99 {strides = array<i32>} : memref<1x4x32x32xf32, #tpu.memory_space<vmem>>, vector<1x1x32x32xf32>,
    %c4 = arith.constant 4 : index
    %c0_69 = arith.constant 0 : index
    %100 = memref.load %arg2[%c4, %c0_69] : memref<16x4xf32, #tpu.memory_space<smem>>
    %101 = vector.broadcast %100 : f32 to vector<16x16xf32>
    %102 = arith.mulf %101, %1 : vector<16x16xf32>
    %c4_70 = arith.constant 4 : index
    %c1_71 = arith.constant 1 : index
    %103 = memref.load %arg2[%c4_70, %c1_71] : memref<16x4xf32, #tpu.memory_space<smem>>
    %104 = vector.broadcast %103 : f32 to vector<16x16xf32>
    %105 = arith.mulf %104, %3 : vector<16x16xf32>
    %106 = arith.addf %102, %105 : vector<16x16xf32>
    %c4_72 = arith.constant 4 : index
    %c2_73 = arith.constant 2 : index
    %107 = memref.load %arg2[%c4_72, %c2_73] : memref<16x4xf32, #tpu.memory_space<smem>>
    %108 = vector.broadcast %107 : f32 to vector<16x16xf32>
    %109 = arith.mulf %108, %5 : vector<16x16xf32>
    %110 = arith.addf %106, %109 : vector<16x16xf32>
    %c4_74 = arith.constant 4 : index
    %c3_75 = arith.constant 3 : index
    %111 = memref.load %arg2[%c4_74, %c3_75] : memref<16x4xf32, #tpu.memory_space<smem>>
    %112 = vector.broadcast %111 : f32 to vector<16x16xf32>
    %113 = arith.mulf %112, %7 : vector<16x16xf32>
    %114 = arith.addf %110, %113 : vector<16x16xf32>
    %c4_76 = arith.constant 4 : index
    %115 = memref.load %arg3[%c4_76] : memref<16xf32, #tpu.memory_space<smem>>
    %116 = vector.broadcast %115 : f32 to vector<16x16xf32>
    %117 = arith.addf %114, %116 : vector<16x16xf32>
    %c5 = arith.constant 5 : index
    %c0_77 = arith.constant 0 : index
    %118 = memref.load %arg2[%c5, %c0_77] : memref<16x4xf32, #tpu.memory_space<smem>>
    %119 = vector.broadcast %118 : f32 to vector<16x16xf32>
    %120 = arith.mulf %119, %1 : vector<16x16xf32>
    %c5_78 = arith.constant 5 : index
    %c1_79 = arith.constant 1 : index
    %121 = memref.load %arg2[%c5_78, %c1_79] : memref<16x4xf32, #tpu.memory_space<smem>>
    %122 = vector.broadcast %121 : f32 to vector<16x16xf32>
    %123 = arith.mulf %122, %3 : vector<16x16xf32>
    %124 = arith.addf %120, %123 : vector<16x16xf32>
    %c5_80 = arith.constant 5 : index
    %c2_81 = arith.constant 2 : index
    %125 = memref.load %arg2[%c5_80, %c2_81] : memref<16x4xf32, #tpu.memory_space<smem>>
    %126 = vector.broadcast %125 : f32 to vector<16x16xf32>
    %127 = arith.mulf %126, %5 : vector<16x16xf32>
    %128 = arith.addf %124, %127 : vector<16x16xf32>
    %c5_82 = arith.constant 5 : index
    %c3_83 = arith.constant 3 : index
    %129 = memref.load %arg2[%c5_82, %c3_83] : memref<16x4xf32, #tpu.memory_space<smem>>
    %130 = vector.broadcast %129 : f32 to vector<16x16xf32>
    %131 = arith.mulf %130, %7 : vector<16x16xf32>
    %132 = arith.addf %128, %131 : vector<16x16xf32>
    %c5_84 = arith.constant 5 : index
    %133 = memref.load %arg3[%c5_84] : memref<16xf32, #tpu.memory_space<smem>>
    %134 = vector.broadcast %133 : f32 to vector<16x16xf32>
    %135 = arith.addf %132, %134 : vector<16x16xf32>
    %c6 = arith.constant 6 : index
    %c0_85 = arith.constant 0 : index
    %136 = memref.load %arg2[%c6, %c0_85] : memref<16x4xf32, #tpu.memory_space<smem>>
    %137 = vector.broadcast %136 : f32 to vector<16x16xf32>
    %138 = arith.mulf %137, %1 : vector<16x16xf32>
    %c6_86 = arith.constant 6 : index
    %c1_87 = arith.constant 1 : index
    %139 = memref.load %arg2[%c6_86, %c1_87] : memref<16x4xf32, #tpu.memory_space<smem>>
    %140 = vector.broadcast %139 : f32 to vector<16x16xf32>
    %141 = arith.mulf %140, %3 : vector<16x16xf32>
    %142 = arith.addf %138, %141 : vector<16x16xf32>
    %c6_88 = arith.constant 6 : index
    %c2_89 = arith.constant 2 : index
    %143 = memref.load %arg2[%c6_88, %c2_89] : memref<16x4xf32, #tpu.memory_space<smem>>
    %144 = vector.broadcast %143 : f32 to vector<16x16xf32>
    %145 = arith.mulf %144, %5 : vector<16x16xf32>
    %146 = arith.addf %142, %145 : vector<16x16xf32>
    %c6_90 = arith.constant 6 : index
    %c3_91 = arith.constant 3 : index
    %147 = memref.load %arg2[%c6_90, %c3_91] : memref<16x4xf32, #tpu.memory_space<smem>>
    %148 = vector.broadcast %147 : f32 to vector<16x16xf32>
    %149 = arith.mulf %148, %7 : vector<16x16xf32>
    %150 = arith.addf %146, %149 : vector<16x16xf32>
    %c6_92 = arith.constant 6 : index
    %151 = memref.load %arg3[%c6_92] : memref<16xf32, #tpu.memory_space<smem>>
    %152 = vector.broadcast %151 : f32 to vector<16x16xf32>
    %153 = arith.addf %150, %152 : vector<16x16xf32>
    %c7 = arith.constant 7 : index
    %c0_93 = arith.constant 0 : index
    %154 = memref.load %arg2[%c7, %c0_93] : memref<16x4xf32, #tpu.memory_space<smem>>
    %155 = vector.broadcast %154 : f32 to vector<16x16xf32>
    %156 = arith.mulf %155, %1 : vector<16x16xf32>
    %c7_94 = arith.constant 7 : index
    %c1_95 = arith.constant 1 : index
    %157 = memref.load %arg2[%c7_94, %c1_95] : memref<16x4xf32, #tpu.memory_space<smem>>
    %158 = vector.broadcast %157 : f32 to vector<16x16xf32>
    %159 = arith.mulf %158, %3 : vector<16x16xf32>
    %160 = arith.addf %156, %159 : vector<16x16xf32>
    %c7_96 = arith.constant 7 : index
    %c2_97 = arith.constant 2 : index
    %161 = memref.load %arg2[%c7_96, %c2_97] : memref<16x4xf32, #tpu.memory_space<smem>>
    %162 = vector.broadcast %161 : f32 to vector<16x16xf32>
    %163 = arith.mulf %162, %5 : vector<16x16xf32>
    %164 = arith.addf %160, %163 : vector<16x16xf32>
    %c7_98 = arith.constant 7 : index
    %c3_99 = arith.constant 3 : index
    %165 = memref.load %arg2[%c7_98, %c3_99] : memref<16x4xf32, #tpu.memory_space<smem>>
    %166 = vector.broadcast %165 : f32 to vector<16x16xf32>
    %167 = arith.mulf %166, %7 : vector<16x16xf32>
    %168 = arith.addf %164, %167 : vector<16x16xf32>
    %c7_100 = arith.constant 7 : index
    %169 = memref.load %arg3[%c7_100] : memref<16xf32, #tpu.memory_space<smem>>
    %170 = vector.broadcast %169 : f32 to vector<16x16xf32>
    %171 = arith.addf %168, %170 : vector<16x16xf32>
    %cst_101 = arith.constant dense<0.000000e+00> : vector<16x32xf32>
    %172 = tpu.matmul %117, %9, %cst_101 {dimension_numbers = #tpu.dot_dimension_numbers<[1], [0], [0], [1], [0, 0, 1, 1], [], []>} : vector<16x16xf32>, vector<16x32xf32>, vector<16x32xf32> -> vector<16x32xf32>
    %cst_102 = arith.constant dense<0.000000e+00> : vector<16x32xf32>
    %173 = tpu.matmul %135, %11, %cst_102 {dimension_numbers = #tpu.dot_dimension_numbers<[1], [0], [0], [1], [0, 0, 1, 1], [], []>} : vector<16x16xf32>, vector<16x32xf32>, vector<16x32xf32> -> vector<16x32xf32>
    %174 = arith.addf %172, %173 : vector<16x32xf32>
    %cst_103 = arith.constant dense<0.000000e+00> : vector<32x32xf32>
    %175 = tpu.matmul %13, %174, %cst_103 {dimension_numbers = #tpu.dot_dimension_numbers<[1], [0], [0], [1], [0, 0, 1, 1], [], []>} : vector<32x16xf32>, vector<16x32xf32>, vector<32x32xf32> -> vector<32x32xf32>
    %cst_104 = arith.constant dense<0.000000e+00> : vector<16x32xf32>
    %176 = tpu.matmul %153, %9, %cst_104 {dimension_numbers = #tpu.dot_dimension_numbers<[1], [0], [0], [1], [0, 0, 1, 1], [], []>} : vector<16x16xf32>, vector<16x32xf32>, vector<16x32xf32> -> vector<16x32xf32>
    %cst_105 = arith.constant dense<0.000000e+00> : vector<16x32xf32>
    %177 = tpu.matmul %171, %11, %cst_105 {dimension_numbers = #tpu.dot_dimension_numbers<[1], [0], [0], [1], [0, 0, 1, 1], [], []>} : vector<16x16xf32>, vector<16x32xf32>, vector<16x32xf32> -> vector<16x32xf32>
    %178 = arith.addf %176, %177 : vector<16x32xf32>
    %cst_106 = arith.constant dense<0.000000e+00> : vector<32x32xf32>
    %179 = tpu.matmul %15, %178, %cst_106 {dimension_numbers = #tpu.dot_dimension_numbers<[1], [0], [0], [1], [0, 0, 1, 1], [], []>} : vector<32x16xf32>, vector<16x32xf32>, vector<32x32xf32> -> vector<32x32xf32>
    %180 = arith.addf %175, %179 : vector<32x32xf32>
    %c0_107 = arith.constant 0 : index
    %c1_108 = arith.constant 1 : index
    %c0_109 = arith.constant 0 : index
    %c0_110 = arith.constant 0 : index
    %181 = vector.load %arg7[%c0_107, %c1_108, %c0_109, %c0_110] : memref<1x4x32x32xf32, #tpu.memory_space<vmem>>, vector<1x1x32x32xf32>
    %182 = vector.shape_cast %181 : vector<1x1x32x32xf32> to vector<32x32xf32>
    %183 = vector.shape_cast %180 : vector<32x32xf32> to vector<1x1x32x32xf32>
    tpu.vector_store %arg7[%c0_107, %c1_108, %c0_109, %c0_110], %183 {strides = array<i32>} : memref<1x4x32x32xf32, #tpu.memory_space<vmem>>, vector<1x1x32x32xf32>,
    %c8 = arith.constant 8 : index
    %c0_111 = arith.constant 0 : index
    %184 = memref.load %arg2[%c8, %c0_111] : memref<16x4xf32, #tpu.memory_space<smem>>
    %185 = vector.broadcast %184 : f32 to vector<16x16xf32>
    %186 = arith.mulf %185, %1 : vector<16x16xf32>
    %c8_112 = arith.constant 8 : index
    %c1_113 = arith.constant 1 : index
    %187 = memref.load %arg2[%c8_112, %c1_113] : memref<16x4xf32, #tpu.memory_space<smem>>
    %188 = vector.broadcast %187 : f32 to vector<16x16xf32>
    %189 = arith.mulf %188, %3 : vector<16x16xf32>
    %190 = arith.addf %186, %189 : vector<16x16xf32>
    %c8_114 = arith.constant 8 : index
    %c2_115 = arith.constant 2 : index
    %191 = memref.load %arg2[%c8_114, %c2_115] : memref<16x4xf32, #tpu.memory_space<smem>>
    %192 = vector.broadcast %191 : f32 to vector<16x16xf32>
    %193 = arith.mulf %192, %5 : vector<16x16xf32>
    %194 = arith.addf %190, %193 : vector<16x16xf32>
    %c8_116 = arith.constant 8 : index
    %c3_117 = arith.constant 3 : index
    %195 = memref.load %arg2[%c8_116, %c3_117] : memref<16x4xf32, #tpu.memory_space<smem>>
    %196 = vector.broadcast %195 : f32 to vector<16x16xf32>
    %197 = arith.mulf %196, %7 : vector<16x16xf32>
    %198 = arith.addf %194, %197 : vector<16x16xf32>
    %c8_118 = arith.constant 8 : index
    %199 = memref.load %arg3[%c8_118] : memref<16xf32, #tpu.memory_space<smem>>
    %200 = vector.broadcast %199 : f32 to vector<16x16xf32>
    %201 = arith.addf %198, %200 : vector<16x16xf32>
    %c9 = arith.constant 9 : index
    %c0_119 = arith.constant 0 : index
    %202 = memref.load %arg2[%c9, %c0_119] : memref<16x4xf32, #tpu.memory_space<smem>>
    %203 = vector.broadcast %202 : f32 to vector<16x16xf32>
    %204 = arith.mulf %203, %1 : vector<16x16xf32>
    %c9_120 = arith.constant 9 : index
    %c1_121 = arith.constant 1 : index
    %205 = memref.load %arg2[%c9_120, %c1_121] : memref<16x4xf32, #tpu.memory_space<smem>>
    %206 = vector.broadcast %205 : f32 to vector<16x16xf32>
    %207 = arith.mulf %206, %3 : vector<16x16xf32>
    %208 = arith.addf %204, %207 : vector<16x16xf32>
    %c9_122 = arith.constant 9 : index
    %c2_123 = arith.constant 2 : index
    %209 = memref.load %arg2[%c9_122, %c2_123] : memref<16x4xf32, #tpu.memory_space<smem>>
    %210 = vector.broadcast %209 : f32 to vector<16x16xf32>
    %211 = arith.mulf %210, %5 : vector<16x16xf32>
    %212 = arith.addf %208, %211 : vector<16x16xf32>
    %c9_124 = arith.constant 9 : index
    %c3_125 = arith.constant 3 : index
    %213 = memref.load %arg2[%c9_124, %c3_125] : memref<16x4xf32, #tpu.memory_space<smem>>
    %214 = vector.broadcast %213 : f32 to vector<16x16xf32>
    %215 = arith.mulf %214, %7 : vector<16x16xf32>
    %216 = arith.addf %212, %215 : vector<16x16xf32>
    %c9_126 = arith.constant 9 : index
    %217 = memref.load %arg3[%c9_126] : memref<16xf32, #tpu.memory_space<smem>>
    %218 = vector.broadcast %217 : f32 to vector<16x16xf32>
    %219 = arith.addf %216, %218 : vector<16x16xf32>
    %c10 = arith.constant 10 : index
    %c0_127 = arith.constant 0 : index
    %220 = memref.load %arg2[%c10, %c0_127] : memref<16x4xf32, #tpu.memory_space<smem>>
    %221 = vector.broadcast %220 : f32 to vector<16x16xf32>
    %222 = arith.mulf %221, %1 : vector<16x16xf32>
    %c10_128 = arith.constant 10 : index
    %c1_129 = arith.constant 1 : index
    %223 = memref.load %arg2[%c10_128, %c1_129] : memref<16x4xf32, #tpu.memory_space<smem>>
    %224 = vector.broadcast %223 : f32 to vector<16x16xf32>
    %225 = arith.mulf %224, %3 : vector<16x16xf32>
    %226 = arith.addf %222, %225 : vector<16x16xf32>
    %c10_130 = arith.constant 10 : index
    %c2_131 = arith.constant 2 : index
    %227 = memref.load %arg2[%c10_130, %c2_131] : memref<16x4xf32, #tpu.memory_space<smem>>
    %228 = vector.broadcast %227 : f32 to vector<16x16xf32>
    %229 = arith.mulf %228, %5 : vector<16x16xf32>
    %230 = arith.addf %226, %229 : vector<16x16xf32>
    %c10_132 = arith.constant 10 : index
    %c3_133 = arith.constant 3 : index
    %231 = memref.load %arg2[%c10_132, %c3_133] : memref<16x4xf32, #tpu.memory_space<smem>>
    %232 = vector.broadcast %231 : f32 to vector<16x16xf32>
    %233 = arith.mulf %232, %7 : vector<16x16xf32>
    %234 = arith.addf %230, %233 : vector<16x16xf32>
    %c10_134 = arith.constant 10 : index
    %235 = memref.load %arg3[%c10_134] : memref<16xf32, #tpu.memory_space<smem>>
    %236 = vector.broadcast %235 : f32 to vector<16x16xf32>
    %237 = arith.addf %234, %236 : vector<16x16xf32>
    %c11 = arith.constant 11 : index
    %c0_135 = arith.constant 0 : index
    %238 = memref.load %arg2[%c11, %c0_135] : memref<16x4xf32, #tpu.memory_space<smem>>
    %239 = vector.broadcast %238 : f32 to vector<16x16xf32>
    %240 = arith.mulf %239, %1 : vector<16x16xf32>
    %c11_136 = arith.constant 11 : index
    %c1_137 = arith.constant 1 : index
    %241 = memref.load %arg2[%c11_136, %c1_137] : memref<16x4xf32, #tpu.memory_space<smem>>
    %242 = vector.broadcast %241 : f32 to vector<16x16xf32>
    %243 = arith.mulf %242, %3 : vector<16x16xf32>
    %244 = arith.addf %240, %243 : vector<16x16xf32>
    %c11_138 = arith.constant 11 : index
    %c2_139 = arith.constant 2 : index
    %245 = memref.load %arg2[%c11_138, %c2_139] : memref<16x4xf32, #tpu.memory_space<smem>>
    %246 = vector.broadcast %245 : f32 to vector<16x16xf32>
    %247 = arith.mulf %246, %5 : vector<16x16xf32>
    %248 = arith.addf %244, %247 : vector<16x16xf32>
    %c11_140 = arith.constant 11 : index
    %c3_141 = arith.constant 3 : index
    %249 = memref.load %arg2[%c11_140, %c3_141] : memref<16x4xf32, #tpu.memory_space<smem>>
    %250 = vector.broadcast %249 : f32 to vector<16x16xf32>
    %251 = arith.mulf %250, %7 : vector<16x16xf32>
    %252 = arith.addf %248, %251 : vector<16x16xf32>
    %c11_142 = arith.constant 11 : index
    %253 = memref.load %arg3[%c11_142] : memref<16xf32, #tpu.memory_space<smem>>
    %254 = vector.broadcast %253 : f32 to vector<16x16xf32>
    %255 = arith.addf %252, %254 : vector<16x16xf32>
    %cst_143 = arith.constant dense<0.000000e+00> : vector<16x32xf32>
    %256 = tpu.matmul %201, %9, %cst_143 {dimension_numbers = #tpu.dot_dimension_numbers<[1], [0], [0], [1], [0, 0, 1, 1], [], []>} : vector<16x16xf32>, vector<16x32xf32>, vector<16x32xf32> -> vector<16x32xf32>
    %cst_144 = arith.constant dense<0.000000e+00> : vector<16x32xf32>
    %257 = tpu.matmul %219, %11, %cst_144 {dimension_numbers = #tpu.dot_dimension_numbers<[1], [0], [0], [1], [0, 0, 1, 1], [], []>} : vector<16x16xf32>, vector<16x32xf32>, vector<16x32xf32> -> vector<16x32xf32>
    %258 = arith.addf %256, %257 : vector<16x32xf32>
    %cst_145 = arith.constant dense<0.000000e+00> : vector<32x32xf32>
    %259 = tpu.matmul %13, %258, %cst_145 {dimension_numbers = #tpu.dot_dimension_numbers<[1], [0], [0], [1], [0, 0, 1, 1], [], []>} : vector<32x16xf32>, vector<16x32xf32>, vector<32x32xf32> -> vector<32x32xf32>
    %cst_146 = arith.constant dense<0.000000e+00> : vector<16x32xf32>
    %260 = tpu.matmul %237, %9, %cst_146 {dimension_numbers = #tpu.dot_dimension_numbers<[1], [0], [0], [1], [0, 0, 1, 1], [], []>} : vector<16x16xf32>, vector<16x32xf32>, vector<16x32xf32> -> vector<16x32xf32>
    %cst_147 = arith.constant dense<0.000000e+00> : vector<16x32xf32>
    %261 = tpu.matmul %255, %11, %cst_147 {dimension_numbers = #tpu.dot_dimension_numbers<[1], [0], [0], [1], [0, 0, 1, 1], [], []>} : vector<16x16xf32>, vector<16x32xf32>, vector<16x32xf32> -> vector<16x32xf32>
    %262 = arith.addf %260, %261 : vector<16x32xf32>
    %cst_148 = arith.constant dense<0.000000e+00> : vector<32x32xf32>
    %263 = tpu.matmul %15, %262, %cst_148 {dimension_numbers = #tpu.dot_dimension_numbers<[1], [0], [0], [1], [0, 0, 1, 1], [], []>} : vector<32x16xf32>, vector<16x32xf32>, vector<32x32xf32> -> vector<32x32xf32>
    %264 = arith.addf %259, %263 : vector<32x32xf32>
    %c0_149 = arith.constant 0 : index
    %c2_150 = arith.constant 2 : index
    %c0_151 = arith.constant 0 : index
    %c0_152 = arith.constant 0 : index
    %265 = vector.load %arg7[%c0_149, %c2_150, %c0_151, %c0_152] : memref<1x4x32x32xf32, #tpu.memory_space<vmem>>, vector<1x1x32x32xf32>
    %266 = vector.shape_cast %265 : vector<1x1x32x32xf32> to vector<32x32xf32>
    %267 = vector.shape_cast %264 : vector<32x32xf32> to vector<1x1x32x32xf32>
    tpu.vector_store %arg7[%c0_149, %c2_150, %c0_151, %c0_152], %267 {strides = array<i32>} : memref<1x4x32x32xf32, #tpu.memory_space<vmem>>, vector<1x1x32x32xf32>,
    %c12 = arith.constant 12 : index
    %c0_153 = arith.constant 0 : index
    %268 = memref.load %arg2[%c12, %c0_153] : memref<16x4xf32, #tpu.memory_space<smem>>
    %269 = vector.broadcast %268 : f32 to vector<16x16xf32>
    %270 = arith.mulf %269, %1 : vector<16x16xf32>
    %c12_154 = arith.constant 12 : index
    %c1_155 = arith.constant 1 : index
    %271 = memref.load %arg2[%c12_154, %c1_155] : memref<16x4xf32, #tpu.memory_space<smem>>
    %272 = vector.broadcast %271 : f32 to vector<16x16xf32>
    %273 = arith.mulf %272, %3 : vector<16x16xf32>
    %274 = arith.addf %270, %273 : vector<16x16xf32>
    %c12_156 = arith.constant 12 : index
    %c2_157 = arith.constant 2 : index
    %275 = memref.load %arg2[%c12_156, %c2_157] : memref<16x4xf32, #tpu.memory_space<smem>>
    %276 = vector.broadcast %275 : f32 to vector<16x16xf32>
    %277 = arith.mulf %276, %5 : vector<16x16xf32>
    %278 = arith.addf %274, %277 : vector<16x16xf32>
    %c12_158 = arith.constant 12 : index
    %c3_159 = arith.constant 3 : index
    %279 = memref.load %arg2[%c12_158, %c3_159] : memref<16x4xf32, #tpu.memory_space<smem>>
    %280 = vector.broadcast %279 : f32 to vector<16x16xf32>
    %281 = arith.mulf %280, %7 : vector<16x16xf32>
    %282 = arith.addf %278, %281 : vector<16x16xf32>
    %c12_160 = arith.constant 12 : index
    %283 = memref.load %arg3[%c12_160] : memref<16xf32, #tpu.memory_space<smem>>
    %284 = vector.broadcast %283 : f32 to vector<16x16xf32>
    %285 = arith.addf %282, %284 : vector<16x16xf32>
    %c13 = arith.constant 13 : index
    %c0_161 = arith.constant 0 : index
    %286 = memref.load %arg2[%c13, %c0_161] : memref<16x4xf32, #tpu.memory_space<smem>>
    %287 = vector.broadcast %286 : f32 to vector<16x16xf32>
    %288 = arith.mulf %287, %1 : vector<16x16xf32>
    %c13_162 = arith.constant 13 : index
    %c1_163 = arith.constant 1 : index
    %289 = memref.load %arg2[%c13_162, %c1_163] : memref<16x4xf32, #tpu.memory_space<smem>>
    %290 = vector.broadcast %289 : f32 to vector<16x16xf32>
    %291 = arith.mulf %290, %3 : vector<16x16xf32>
    %292 = arith.addf %288, %291 : vector<16x16xf32>
    %c13_164 = arith.constant 13 : index
    %c2_165 = arith.constant 2 : index
    %293 = memref.load %arg2[%c13_164, %c2_165] : memref<16x4xf32, #tpu.memory_space<smem>>
    %294 = vector.broadcast %293 : f32 to vector<16x16xf32>
    %295 = arith.mulf %294, %5 : vector<16x16xf32>
    %296 = arith.addf %292, %295 : vector<16x16xf32>
    %c13_166 = arith.constant 13 : index
    %c3_167 = arith.constant 3 : index
    %297 = memref.load %arg2[%c13_166, %c3_167] : memref<16x4xf32, #tpu.memory_space<smem>>
    %298 = vector.broadcast %297 : f32 to vector<16x16xf32>
    %299 = arith.mulf %298, %7 : vector<16x16xf32>
    %300 = arith.addf %296, %299 : vector<16x16xf32>
    %c13_168 = arith.constant 13 : index
    %301 = memref.load %arg3[%c13_168] : memref<16xf32, #tpu.memory_space<smem>>
    %302 = vector.broadcast %301 : f32 to vector<16x16xf32>
    %303 = arith.addf %300, %302 : vector<16x16xf32>
    %c14 = arith.constant 14 : index
    %c0_169 = arith.constant 0 : index
    %304 = memref.load %arg2[%c14, %c0_169] : memref<16x4xf32, #tpu.memory_space<smem>>
    %305 = vector.broadcast %304 : f32 to vector<16x16xf32>
    %306 = arith.mulf %305, %1 : vector<16x16xf32>
    %c14_170 = arith.constant 14 : index
    %c1_171 = arith.constant 1 : index
    %307 = memref.load %arg2[%c14_170, %c1_171] : memref<16x4xf32, #tpu.memory_space<smem>>
    %308 = vector.broadcast %307 : f32 to vector<16x16xf32>
    %309 = arith.mulf %308, %3 : vector<16x16xf32>
    %310 = arith.addf %306, %309 : vector<16x16xf32>
    %c14_172 = arith.constant 14 : index
    %c2_173 = arith.constant 2 : index
    %311 = memref.load %arg2[%c14_172, %c2_173] : memref<16x4xf32, #tpu.memory_space<smem>>
    %312 = vector.broadcast %311 : f32 to vector<16x16xf32>
    %313 = arith.mulf %312, %5 : vector<16x16xf32>
    %314 = arith.addf %310, %313 : vector<16x16xf32>
    %c14_174 = arith.constant 14 : index
    %c3_175 = arith.constant 3 : index
    %315 = memref.load %arg2[%c14_174, %c3_175] : memref<16x4xf32, #tpu.memory_space<smem>>
    %316 = vector.broadcast %315 : f32 to vector<16x16xf32>
    %317 = arith.mulf %316, %7 : vector<16x16xf32>
    %318 = arith.addf %314, %317 : vector<16x16xf32>
    %c14_176 = arith.constant 14 : index
    %319 = memref.load %arg3[%c14_176] : memref<16xf32, #tpu.memory_space<smem>>
    %320 = vector.broadcast %319 : f32 to vector<16x16xf32>
    %321 = arith.addf %318, %320 : vector<16x16xf32>
    %c15 = arith.constant 15 : index
    %c0_177 = arith.constant 0 : index
    %322 = memref.load %arg2[%c15, %c0_177] : memref<16x4xf32, #tpu.memory_space<smem>>
    %323 = vector.broadcast %322 : f32 to vector<16x16xf32>
    %324 = arith.mulf %323, %1 : vector<16x16xf32>
    %c15_178 = arith.constant 15 : index
    %c1_179 = arith.constant 1 : index
    %325 = memref.load %arg2[%c15_178, %c1_179] : memref<16x4xf32, #tpu.memory_space<smem>>
    %326 = vector.broadcast %325 : f32 to vector<16x16xf32>
    %327 = arith.mulf %326, %3 : vector<16x16xf32>
    %328 = arith.addf %324, %327 : vector<16x16xf32>
    %c15_180 = arith.constant 15 : index
    %c2_181 = arith.constant 2 : index
    %329 = memref.load %arg2[%c15_180, %c2_181] : memref<16x4xf32, #tpu.memory_space<smem>>
    %330 = vector.broadcast %329 : f32 to vector<16x16xf32>
    %331 = arith.mulf %330, %5 : vector<16x16xf32>
    %332 = arith.addf %328, %331 : vector<16x16xf32>
    %c15_182 = arith.constant 15 : index
    %c3_183 = arith.constant 3 : index
    %333 = memref.load %arg2[%c15_182, %c3_183] : memref<16x4xf32, #tpu.memory_space<smem>>
    %334 = vector.broadcast %333 : f32 to vector<16x16xf32>
    %335 = arith.mulf %334, %7 : vector<16x16xf32>
    %336 = arith.addf %332, %335 : vector<16x16xf32>
    %c15_184 = arith.constant 15 : index
    %337 = memref.load %arg3[%c15_184] : memref<16xf32, #tpu.memory_space<smem>>
    %338 = vector.broadcast %337 : f32 to vector<16x16xf32>
    %339 = arith.addf %336, %338 : vector<16x16xf32>
    %cst_185 = arith.constant dense<0.000000e+00> : vector<16x32xf32>
    %340 = tpu.matmul %285, %9, %cst_185 {dimension_numbers = #tpu.dot_dimension_numbers<[1], [0], [0], [1], [0, 0, 1, 1], [], []>} : vector<16x16xf32>, vector<16x32xf32>, vector<16x32xf32> -> vector<16x32xf32>
    %cst_186 = arith.constant dense<0.000000e+00> : vector<16x32xf32>
    %341 = tpu.matmul %303, %11, %cst_186 {dimension_numbers = #tpu.dot_dimension_numbers<[1], [0], [0], [1], [0, 0, 1, 1], [], []>} : vector<16x16xf32>, vector<16x32xf32>, vector<16x32xf32> -> vector<16x32xf32>
    %342 = arith.addf %340, %341 : vector<16x32xf32>
    %cst_187 = arith.constant dense<0.000000e+00> : vector<32x32xf32>
    %343 = tpu.matmul %13, %342, %cst_187 {dimension_numbers = #tpu.dot_dimension_numbers<[1], [0], [0], [1], [0, 0, 1, 1], [], []>} : vector<32x16xf32>, vector<16x32xf32>, vector<32x32xf32> -> vector<32x32xf32>
    %cst_188 = arith.constant dense<0.000000e+00> : vector<16x32xf32>
    %344 = tpu.matmul %321, %9, %cst_188 {dimension_numbers = #tpu.dot_dimension_numbers<[1], [0], [0], [1], [0, 0, 1, 1], [], []>} : vector<16x16xf32>, vector<16x32xf32>, vector<16x32xf32> -> vector<16x32xf32>
    %cst_189 = arith.constant dense<0.000000e+00> : vector<16x32xf32>
    %345 = tpu.matmul %339, %11, %cst_189 {dimension_numbers = #tpu.dot_dimension_numbers<[1], [0], [0], [1], [0, 0, 1, 1], [], []>} : vector<16x16xf32>, vector<16x32xf32>, vector<16x32xf32> -> vector<16x32xf32>
    %346 = arith.addf %344, %345 : vector<16x32xf32>
    %cst_190 = arith.constant dense<0.000000e+00> : vector<32x32xf32>
    %347 = tpu.matmul %15, %346, %cst_190 {dimension_numbers = #tpu.dot_dimension_numbers<[1], [0], [0], [1], [0, 0, 1, 1], [], []>} : vector<32x16xf32>, vector<16x32xf32>, vector<32x32xf32> -> vector<32x32xf32>
    %348 = arith.addf %343, %347 : vector<32x32xf32>
    %c0_191 = arith.constant 0 : index
    %c3_192 = arith.constant 3 : index
    %c0_193 = arith.constant 0 : index
    %c0_194 = arith.constant 0 : index
    %349 = vector.load %arg7[%c0_191, %c3_192, %c0_193, %c0_194] : memref<1x4x32x32xf32, #tpu.memory_space<vmem>>, vector<1x1x32x32xf32>
    %350 = vector.shape_cast %349 : vector<1x1x32x32xf32> to vector<32x32xf32>
    %351 = vector.shape_cast %348 : vector<32x32xf32> to vector<1x1x32x32xf32>
    tpu.vector_store %arg7[%c0_191, %c3_192, %c0_193, %c0_194], %351 {strides = array<i32>} : memref<1x4x32x32xf32, #tpu.memory_space<vmem>>, vector<1x1x32x32xf32>,
    return
  }
  func.func @transform_0(%arg0: i32, %arg1: i32) -> (i32, i32) {
    %c0_i32 = arith.constant 0 : i32
    %c0_i32_0 = arith.constant 0 : i32
    %c0_i32_1 = arith.constant 0 : i32
    return %c0_i32, %c0_i32_0 : i32, i32
  }
  func.func @transform_1(%arg0: i32, %arg1: i32) -> i32 {
    %c0_i32 = arith.constant 0 : i32
    %c0_i32_0 = arith.constant 0 : i32
    return %c0_i32 : i32
  }
  func.func @transform_2(%arg0: i32, %arg1: i32) -> (i32, i32, i32) {
    %c0_i32 = arith.constant 0 : i32
    %c0_i32_0 = arith.constant 0 : i32
    %c0_i32_1 = arith.constant 0 : i32
    %c0_i32_2 = arith.constant 0 : i32
    return %c0_i32, %c0_i32_0, %c0_i32_1 : i32, i32, i32
  }
  func.func @transform_3(%arg0: i32, %arg1: i32) -> (i32, i32, i32) {
    %c0_i32 = arith.constant 0 : i32
    %c0_i32_0 = arith.constant 0 : i32
    %c0_i32_1 = arith.constant 0 : i32
    %c0_i32_2 = arith.constant 0 : i32
    return %c0_i32, %c0_i32_0, %c0_i32_1 : i32, i32, i32
  }
  func.func @transform_4(%arg0: i32, %arg1: i32) -> (i32, i32, i32, i32) {
    %c0_i32 = arith.constant 0 : i32
    %c0_i32_0 = arith.constant 0 : i32
    %c0_i32_1 = arith.constant 0 : i32
    return %arg0, %c0_i32, %arg1, %c0_i32_0 : i32, i32, i32, i32
  }
  func.func @transform_5(%arg0: i32, %arg1: i32) -> (i32, i32, i32, i32) {
    %c0_i32 = arith.constant 0 : i32
    %c0_i32_0 = arith.constant 0 : i32
    %c0_i32_1 = arith.constant 0 : i32
    return %arg0, %c0_i32, %arg1, %c0_i32_0 : i32, i32, i32, i32
  }
}

</mosaic_0001>

<llo_original>
// kernel: tpu_custom_call.1
$region0: #{tpu_custom_call.1}
  #allocation0 [shape = 'u32[]', space=smem, size = 0x4, offset = 0x4, fixed_abs, tag = 'smem constant byte address 0x4 - core index']
  #allocation1 [shape = 'u32[144,128]{1,0:T(1,128)}', space=vmem, size = 0x12000, scoped, tag = 'internal scratch']
  %s0 = inlined_call_operand.vmem [shape: f32[16,4], index: 0, kind: input, shape index: {}]
  %s1 = inlined_call_operand.vmem [shape: f32[16], index: 1, kind: input, shape index: {}]
  %s2 = inlined_call_operand.hbm [shape: f32[2,16,32], index: 2, kind: input, shape index: {}]
  %s3 = inlined_call_operand.vmem [shape: f32[2,32,16], index: 3, kind: input, shape index: {}]
  %s4 = inlined_call_operand.vmem [shape: f32[2,4,16,16], index: 4, kind: input, shape index: {}]
  %s5 = inlined_call_operand.hbm [shape: f32[2,4,32,32], index: 5, kind: output, shape index: {}]
  %s6 = sld [smem:[#allocation0]]
  $region65: #{tpu_custom_call.1} parent=0
    _
  %s8 = ssub.s32 1, %s6
  %s9 = scalar_select 0, %s8, %s6
  $region1: #{tpu_custom_call.1} parent=0
    #allocation2 [shape = 'u8[8192]{0}', space=smem, size = 0x2000, scoped, tag = 'input window, operand 0, single buffered']
    #allocation3 [shape = 's32[2]{0}', space=sflag, size = 0x8, scoped, tag = 'scoped memory for tpu_custom_call.1']
    #allocation4 [shape = 's32[2]{0}', space=sflag, size = 0x8, scoped, tag = 'scoped memory for tpu_custom_call.1']
    #allocation5 [shape = 's32[2]{0}', space=sflag, size = 0x8, scoped, tag = 'scoped memory for tpu_custom_call.1']
    #allocation6 [shape = 'u8[512]{0}', space=smem, size = 0x200, scoped, tag = 'input window, operand 1, single buffered']
    #allocation7 [shape = 's32[1]{0}', space=sflag, size = 0x4, scoped, tag = 'scoped memory for tpu_custom_call.1']
    #allocation8 [shape = 'u8[16384]{0}', space=vmem, size = 0x4000, scoped, tag = 'input window, operand 2, single buffered']
    #allocation9 [shape = 'u8[131072]{0}', space=vmem, size = 0x20000, scoped, tag = 'output window, operand 0']
    %10 = vsyncpa [#allocation5], 0
    %11 = vsyncpa [#allocation7], 0
    %12 = vsyncpa [#allocation3], 0
    %13 = vsyncpa [#allocation4], 0
    %s14 = scalar_lea.sflag [#allocation4], 1
    %15 = vsyncpa %s14, 0
    loop: start=0, step=1, limit=4
    $region2: #{tpu_custom_call.1} parent=1 // loop_pre_header
      _
    $region3: #{tpu_custom_call.1} parent=1 // loop_header
      %s17 = sphi 0, %s21
      %p18 = scmp.ge.s32.totalorder %s17, 4
      %s24 = sphi 0, %s36
      %s25 = sphi 0, %s32
      %s26 = sphi 0, %s24
      %s27 = sphi 0, %s25
      %s28 = sphi 0, %s26
      %s29 = sphi 0, %s27
      %s37 = sphi 0, %s37
      %s39 = sphi 0, %s37
      %s40 = sphi 0, %s39
      %s54 = sphi 0, %s40
      %s58 = sphi 0, %s58
      %s60 = sphi 0, %s58
      %s61 = sphi 0, %s60
      %s75 = sphi 0, %s61
      %s79 = sphi 0, %s79
      %s81 = sphi 0, %s79
      %s82 = sphi 0, %s81
      %s96 = sphi 0, %s82
      %s100 = sphi 0, %s100
      %s102 = sphi 0, %s100
      %s103 = sphi 0, %s102
      %s117 = sphi 0, %s103
      %s125 = sphi 0, %s127
      %s128 = sphi 0, %s125
      %s129 = sphi 0, %s128
      %s145 = sphi 0, %s129
      %s153 = sphi 0, %s155
      %s156 = sphi 0, %s153
      %s157 = sphi 0, %s156
      %s173 = sphi 0, %s157
    $region4: #{tpu_custom_call.1} parent=1 // loop_header_branch
      %20 = sbr.rel (%p18) target = $region8
    $region5: #{tpu_custom_call.1} parent=1 // loop_body
      %s22 = ssub.s32 %s17, 1
      %s23 = ssub.s32 %s17, 2
      %s30 = sadd.s32 1, %s25
      %p31 = scmp.ge.s32.totalorder %s30, 1
      %s32 = scalar_select %p31, 0, %s30
      %s33 = sadd.s32 1, %s24
      %s34 = scalar_select %p31, %s33, %s24
      %p35 = scmp.ge.s32.totalorder %s34, 2
      %s36 = scalar_select %p35, 0, %s34
      %s38 = sadd.s32 %s37, 1
      %p41 = scmp.eq.s32.totalorder %s17, 1
      %p42 = scmp.ne.s32.totalorder %s37, %s39
      %p43 = scmp.eq.s32.totalorder %s17, 0
      %p44 = por %p42, %p43
      %p45 = scmp.ne.s32.totalorder %s37, %s39
      %p46 = scmp.eq.s32.totalorder %s22, 1
      %p47 = por %p45, %p46
      %p48 = scmp.ne.s32.totalorder %s39, %s40
      %p49 = scmp.eq.s32.totalorder %s22, 0
      %p50 = por %p48, %p49
      %p51 = scmp.ne.s32.totalorder %s39, %s40
      %p52 = scmp.eq.s32.totalorder %s23, 1
      %p53 = por %p51, %p52
      %p55 = scmp.ne.s32.totalorder %s40, %s54
      %p56 = scmp.eq.s32.totalorder %s23, 0
      %p57 = por %p55, %p56
      %s59 = sadd.s32 %s58, 1
      %p62 = scmp.eq.s32.totalorder %s17, 1
      %p63 = scmp.ne.s32.totalorder %s58, %s60
      %p64 = scmp.eq.s32.totalorder %s17, 0
      %p65 = por %p63, %p64
      %p66 = scmp.ne.s32.totalorder %s58, %s60
      %p67 = scmp.eq.s32.totalorder %s22, 1
      %p68 = por %p66, %p67
      %p69 = scmp.ne.s32.totalorder %s60, %s61
      %p70 = scmp.eq.s32.totalorder %s22, 0
      %p71 = por %p69, %p70
      %p72 = scmp.ne.s32.totalorder %s60, %s61
      %p73 = scmp.eq.s32.totalorder %s23, 1
      %p74 = por %p72, %p73
      %p76 = scmp.ne.s32.totalorder %s61, %s75
      %p77 = scmp.eq.s32.totalorder %s23, 0
      %p78 = por %p76, %p77
      %s80 = sadd.s32 %s79, 1
      %p83 = scmp.eq.s32.totalorder %s17, 1
      %p84 = scmp.ne.s32.totalorder %s79, %s81
      %p85 = scmp.eq.s32.totalorder %s17, 0
      %p86 = por %p84, %p85
      %p87 = scmp.ne.s32.totalorder %s79, %s81
      %p88 = scmp.eq.s32.totalorder %s22, 1
      %p89 = por %p87, %p88
      %p90 = scmp.ne.s32.totalorder %s81, %s82
      %p91 = scmp.eq.s32.totalorder %s22, 0
      %p92 = por %p90, %p91
      %p93 = scmp.ne.s32.totalorder %s81, %s82
      %p94 = scmp.eq.s32.totalorder %s23, 1
      %p95 = por %p93, %p94
      %p97 = scmp.ne.s32.totalorder %s82, %s96
      %p98 = scmp.eq.s32.totalorder %s23, 0
      %p99 = por %p97, %p98
      %s101 = sadd.s32 %s100, 1
      %p104 = scmp.eq.s32.totalorder %s17, 1
      %p105 = scmp.ne.s32.totalorder %s100, %s102
      %p106 = scmp.eq.s32.totalorder %s17, 0
      %p107 = por %p105, %p106
      %p108 = scmp.ne.s32.totalorder %s100, %s102
      %p109 = scmp.eq.s32.totalorder %s22, 1
      %p110 = por %p108, %p109
      %p111 = scmp.ne.s32.totalorder %s102, %s103
      %p112 = scmp.eq.s32.totalorder %s22, 0
      %p113 = por %p111, %p112
      %p114 = scmp.ne.s32.totalorder %s102, %s103
      %p115 = scmp.eq.s32.totalorder %s23, 1
      %p116 = por %p114, %p115
      %p118 = scmp.ne.s32.totalorder %s103, %s117
      %p119 = scmp.eq.s32.totalorder %s23, 0
      %p120 = por %p118, %p119
      %s121 = ssub.s32 %s24, %s36
      %s122 = ssub.s32 %s25, %s32
      %s123 = sor.u32 %s121, %s122
      %p124 = scmp.eq.s32.totalorder %s123, 0
      %s126 = sadd.s32 %s125, 1
      %s127 = scalar_select %p124, %s125, %s126
      %p130 = pneg %p124
      %p131 = scmp.eq.s32.totalorder %s17, 1
      %p132 = por %p130, %p131
      %p133 = scmp.ne.s32.totalorder %s125, %s128
      %p134 = scmp.eq.s32.totalorder %s17, 0
      %p135 = por %p133, %p134
      %p136 = scmp.ne.s32.totalorder %s125, %s128
      %p137 = scmp.eq.s32.totalorder %s22, 1
      %p138 = por %p136, %p137
      %p139 = scmp.ne.s32.totalorder %s128, %s129
      %p140 = scmp.eq.s32.totalorder %s22, 0
      %p141 = por %p139, %p140
      %p142 = scmp.ne.s32.totalorder %s128, %s129
      %p143 = scmp.eq.s32.totalorder %s23, 1
      %p144 = por %p142, %p143
      %p146 = scmp.ne.s32.totalorder %s129, %s145
      %p147 = scmp.eq.s32.totalorder %s23, 0
      %p148 = por %p146, %p147
      %s149 = ssub.s32 %s24, %s36
      %s150 = ssub.s32 %s25, %s32
      %s151 = sor.u32 %s149, %s150
      %p152 = scmp.eq.s32.totalorder %s151, 0
      %s154 = sadd.s32 %s153, 1
      %s155 = scalar_select %p152, %s153, %s154
      %p158 = pneg %p152
      %p159 = scmp.eq.s32.totalorder %s17, 1
      %p160 = por %p158, %p159
      %p161 = scmp.ne.s32.totalorder %s153, %s156
      %p162 = scmp.eq.s32.totalorder %s17, 0
      %p163 = por %p161, %p162
      %p164 = scmp.ne.s32.totalorder %s153, %s156
      %p165 = scmp.eq.s32.totalorder %s22, 1
      %p166 = por %p164, %p165
      %p167 = scmp.ne.s32.totalorder %s156, %s157
      %p168 = scmp.eq.s32.totalorder %s22, 0
      %p169 = por %p167, %p168
      %p170 = scmp.ne.s32.totalorder %s156, %s157
      %p171 = scmp.eq.s32.totalorder %s23, 1
      %p172 = por %p170, %p171
      %p174 = scmp.ne.s32.totalorder %s157, %s173
      %p175 = scmp.eq.s32.totalorder %s23, 0
      %p176 = por %p174, %p175
      %p177 = scmp.le.s32.totalorder 1, %s17
      %p178 = scmp.lt.s32.totalorder %s17, 3
      %p179 = pnand %p177, %p178
      %p180 = pneg %p179
      // Predicated region
      $region9: #{tpu_custom_call.1} parent=5 // pred_check
        _
      $region10: #{tpu_custom_call.1} parent=5 // pred_check_branch
        %182 = sbr.rel (%p179) target = $region12
      $region11: #{tpu_custom_call.1} parent=5 // pred_region
        %s183 = ssub.s32 %s17, 1
        // Predicated region
        $region13: #{tpu_custom_call.1} parent=11 // pred_check
          %p184 = pneg %p50
        $region14: #{tpu_custom_call.1} parent=11 // pred_check_branch
          %186 = sbr.rel (%p184) target = $region16
        $region15: #{tpu_custom_call.1} parent=11 // pred_region
          %s188 = ssub.s32 256, 256
          %189 = vsyncadd [#allocation5], %s188
          %s190 = sshll.u32 %s0, 4
          %s191 = int_to_ptr.vmem [resolvable:$true] %s190
          %196 = dma.vmem_to_smem %s191, 256, [#allocation2], [#allocation5], 128, 128, 8
        $region16: #{tpu_custom_call.1} parent=11 // pred_fallthru
          _
        // Predicated region
        $region17: #{tpu_custom_call.1} parent=11 // pred_check
          %p197 = pneg %p71
        $region18: #{tpu_custom_call.1} parent=11 // pred_check_branch
          %199 = sbr.rel (%p197) target = $region20
        $region19: #{tpu_custom_call.1} parent=11 // pred_region
          %s201 = ssub.s32 16, 16
          %202 = vsyncadd [#allocation7], %s201
          %s204 = sshll.u32 %s1, 4
          %s205 = int_to_ptr.vmem [resolvable:$true] %s204
          %207 = dma.vmem_to_smem %s205, 16, [#allocation6], [#allocation7]
        $region20: #{tpu_custom_call.1} parent=11 // pred_fallthru
          _
        // Predicated region
        $region21: #{tpu_custom_call.1} parent=11 // pred_check
          %p208 = pneg %p92
        $region22: #{tpu_custom_call.1} parent=11 // pred_check_branch
          %210 = sbr.rel (%p208) target = $region24
        $region23: #{tpu_custom_call.1} parent=11 // pred_region
          %s212 = ssub.s32 512, 512
          %213 = vsyncadd [#allocation3], %s212
          %s214 = sshll.u32 [#allocation8], 4
          %s215 = int_to_ptr.vmem [resolvable:$true] %s214
          %220 = dma.hbm_to_vmem [thread:$0]  %s2, 512, %s215, [#allocation3], 128, 128, 8
        $region24: #{tpu_custom_call.1} parent=11 // pred_fallthru
          _
        // Predicated region
        $region25: #{tpu_custom_call.1} parent=11 // pred_check
          %p221 = pneg %p113
        $region26: #{tpu_custom_call.1} parent=11 // pred_check_branch
          %223 = sbr.rel (%p221) target = $region28
        $region27: #{tpu_custom_call.1} parent=11 // pred_region
          _
        $region28: #{tpu_custom_call.1} parent=11 // pred_fallthru
          _
      $region12: #{tpu_custom_call.1} parent=5 // pred_fallthru
        _
      %p224 = scmp.lt.s32.totalorder %s17, 2
      // Predicated region
      $region29: #{tpu_custom_call.1} parent=5 // pred_check
        %p225 = pneg %p224
      $region30: #{tpu_custom_call.1} parent=5 // pred_check_branch
        %227 = sbr.rel (%p225) target = $region32
      $region31: #{tpu_custom_call.1} parent=5 // pred_region
        // Predicated region
        $region33: #{tpu_custom_call.1} parent=31 // pred_check
          %p228 = pneg %p135
        $region34: #{tpu_custom_call.1} parent=31 // pred_check_branch
          %230 = sbr.rel (%p228) target = $region36
        $region35: #{tpu_custom_call.1} parent=31 // pred_region
          %s231 = smul.u32 2, %s25
          %p232 = scmp.lt.s32.totalorder %s24, 1
          %s233 = scalar_select %p232, %s24, 1
          %p234 = scmp.lt.s32.totalorder %s231, 1
          %s235 = scalar_select %p234, %s231, 1
          %s236 = smul.addr %s233, 8
          %s237 = sadd.s32 %s235, %s236
          %s238 = smul.addr %s237, 8
          %s239 = scalar_lea.vmem %s4, %s238
          %s240 = smul.u32 2, %s25
        $region36: #{tpu_custom_call.1} parent=31 // pred_fallthru
          _
      $region32: #{tpu_custom_call.1} parent=5 // pred_fallthru
        _
      %p241 = scmp.le.s32.totalorder 1, %s17
      %p242 = scmp.lt.s32.totalorder %s17, 3
      %p243 = pnand %p241, %p242
      %p244 = pneg %p243
      // Predicated region
      $region37: #{tpu_custom_call.1} parent=5 // pred_check
        _
      $region38: #{tpu_custom_call.1} parent=5 // pred_check_branch
        %246 = sbr.rel (%p243) target = $region40
      $region39: #{tpu_custom_call.1} parent=5 // pred_region
        %s247 = ssub.s32 %s17, 1
        // Predicated region
        $region41: #{tpu_custom_call.1} parent=39 // pred_check
          %p248 = pneg %p50
        $region42: #{tpu_custom_call.1} parent=39 // pred_check_branch
          %250 = sbr.rel (%p248) target = $region44
        $region43: #{tpu_custom_call.1} parent=39 // pred_region
          %251 = dma.done [#allocation5], 256
        $region44: #{tpu_custom_call.1} parent=39 // pred_fallthru
          _
        // Predicated region
        $region45: #{tpu_custom_call.1} parent=39 // pred_check
          %p252 = pneg %p71
        $region46: #{tpu_custom_call.1} parent=39 // pred_check_branch
          %254 = sbr.rel (%p252) target = $region48
        $region47: #{tpu_custom_call.1} parent=39 // pred_region
          %255 = dma.done [#allocation7], 16
        $region48: #{tpu_custom_call.1} parent=39 // pred_fallthru
          _
        // Predicated region
        $region49: #{tpu_custom_call.1} parent=39 // pred_check
          %p256 = pneg %p92
        $region50: #{tpu_custom_call.1} parent=39 // pred_check_branch
          %258 = sbr.rel (%p256) target = $region52
        $region51: #{tpu_custom_call.1} parent=39 // pred_region
          %259 = dma.done [#allocation3], 512
        $region52: #{tpu_custom_call.1} parent=39 // pred_fallthru
          _
        %260 = sfence
        %p261 = pneg %p50
        %p262 = pneg %p47
        %p263 = pneg %p71
        %p264 = pneg %p68
        %p265 = pneg %p92
        %p266 = pneg %p89
        %p267 = pneg %p113
        %p268 = pneg %p110
        %s269 = smul.u32 2, %s27
        %p270 = scmp.lt.s32.totalorder %s26, 1
        %s271 = scalar_select %p270, %s26, 1
        %p272 = scmp.lt.s32.totalorder %s269, 1
        %s273 = scalar_select %p272, %s269, 1
        %s274 = smul.addr %s271, 8
        %s275 = sadd.s32 %s273, %s274
        %s276 = smul.addr %s275, 8
        %s277 = scalar_lea.vmem %s4, %s276
        %p278 = pneg %p141
        %p279 = pneg %p138
        %p280 = pneg %p169
        %p281 = pneg %p166
        %s282 = sand.u32 %s156, 1
        %s283 = scalar_lea.sflag [#allocation4], %s282
        %s284 = sand.u32 %s156, 1
        %s285 = smul.addr %s284, 128
        %s286 = scalar_lea.vmem [#allocation9], %s285
        %s287 = smul.u32 2, %s27
        %p288 = scmp.lt.s32.totalorder %s26, 1
        %s289 = scalar_select %p288, %s26, 1
        %p290 = scmp.lt.s32.totalorder %s287, 1
        %s291 = scalar_select %p290, %s287, 1
        %s292 = smul.addr %s289, 8
        %s293 = sadd.s32 %s291, %s292
        %s294 = smul.addr %s293, 8
        %s295 = scalar_lea.vmem %s4, %s294
        %s296 = smul.u32 2, %s27
        %s297 = smul.u32 4, %s27
        %v298 = vld [vmem:[%s295] sm:$0xff]
        %v299 = vld [vmem:[%s295 + $0x8] sm:$0xff]
        %s300 = scalar_lea.vmem %s295, 16
        %v301 = vld [vmem:[%s300] sm:$0xff]
        %v302 = vld [vmem:[%s300 + $0x8] sm:$0xff]
        %s303 = scalar_lea.vmem %s295, 32
        %v304 = vld [vmem:[%s303] sm:$0xff]
        %v305 = vld [vmem:[%s303 + $0x8] sm:$0xff]
        %s306 = scalar_lea.vmem %s295, 48
        %v307 = vld [vmem:[%s306] sm:$0xff]
        %v308 = vld [vmem:[%s306 + $0x8] sm:$0xff]
        %v309 = vld [vmem:[#allocation8] sm:$0xff]
        %v310 = vld [vmem:[#allocation8 + $0x8] sm:$0xff]
        %s311 = scalar_lea.vmem [#allocation8], 16
        %v312 = vld [vmem:[%s311] sm:$0xff]
        %v313 = vld [vmem:[%s311 + $0x8] sm:$0xff]
        %v314 = vld [vmem:[%s3] sm:$0xff]
        %v315 = vld [vmem:[%s3 + $0x8] sm:$0xff]
        %v316 = vld [vmem:[%s3 + $0x10] sm:$0xff]
        %v317 = vld [vmem:[%s3 + $0x18] sm:$0xff]
        %s318 = scalar_lea.vmem %s3, 32
        %v319 = vld [vmem:[%s318] sm:$0xff]
        %v320 = vld [vmem:[%s318 + $0x8] sm:$0xff]
        %v321 = vld [vmem:[%s318 + $0x10] sm:$0xff]
        %v322 = vld [vmem:[%s318 + $0x18] sm:$0xff]
        %s323 = sld [smem:[#allocation2]]
        %v324 = vstv %s323
        %v325 = vmul.f32 %v324, %v298
        %v326 = vmul.f32 %v324, %v299
        %s327 = sld [smem:[#allocation2 + $0x1]]
        %v328 = vstv %s327
        %v329 = vmul.f32 %v328, %v301
        %v330 = vmul.f32 %v328, %v302
        %v331 = vadd.f32 %v325, %v329
        %v332 = vadd.f32 %v326, %v330
        %s333 = sld [smem:[#allocation2 + $0x2]]
        %v334 = vstv %s333
        %v335 = vmul.f32 %v334, %v304
        %v336 = vmul.f32 %v334, %v305
        %v337 = vadd.f32 %v331, %v335
        %v338 = vadd.f32 %v332, %v336
        %s339 = sld [smem:[#allocation2 + $0x3]]
        %v340 = vstv %s339
        %v341 = vmul.f32 %v340, %v307
        %v342 = vmul.f32 %v340, %v308
        %v343 = vadd.f32 %v337, %v341
        %v344 = vadd.f32 %v338, %v342
        %s345 = sld [smem:[#allocation6]]
        %v346 = vstv %s345
        %v347 = vadd.f32 %v343, %v346
        %v348 = vadd.f32 %v344, %v346
        %s349 = sld [smem:[#allocation2 + $0x80]]
        %v350 = vstv %s349
        %v351 = vmul.f32 %v350, %v298
        %v352 = vmul.f32 %v350, %v299
        %s353 = sld [smem:[#allocation2 + $0x81]]
        %v354 = vstv %s353
        %v355 = vmul.f32 %v354, %v301
        %v356 = vmul.f32 %v354, %v302
        %v357 = vadd.f32 %v351, %v355
        %v358 = vadd.f32 %v352, %v356
        %s359 = sld [smem:[#allocation2 + $0x82]]
        %v360 = vstv %s359
        %v361 = vmul.f32 %v360, %v304
        %v362 = vmul.f32 %v360, %v305
        %v363 = vadd.f32 %v357, %v361
        %v364 = vadd.f32 %v358, %v362
        %s365 = sld [smem:[#allocation2 + $0x83]]
        %v366 = vstv %s365
        %v367 = vmul.f32 %v366, %v307
        %v368 = vmul.f32 %v366, %v308
        %v369 = vadd.f32 %v363, %v367
        %v370 = vadd.f32 %v364, %v368
        %s371 = sld [smem:[#allocation6 + $0x1]]
        %v372 = vstv %s371
        %v373 = vadd.f32 %v369, %v372
        %v374 = vadd.f32 %v370, %v372
        %s375 = sld [smem:[#allocation2 + $0x100]]
        %v376 = vstv %s375
        %v377 = vmul.f32 %v376, %v298
        %v378 = vmul.f32 %v376, %v299
        %s379 = sld [smem:[#allocation2 + $0x101]]
        %v380 = vstv %s379
        %v381 = vmul.f32 %v380, %v301
        %v382 = vmul.f32 %v380, %v302
        %v383 = vadd.f32 %v377, %v381
        %v384 = vadd.f32 %v378, %v382
        %s385 = sld [smem:[#allocation2 + $0x102]]
        %v386 = vstv %s385
        %v387 = vmul.f32 %v386, %v304
        %v388 = vmul.f32 %v386, %v305
        %v389 = vadd.f32 %v383, %v387
        %v390 = vadd.f32 %v384, %v388
        %s391 = sld [smem:[#allocation2 + $0x103]]
        %v392 = vstv %s391
        %v393 = vmul.f32 %v392, %v307
        %v394 = vmul.f32 %v392, %v308
        %v395 = vadd.f32 %v389, %v393
        %v396 = vadd.f32 %v390, %v394
        %s397 = sld [smem:[#allocation6 + $0x2]]
        %v398 = vstv %s397
        %v399 = vadd.f32 %v395, %v398
        %v400 = vadd.f32 %v396, %v398
        %s401 = sld [smem:[#allocation2 + $0x180]]
        %v402 = vstv %s401
        %v403 = vmul.f32 %v402, %v298
        %v404 = vmul.f32 %v402, %v299
        %s405 = sld [smem:[#allocation2 + $0x181]]
        %v406 = vstv %s405
        %v407 = vmul.f32 %v406, %v301
        %v408 = vmul.f32 %v406, %v302
        %v409 = vadd.f32 %v403, %v407
        %v410 = vadd.f32 %v404, %v408
        %s411 = sld [smem:[#allocation2 + $0x182]]
        %v412 = vstv %s411
        %v413 = vmul.f32 %v412, %v304
        %v414 = vmul.f32 %v412, %v305
        %v415 = vadd.f32 %v409, %v413
        %v416 = vadd.f32 %v410, %v414
        %s417 = sld [smem:[#allocation2 + $0x183]]
        %v418 = vstv %s417
        %v419 = vmul.f32 %v418, %v307
        %v420 = vmul.f32 %v418, %v308
        %v421 = vadd.f32 %v415, %v419
        %v422 = vadd.f32 %v416, %v420
        %s423 = sld [smem:[#allocation6 + $0x3]]
        %v424 = vstv %s423
        %v425 = vadd.f32 %v421, %v424
        %v426 = vadd.f32 %v422, %v424
        %vm427 = vcmask 130048
        %v429 = vsel %vm427, %v373, 0
        %v432 = vsel %vm427, %v374, 0
        %434 = vmatprep.subr.mxu0 0.0
        %435 = vmatpush1.msra.mxu0 %v312
        %436 = vmatprep.subr.mxu0 0.0
        %437 = vmatpush1.msra.mxu0 %v313
        %438 = vmatprep.subr.mxu0 0.0
        %439 = vmatpush1.msra.mxu0 0.0
        %440 = vmatprep.subr.mxu0 0.0
        %441 = vmatpush1.msra.mxu0 0.0
        %442 = vmatprep.subr.mxu0 0.0
        %443 = vmatpush1.msra.mxu0 0.0
        %444 = vmatprep.subr.mxu0 0.0
        %445 = vmatpush1.msra.mxu0 0.0
        %446 = vmatprep.subr.mxu0 0.0
        %447 = vmatpush1.msra.mxu0 0.0
        %448 = vmatprep.subr.mxu0 0.0
        %449 = vmatpush1.msra.mxu0 0.0
        %450 = vmatprep.subr.mxu0 0.0
        %451 = vmatpush1.msra.mxu0 0.0
        %452 = vmatprep.subr.mxu0 0.0
        %453 = vmatpush1.msra.mxu0 0.0
        %454 = vmatprep.subr.mxu0 0.0
        %455 = vmatpush1.msra.mxu0 0.0
        %456 = vmatprep.subr.mxu0 0.0
        %457 = vmatpush1.msra.mxu0 0.0
        %458 = vmatprep.subr.mxu0 0.0
        %459 = vmatpush1.msra.mxu0 0.0
        %460 = vmatprep.subr.mxu0 0.0
        %461 = vmatpush1.msra.mxu0 0.0
        %462 = vmatprep.subr.mxu0 0.0
        %463 = vmatpush1.msra.mxu0 0.0
        %464 = vmatprep.subr.mxu0 0.0
        %465 = vmatpush1.msra.mxu0 0.0
        %466 = vmatprep.subr.mxu0 0.0
        %467 = vmatpush1.msra.mxu0 0.0
        %468 = vmatprep.subr.mxu0 0.0
        %469 = vmatpush1.msra.mxu0 0.0
        %470 = vmatprep.subr.mxu0 0.0
        %471 = vmatpush1.msra.mxu0 0.0
        %472 = vmatprep.subr.mxu0 0.0
        %473 = vmatpush1.msra.mxu0 0.0
        %474 = vmatprep.subr.mxu0 0.0
        %475 = vmatpush1.msra.mxu0 0.0
        %476 = vmatprep.subr.mxu0 0.0
        %477 = vmatpush1.msra.mxu0 0.0
        %478 = vmatprep.subr.mxu0 0.0
        %479 = vmatpush1.msra.mxu0 0.0
        %480 = vmatprep.subr.mxu0 0.0
        %481 = vmatpush1.msra.mxu0 0.0
        %482 = vmatprep.subr.mxu0 0.0
        %483 = vmatpush1.msra.mxu0 0.0
        %484 = vmatprep.subr.mxu0 0.0
        %485 = vmatpush1.msra.mxu0 0.0
        %486 = vmatprep.subr.mxu0 0.0
        %487 = vmatpush1.msra.mxu0 0.0
        %488 = vmatprep.subr.mxu0 0.0
        %489 = vmatpush1.msra.mxu0 0.0
        %490 = vmatprep.subr.mxu0 0.0
        %491 = vmatpush1.msra.mxu0 0.0
        %492 = vmatprep.subr.mxu0 0.0
        %493 = vmatpush1.msra.mxu0 0.0
        %494 = vmatprep.subr.mxu0 0.0
        %495 = vmatpush1.msra.mxu0 0.0
        %496 = vmatprep.subr.mxu0 0.0
        %497 = vmatpush1.msra.mxu0 0.0
        %498 = vmatprep.mubr.f32.mxu0 0.0
        %499 = vmatmul.mubr.f32.gmra.mrb[0].mxu0 %v429
        %v500 = vpop.f32.mrb[0].mxu0
        %v501 = vadd.f32 0.0, %v500
        %v502 = vpop.f32.mrb[0].mxu0
        %503 = vmatprep.mubr.f32.mxu0 0.0
        %504 = vmatmul.mubr.f32.gmra.mrb[0].mxu0 %v432
        %v505 = vpop.f32.mrb[0].mxu0
        %v506 = vadd.f32 0.0, %v505
        %v507 = vpop.f32.mrb[0].mxu0
        %508 = vdwg.mxu0
        %v510 = vsel %vm427, %v347, 0
        %v513 = vsel %vm427, %v348, 0
        %515 = vmatprep.subr.mxu0 0.0
        %516 = vmatpush1.msra.mxu0 %v309
        %517 = vmatprep.subr.mxu0 0.0
        %518 = vmatpush1.msra.mxu0 %v310
        %519 = vmatprep.subr.mxu0 0.0
        %520 = vmatpush1.msra.mxu0 0.0
        %521 = vmatprep.subr.mxu0 0.0
        %522 = vmatpush1.msra.mxu0 0.0
        %523 = vmatprep.subr.mxu0 0.0
        %524 = vmatpush1.msra.mxu0 0.0
        %525 = vmatprep.subr.mxu0 0.0
        %526 = vmatpush1.msra.mxu0 0.0
        %527 = vmatprep.subr.mxu0 0.0
        %528 = vmatpush1.msra.mxu0 0.0
        %529 = vmatprep.subr.mxu0 0.0
        %530 = vmatpush1.msra.mxu0 0.0
        %531 = vmatprep.subr.mxu0 0.0
        %532 = vmatpush1.msra.mxu0 0.0
        %533 = vmatprep.subr.mxu0 0.0
        %534 = vmatpush1.msra.mxu0 0.0
        %535 = vmatprep.subr.mxu0 0.0
        %536 = vmatpush1.msra.mxu0 0.0
        %537 = vmatprep.subr.mxu0 0.0
        %538 = vmatpush1.msra.mxu0 0.0
        %539 = vmatprep.subr.mxu0 0.0
        %540 = vmatpush1.msra.mxu0 0.0
        %541 = vmatprep.subr.mxu0 0.0
        %542 = vmatpush1.msra.mxu0 0.0
        %543 = vmatprep.subr.mxu0 0.0
        %544 = vmatpush1.msra.mxu0 0.0
        %545 = vmatprep.subr.mxu0 0.0
        %546 = vmatpush1.msra.mxu0 0.0
        %547 = vmatprep.subr.mxu0 0.0
        %548 = vmatpush1.msra.mxu0 0.0
        %549 = vmatprep.subr.mxu0 0.0
        %550 = vmatpush1.msra.mxu0 0.0
        %551 = vmatprep.subr.mxu0 0.0
        %552 = vmatpush1.msra.mxu0 0.0
        %553 = vmatprep.subr.mxu0 0.0
        %554 = vmatpush1.msra.mxu0 0.0
        %555 = vmatprep.subr.mxu0 0.0
        %556 = vmatpush1.msra.mxu0 0.0
        %557 = vmatprep.subr.mxu0 0.0
        %558 = vmatpush1.msra.mxu0 0.0
        %559 = vmatprep.subr.mxu0 0.0
        %560 = vmatpush1.msra.mxu0 0.0
        %561 = vmatprep.subr.mxu0 0.0
        %562 = vmatpush1.msra.mxu0 0.0
        %563 = vmatprep.subr.mxu0 0.0
        %564 = vmatpush1.msra.mxu0 0.0
        %565 = vmatprep.subr.mxu0 0.0
        %566 = vmatpush1.msra.mxu0 0.0
        %567 = vmatprep.subr.mxu0 0.0
        %568 = vmatpush1.msra.mxu0 0.0
        %569 = vmatprep.subr.mxu0 0.0
        %570 = vmatpush1.msra.mxu0 0.0
        %571 = vmatprep.subr.mxu0 0.0
        %572 = vmatpush1.msra.mxu0 0.0
        %573 = vmatprep.subr.mxu0 0.0
        %574 = vmatpush1.msra.mxu0 0.0
        %575 = vmatprep.subr.mxu0 0.0
        %576 = vmatpush1.msra.mxu0 0.0
        %577 = vmatprep.subr.mxu0 0.0
        %578 = vmatpush1.msra.mxu0 0.0
        %579 = vmatprep.mubr.f32.mxu0 0.0
        %580 = vmatmul.mubr.f32.gmra.mrb[0].mxu0 %v510
        %v581 = vpop.f32.mrb[0].mxu0
        %v582 = vadd.f32 %v501, %v581
        %v583 = vpop.f32.mrb[0].mxu0
        %584 = vmatprep.mubr.f32.mxu0 0.0
        %585 = vmatmul.mubr.f32.gmra.mrb[0].mxu0 %v513
        %v586 = vpop.f32.mrb[0].mxu0
        %v587 = vadd.f32 %v506, %v586
        %v588 = vpop.f32.mrb[0].mxu0
        %589 = vdwg.mxu0
        %v591 = vsel %vm427, %v425, 0
        %v594 = vsel %vm427, %v426, 0
        %596 = vmatprep.subr.mxu0 0.0
        %597 = vmatpush1.msra.mxu0 %v312
        %598 = vmatprep.subr.mxu0 0.0
        %599 = vmatpush1.msra.mxu0 %v313
        %600 = vmatprep.subr.mxu0 0.0
        %601 = vmatpush1.msra.mxu0 0.0
        %602 = vmatprep.subr.mxu0 0.0
        %603 = vmatpush1.msra.mxu0 0.0
        %604 = vmatprep.subr.mxu0 0.0
        %605 = vmatpush1.msra.mxu0 0.0
        %606 = vmatprep.subr.mxu0 0.0
        %607 = vmatpush1.msra.mxu0 0.0
        %608 = vmatprep.subr.mxu0 0.0
        %609 = vmatpush1.msra.mxu0 0.0
        %610 = vmatprep.subr.mxu0 0.0
        %611 = vmatpush1.msra.mxu0 0.0
        %612 = vmatprep.subr.mxu0 0.0
        %613 = vmatpush1.msra.mxu0 0.0
        %614 = vmatprep.subr.mxu0 0.0
        %615 = vmatpush1.msra.mxu0 0.0
        %616 = vmatprep.subr.mxu0 0.0
        %617 = vmatpush1.msra.mxu0 0.0
        %618 = vmatprep.subr.mxu0 0.0
        %619 = vmatpush1.msra.mxu0 0.0
        %620 = vmatprep.subr.mxu0 0.0
        %621 = vmatpush1.msra.mxu0 0.0
        %622 = vmatprep.subr.mxu0 0.0
        %623 = vmatpush1.msra.mxu0 0.0
        %624 = vmatprep.subr.mxu0 0.0
        %625 = vmatpush1.msra.mxu0 0.0
        %626 = vmatprep.subr.mxu0 0.0
        %627 = vmatpush1.msra.mxu0 0.0
        %628 = vmatprep.subr.mxu0 0.0
        %629 = vmatpush1.msra.mxu0 0.0
        %630 = vmatprep.subr.mxu0 0.0
        %631 = vmatpush1.msra.mxu0 0.0
        %632 = vmatprep.subr.mxu0 0.0
        %633 = vmatpush1.msra.mxu0 0.0
        %634 = vmatprep.subr.mxu0 0.0
        %635 = vmatpush1.msra.mxu0 0.0
        %636 = vmatprep.subr.mxu0 0.0
        %637 = vmatpush1.msra.mxu0 0.0
        %638 = vmatprep.subr.mxu0 0.0
        %639 = vmatpush1.msra.mxu0 0.0
        %640 = vmatprep.subr.mxu0 0.0
        %641 = vmatpush1.msra.mxu0 0.0
        %642 = vmatprep.subr.mxu0 0.0
        %643 = vmatpush1.msra.mxu0 0.0
        %644 = vmatprep.subr.mxu0 0.0
        %645 = vmatpush1.msra.mxu0 0.0
        %646 = vmatprep.subr.mxu0 0.0
        %647 = vmatpush1.msra.mxu0 0.0
        %648 = vmatprep.subr.mxu0 0.0
        %649 = vmatpush1.msra.mxu0 0.0
        %650 = vmatprep.subr.mxu0 0.0
        %651 = vmatpush1.msra.mxu0 0.0
        %652 = vmatprep.subr.mxu0 0.0
        %653 = vmatpush1.msra.mxu0 0.0
        %654 = vmatprep.subr.mxu0 0.0
        %655 = vmatpush1.msra.mxu0 0.0
        %656 = vmatprep.subr.mxu0 0.0
        %657 = vmatpush1.msra.mxu0 0.0
        %658 = vmatprep.subr.mxu0 0.0
        %659 = vmatpush1.msra.mxu0 0.0
        %660 = vmatprep.mubr.f32.mxu0 0.0
        %661 = vmatmul.mubr.f32.gmra.mrb[0].mxu0 %v591
        %v662 = vpop.f32.mrb[0].mxu0
        %v663 = vadd.f32 0.0, %v662
        %v664 = vpop.f32.mrb[0].mxu0
        %665 = vmatprep.mubr.f32.mxu0 0.0
        %666 = vmatmul.mubr.f32.gmra.mrb[0].mxu0 %v594
        %v667 = vpop.f32.mrb[0].mxu0
        %v668 = vadd.f32 0.0, %v667
        %v669 = vpop.f32.mrb[0].mxu0
        %670 = vdwg.mxu0
        %v672 = vsel %vm427, %v399, 0
        %v675 = vsel %vm427, %v400, 0
        %677 = vmatprep.subr.mxu0 0.0
        %678 = vmatpush1.msra.mxu0 %v309
        %679 = vmatprep.subr.mxu0 0.0
        %680 = vmatpush1.msra.mxu0 %v310
        %681 = vmatprep.subr.mxu0 0.0
        %682 = vmatpush1.msra.mxu0 0.0
        %683 = vmatprep.subr.mxu0 0.0
        %684 = vmatpush1.msra.mxu0 0.0
        %685 = vmatprep.subr.mxu0 0.0
        %686 = vmatpush1.msra.mxu0 0.0
        %687 = vmatprep.subr.mxu0 0.0
        %688 = vmatpush1.msra.mxu0 0.0
        %689 = vmatprep.subr.mxu0 0.0
        %690 = vmatpush1.msra.mxu0 0.0
        %691 = vmatprep.subr.mxu0 0.0
        %692 = vmatpush1.msra.mxu0 0.0
        %693 = vmatprep.subr.mxu0 0.0
        %694 = vmatpush1.msra.mxu0 0.0
        %695 = vmatprep.subr.mxu0 0.0
        %696 = vmatpush1.msra.mxu0 0.0
        %697 = vmatprep.subr.mxu0 0.0
        %698 = vmatpush1.msra.mxu0 0.0
        %699 = vmatprep.subr.mxu0 0.0
        %700 = vmatpush1.msra.mxu0 0.0
        %701 = vmatprep.subr.mxu0 0.0
        %702 = vmatpush1.msra.mxu0 0.0
        %703 = vmatprep.subr.mxu0 0.0
        %704 = vmatpush1.msra.mxu0 0.0
        %705 = vmatprep.subr.mxu0 0.0
        %706 = vmatpush1.msra.mxu0 0.0
        %707 = vmatprep.subr.mxu0 0.0
        %708 = vmatpush1.msra.mxu0 0.0
        %709 = vmatprep.subr.mxu0 0.0
        %710 = vmatpush1.msra.mxu0 0.0
        %711 = vmatprep.subr.mxu0 0.0
        %712 = vmatpush1.msra.mxu0 0.0
        %713 = vmatprep.subr.mxu0 0.0
        %714 = vmatpush1.msra.mxu0 0.0
        %715 = vmatprep.subr.mxu0 0.0
        %716 = vmatpush1.msra.mxu0 0.0
        %717 = vmatprep.subr.mxu0 0.0
        %718 = vmatpush1.msra.mxu0 0.0
        %719 = vmatprep.subr.mxu0 0.0
        %720 = vmatpush1.msra.mxu0 0.0
        %721 = vmatprep.subr.mxu0 0.0
        %722 = vmatpush1.msra.mxu0 0.0
        %723 = vmatprep.subr.mxu0 0.0
        %724 = vmatpush1.msra.mxu0 0.0
        %725 = vmatprep.subr.mxu0 0.0
        %726 = vmatpush1.msra.mxu0 0.0
        %727 = vmatprep.subr.mxu0 0.0
        %728 = vmatpush1.msra.mxu0 0.0
        %729 = vmatprep.subr.mxu0 0.0
        %730 = vmatpush1.msra.mxu0 0.0
        %731 = vmatprep.subr.mxu0 0.0
        %732 = vmatpush1.msra.mxu0 0.0
        %733 = vmatprep.subr.mxu0 0.0
        %734 = vmatpush1.msra.mxu0 0.0
        %735 = vmatprep.subr.mxu0 0.0
        %736 = vmatpush1.msra.mxu0 0.0
        %737 = vmatprep.subr.mxu0 0.0
        %738 = vmatpush1.msra.mxu0 0.0
        %739 = vmatprep.subr.mxu0 0.0
        %740 = vmatpush1.msra.mxu0 0.0
        %741 = vmatprep.mubr.f32.mxu0 0.0
        %742 = vmatmul.mubr.f32.gmra.mrb[0].mxu0 %v672
        %v743 = vpop.f32.mrb[0].mxu0
        %v744 = vadd.f32 %v663, %v743
        %v745 = vpop.f32.mrb[0].mxu0
        %746 = vmatprep.mubr.f32.mxu0 0.0
        %747 = vmatmul.mubr.f32.gmra.mrb[0].mxu0 %v675
        %v748 = vpop.f32.mrb[0].mxu0
        %v749 = vadd.f32 %v668, %v748
        %v750 = vpop.f32.mrb[0].mxu0
        %751 = vdwg.mxu0
        %v753 = vsel %vm427, %v319, 0
        %v756 = vsel %vm427, %v320, 0
        %v759 = vsel %vm427, %v321, 0
        %v762 = vsel %vm427, %v322, 0
        %764 = vmatprep.subr.mxu0 0.0
        %765 = vmatpush1.msra.mxu0 %v744
        %766 = vmatprep.subr.mxu0 0.0
        %767 = vmatpush1.msra.mxu0 %v749
        %768 = vmatprep.subr.mxu0 0.0
        %769 = vmatpush1.msra.mxu0 0.0
        %770 = vmatprep.subr.mxu0 0.0
        %771 = vmatpush1.msra.mxu0 0.0
        %772 = vmatprep.subr.mxu0 0.0
        %773 = vmatpush1.msra.mxu0 0.0
        %774 = vmatprep.subr.mxu0 0.0
        %775 = vmatpush1.msra.mxu0 0.0
        %776 = vmatprep.subr.mxu0 0.0
        %777 = vmatpush1.msra.mxu0 0.0
        %778 = vmatprep.subr.mxu0 0.0
        %779 = vmatpush1.msra.mxu0 0.0
        %780 = vmatprep.subr.mxu0 0.0
        %781 = vmatpush1.msra.mxu0 0.0
        %782 = vmatprep.subr.mxu0 0.0
        %783 = vmatpush1.msra.mxu0 0.0
        %784 = vmatprep.subr.mxu0 0.0
        %785 = vmatpush1.msra.mxu0 0.0
        %786 = vmatprep.subr.mxu0 0.0
        %787 = vmatpush1.msra.mxu0 0.0
        %788 = vmatprep.subr.mxu0 0.0
        %789 = vmatpush1.msra.mxu0 0.0
        %790 = vmatprep.subr.mxu0 0.0
        %791 = vmatpush1.msra.mxu0 0.0
        %792 = vmatprep.subr.mxu0 0.0
        %793 = vmatpush1.msra.mxu0 0.0
        %794 = vmatprep.subr.mxu0 0.0
        %795 = vmatpush1.msra.mxu0 0.0
        %796 = vmatprep.subr.mxu0 0.0
        %797 = vmatpush1.msra.mxu0 0.0
        %798 = vmatprep.subr.mxu0 0.0
        %799 = vmatpush1.msra.mxu0 0.0
        %800 = vmatprep.subr.mxu0 0.0
        %801 = vmatpush1.msra.mxu0 0.0
        %802 = vmatprep.subr.mxu0 0.0
        %803 = vmatpush1.msra.mxu0 0.0
        %804 = vmatprep.subr.mxu0 0.0
        %805 = vmatpush1.msra.mxu0 0.0
        %806 = vmatprep.subr.mxu0 0.0
        %807 = vmatpush1.msra.mxu0 0.0
        %808 = vmatprep.subr.mxu0 0.0
        %809 = vmatpush1.msra.mxu0 0.0
        %810 = vmatprep.subr.mxu0 0.0
        %811 = vmatpush1.msra.mxu0 0.0
        %812 = vmatprep.subr.mxu0 0.0
        %813 = vmatpush1.msra.mxu0 0.0
        %814 = vmatprep.subr.mxu0 0.0
        %815 = vmatpush1.msra.mxu0 0.0
        %816 = vmatprep.subr.mxu0 0.0
        %817 = vmatpush1.msra.mxu0 0.0
        %818 = vmatprep.subr.mxu0 0.0
        %819 = vmatpush1.msra.mxu0 0.0
        %820 = vmatprep.subr.mxu0 0.0
        %821 = vmatpush1.msra.mxu0 0.0
        %822 = vmatprep.subr.mxu0 0.0
        %823 = vmatpush1.msra.mxu0 0.0
        %824 = vmatprep.subr.mxu0 0.0
        %825 = vmatpush1.msra.mxu0 0.0
        %826 = vmatprep.subr.mxu0 0.0
        %827 = vmatpush1.msra.mxu0 0.0
        %828 = vmatprep.mubr.f32.mxu0 0.0
        %829 = vmatmul.mubr.f32.gmra.mrb[0].mxu0 %v753
        %v830 = vpop.f32.mrb[0].mxu0
        %v831 = vadd.f32 0.0, %v830
        %v832 = vpop.f32.mrb[0].mxu0
        %833 = vmatprep.mubr.f32.mxu0 0.0
        %834 = vmatmul.mubr.f32.gmra.mrb[0].mxu0 %v756
        %v835 = vpop.f32.mrb[0].mxu0
        %v836 = vadd.f32 0.0, %v835
        %v837 = vpop.f32.mrb[0].mxu0
        %838 = vmatprep.mubr.f32.mxu0 0.0
        %839 = vmatmul.mubr.f32.gmra.mrb[0].mxu0 %v759
        %v840 = vpop.f32.mrb[0].mxu0
        %v841 = vadd.f32 0.0, %v840
        %v842 = vpop.f32.mrb[0].mxu0
        %843 = vmatprep.mubr.f32.mxu0 0.0
        %844 = vmatmul.mubr.f32.gmra.mrb[0].mxu0 %v762
        %v845 = vpop.f32.mrb[0].mxu0
        %v846 = vadd.f32 0.0, %v845
        %v847 = vpop.f32.mrb[0].mxu0
        %848 = vdwg.mxu0
        %v850 = vsel %vm427, %v314, 0
        %v853 = vsel %vm427, %v315, 0
        %v856 = vsel %vm427, %v316, 0
        %v859 = vsel %vm427, %v317, 0
        %861 = vmatprep.subr.mxu0 0.0
        %862 = vmatpush1.msra.mxu0 %v582
        %863 = vmatprep.subr.mxu0 0.0
        %864 = vmatpush1.msra.mxu0 %v587
        %865 = vmatprep.subr.mxu0 0.0
        %866 = vmatpush1.msra.mxu0 0.0
        %867 = vmatprep.subr.mxu0 0.0
        %868 = vmatpush1.msra.mxu0 0.0
        %869 = vmatprep.subr.mxu0 0.0
        %870 = vmatpush1.msra.mxu0 0.0
        %871 = vmatprep.subr.mxu0 0.0
        %872 = vmatpush1.msra.mxu0 0.0
        %873 = vmatprep.subr.mxu0 0.0
        %874 = vmatpush1.msra.mxu0 0.0
        %875 = vmatprep.subr.mxu0 0.0
        %876 = vmatpush1.msra.mxu0 0.0
        %877 = vmatprep.subr.mxu0 0.0
        %878 = vmatpush1.msra.mxu0 0.0
        %879 = vmatprep.subr.mxu0 0.0
        %880 = vmatpush1.msra.mxu0 0.0
        %881 = vmatprep.subr.mxu0 0.0
        %882 = vmatpush1.msra.mxu0 0.0
        %883 = vmatprep.subr.mxu0 0.0
        %884 = vmatpush1.msra.mxu0 0.0
        %885 = vmatprep.subr.mxu0 0.0
        %886 = vmatpush1.msra.mxu0 0.0
        %887 = vmatprep.subr.mxu0 0.0
        %888 = vmatpush1.msra.mxu0 0.0
        %889 = vmatprep.subr.mxu0 0.0
        %890 = vmatpush1.msra.mxu0 0.0
        %891 = vmatprep.subr.mxu0 0.0
        %892 = vmatpush1.msra.mxu0 0.0
        %893 = vmatprep.subr.mxu0 0.0
        %894 = vmatpush1.msra.mxu0 0.0
        %895 = vmatprep.subr.mxu0 0.0
        %896 = vmatpush1.msra.mxu0 0.0
        %897 = vmatprep.subr.mxu0 0.0
        %898 = vmatpush1.msra.mxu0 0.0
        %899 = vmatprep.subr.mxu0 0.0
        %900 = vmatpush1.msra.mxu0 0.0
        %901 = vmatprep.subr.mxu0 0.0
        %902 = vmatpush1.msra.mxu0 0.0
        %903 = vmatprep.subr.mxu0 0.0
        %904 = vmatpush1.msra.mxu0 0.0
        %905 = vmatprep.subr.mxu0 0.0
        %906 = vmatpush1.msra.mxu0 0.0
        %907 = vmatprep.subr.mxu0 0.0
        %908 = vmatpush1.msra.mxu0 0.0
        %909 = vmatprep.subr.mxu0 0.0
        %910 = vmatpush1.msra.mxu0 0.0
        %911 = vmatprep.subr.mxu0 0.0
        %912 = vmatpush1.msra.mxu0 0.0
        %913 = vmatprep.subr.mxu0 0.0
        %914 = vmatpush1.msra.mxu0 0.0
        %915 = vmatprep.subr.mxu0 0.0
        %916 = vmatpush1.msra.mxu0 0.0
        %917 = vmatprep.subr.mxu0 0.0
        %918 = vmatpush1.msra.mxu0 0.0
        %919 = vmatprep.subr.mxu0 0.0
        %920 = vmatpush1.msra.mxu0 0.0
        %921 = vmatprep.subr.mxu0 0.0
        %922 = vmatpush1.msra.mxu0 0.0
        %923 = vmatprep.subr.mxu0 0.0
        %924 = vmatpush1.msra.mxu0 0.0
        %925 = vmatprep.mubr.f32.mxu0 0.0
        %926 = vmatmul.mubr.f32.gmra.mrb[0].mxu0 %v850
        %v927 = vpop.f32.mrb[0].mxu0
        %v928 = vadd.f32 %v831, %v927
        %v929 = vpop.f32.mrb[0].mxu0
        %930 = vmatprep.mubr.f32.mxu0 0.0
        %931 = vmatmul.mubr.f32.gmra.mrb[0].mxu0 %v853
        %v932 = vpop.f32.mrb[0].mxu0
        %v933 = vadd.f32 %v836, %v932
        %v934 = vpop.f32.mrb[0].mxu0
        %935 = vmatprep.mubr.f32.mxu0 0.0
        %936 = vmatmul.mubr.f32.gmra.mrb[0].mxu0 %v856
        %v937 = vpop.f32.mrb[0].mxu0
        %v938 = vadd.f32 %v841, %v937
        %v939 = vpop.f32.mrb[0].mxu0
        %940 = vmatprep.mubr.f32.mxu0 0.0
        %941 = vmatmul.mubr.f32.gmra.mrb[0].mxu0 %v859
        %v942 = vpop.f32.mrb[0].mxu0
        %v943 = vadd.f32 %v846, %v942
        %v944 = vpop.f32.mrb[0].mxu0
        %945 = vdwg.mxu0
        %vm946 = vcmask 261120
        %947 = vst.msk [vmem:[%s286] sm:$0xff] %vm946, %v928
        %948 = vst.msk [vmem:[%s286 + $0x8] sm:$0xff] %vm946, %v933
        %949 = vst.msk [vmem:[%s286 + $0x10] sm:$0xff] %vm946, %v938
        %950 = vst.msk [vmem:[%s286 + $0x18] sm:$0xff] %vm946, %v943
        %s951 = sld [smem:[#allocation2 + $0x200]]
        %v952 = vstv %s951
        %v953 = vmul.f32 %v952, %v298
        %v954 = vmul.f32 %v952, %v299
        %s955 = sld [smem:[#allocation2 + $0x201]]
        %v956 = vstv %s955
        %v957 = vmul.f32 %v956, %v301
        %v958 = vmul.f32 %v956, %v302
        %v959 = vadd.f32 %v953, %v957
        %v960 = vadd.f32 %v954, %v958
        %s961 = sld [smem:[#allocation2 + $0x202]]
        %v962 = vstv %s961
        %v963 = vmul.f32 %v962, %v304
        %v964 = vmul.f32 %v962, %v305
        %v965 = vadd.f32 %v959, %v963
        %v966 = vadd.f32 %v960, %v964
        %s967 = sld [smem:[#allocation2 + $0x203]]
        %v968 = vstv %s967
        %v969 = vmul.f32 %v968, %v307
        %v970 = vmul.f32 %v968, %v308
        %v971 = vadd.f32 %v965, %v969
        %v972 = vadd.f32 %v966, %v970
        %s973 = sld [smem:[#allocation6 + $0x4]]
        %v974 = vstv %s973
        %v975 = vadd.f32 %v971, %v974
        %v976 = vadd.f32 %v972, %v974
        %s977 = sld [smem:[#allocation2 + $0x280]]
        %v978 = vstv %s977
        %v979 = vmul.f32 %v978, %v298
        %v980 = vmul.f32 %v978, %v299
        %s981 = sld [smem:[#allocation2 + $0x281]]
        %v982 = vstv %s981
        %v983 = vmul.f32 %v982, %v301
        %v984 = vmul.f32 %v982, %v302
        %v985 = vadd.f32 %v979, %v983
        %v986 = vadd.f32 %v980, %v984
        %s987 = sld [smem:[#allocation2 + $0x282]]
        %v988 = vstv %s987
        %v989 = vmul.f32 %v988, %v304
        %v990 = vmul.f32 %v988, %v305
        %v991 = vadd.f32 %v985, %v989
        %v992 = vadd.f32 %v986, %v990
        %s993 = sld [smem:[#allocation2 + $0x283]]
        %v994 = vstv %s993
        %v995 = vmul.f32 %v994, %v307
        %v996 = vmul.f32 %v994, %v308
        %v997 = vadd.f32 %v991, %v995
        %v998 = vadd.f32 %v992, %v996
        %s999 = sld [smem:[#allocation6 + $0x5]]
        %v1000 = vstv %s999
        %v1001 = vadd.f32 %v997, %v1000
        %v1002 = vadd.f32 %v998, %v1000
        %s1003 = sld [smem:[#allocation2 + $0x300]]
        %v1004 = vstv %s1003
        %v1005 = vmul.f32 %v1004, %v298
        %v1006 = vmul.f32 %v1004, %v299
        %s1007 = sld [smem:[#allocation2 + $0x301]]
        %v1008 = vstv %s1007
        %v1009 = vmul.f32 %v1008, %v301
        %v1010 = vmul.f32 %v1008, %v302
        %v1011 = vadd.f32 %v1005, %v1009
        %v1012 = vadd.f32 %v1006, %v1010
        %s1013 = sld [smem:[#allocation2 + $0x302]]
        %v1014 = vstv %s1013
        %v1015 = vmul.f32 %v1014, %v304
        %v1016 = vmul.f32 %v1014, %v305
        %v1017 = vadd.f32 %v1011, %v1015
        %v1018 = vadd.f32 %v1012, %v1016
        %s1019 = sld [smem:[#allocation2 + $0x303]]
        %v1020 = vstv %s1019
        %v1021 = vmul.f32 %v1020, %v307
        %v1022 = vmul.f32 %v1020, %v308
        %v1023 = vadd.f32 %v1017, %v1021
        %v1024 = vadd.f32 %v1018, %v1022
        %s1025 = sld [smem:[#allocation6 + $0x6]]
        %v1026 = vstv %s1025
        %v1027 = vadd.f32 %v1023, %v1026
        %v1028 = vadd.f32 %v1024, %v1026
        %s1029 = sld [smem:[#allocation2 + $0x380]]
        %v1030 = vstv %s1029
        %v1031 = vmul.f32 %v1030, %v298
        %v1032 = vmul.f32 %v1030, %v299
        %s1033 = sld [smem:[#allocation2 + $0x381]]
        %v1034 = vstv %s1033
        %v1035 = vmul.f32 %v1034, %v301
        %v1036 = vmul.f32 %v1034, %v302
        %v1037 = vadd.f32 %v1031, %v1035
        %v1038 = vadd.f32 %v1032, %v1036
        %s1039 = sld [smem:[#allocation2 + $0x382]]
        %v1040 = vstv %s1039
        %v1041 = vmul.f32 %v1040, %v304
        %v1042 = vmul.f32 %v1040, %v305
        %v1043 = vadd.f32 %v1037, %v1041
        %v1044 = vadd.f32 %v1038, %v1042
        %s1045 = sld [smem:[#allocation2 + $0x383]]
        %v1046 = vstv %s1045
        %v1047 = vmul.f32 %v1046, %v307
        %v1048 = vmul.f32 %v1046, %v308
        %v1049 = vadd.f32 %v1043, %v1047
        %v1050 = vadd.f32 %v1044, %v1048
        %s1051 = sld [smem:[#allocation6 + $0x7]]
        %v1052 = vstv %s1051
        %v1053 = vadd.f32 %v1049, %v1052
        %v1054 = vadd.f32 %v1050, %v1052
        %v1056 = vsel %vm427, %v1001, 0
        %v1059 = vsel %vm427, %v1002, 0
        %1061 = vmatprep.subr.mxu0 0.0
        %1062 = vmatpush1.msra.mxu0 %v312
        %1063 = vmatprep.subr.mxu0 0.0
        %1064 = vmatpush1.msra.mxu0 %v313
        %1065 = vmatprep.subr.mxu0 0.0
        %1066 = vmatpush1.msra.mxu0 0.0
        %1067 = vmatprep.subr.mxu0 0.0
        %1068 = vmatpush1.msra.mxu0 0.0
        %1069 = vmatprep.subr.mxu0 0.0
        %1070 = vmatpush1.msra.mxu0 0.0
        %1071 = vmatprep.subr.mxu0 0.0
        %1072 = vmatpush1.msra.mxu0 0.0
        %1073 = vmatprep.subr.mxu0 0.0
        %1074 = vmatpush1.msra.mxu0 0.0
        %1075 = vmatprep.subr.mxu0 0.0
        %1076 = vmatpush1.msra.mxu0 0.0
        %1077 = vmatprep.subr.mxu0 0.0
        %1078 = vmatpush1.msra.mxu0 0.0
        %1079 = vmatprep.subr.mxu0 0.0
        %1080 = vmatpush1.msra.mxu0 0.0
        %1081 = vmatprep.subr.mxu0 0.0
        %1082 = vmatpush1.msra.mxu0 0.0
        %1083 = vmatprep.subr.mxu0 0.0
        %1084 = vmatpush1.msra.mxu0 0.0
        %1085 = vmatprep.subr.mxu0 0.0
        %1086 = vmatpush1.msra.mxu0 0.0
        %1087 = vmatprep.subr.mxu0 0.0
        %1088 = vmatpush1.msra.mxu0 0.0
        %1089 = vmatprep.subr.mxu0 0.0
        %1090 = vmatpush1.msra.mxu0 0.0
        %1091 = vmatprep.subr.mxu0 0.0
        %1092 = vmatpush1.msra.mxu0 0.0
        %1093 = vmatprep.subr.mxu0 0.0
        %1094 = vmatpush1.msra.mxu0 0.0
        %1095 = vmatprep.subr.mxu0 0.0
        %1096 = vmatpush1.msra.mxu0 0.0
        %1097 = vmatprep.subr.mxu0 0.0
        %1098 = vmatpush1.msra.mxu0 0.0
        %1099 = vmatprep.subr.mxu0 0.0
        %1100 = vmatpush1.msra.mxu0 0.0
        %1101 = vmatprep.subr.mxu0 0.0
        %1102 = vmatpush1.msra.mxu0 0.0
        %1103 = vmatprep.subr.mxu0 0.0
        %1104 = vmatpush1.msra.mxu0 0.0
        %1105 = vmatprep.subr.mxu0 0.0
        %1106 = vmatpush1.msra.mxu0 0.0
        %1107 = vmatprep.subr.mxu0 0.0
        %1108 = vmatpush1.msra.mxu0 0.0
        %1109 = vmatprep.subr.mxu0 0.0
        %1110 = vmatpush1.msra.mxu0 0.0
        %1111 = vmatprep.subr.mxu0 0.0
        %1112 = vmatpush1.msra.mxu0 0.0
        %1113 = vmatprep.subr.mxu0 0.0
        %1114 = vmatpush1.msra.mxu0 0.0
        %1115 = vmatprep.subr.mxu0 0.0
        %1116 = vmatpush1.msra.mxu0 0.0
        %1117 = vmatprep.subr.mxu0 0.0
        %1118 = vmatpush1.msra.mxu0 0.0
        %1119 = vmatprep.subr.mxu0 0.0
        %1120 = vmatpush1.msra.mxu0 0.0
        %1121 = vmatprep.subr.mxu0 0.0
        %1122 = vmatpush1.msra.mxu0 0.0
        %1123 = vmatprep.subr.mxu0 0.0
        %1124 = vmatpush1.msra.mxu0 0.0
        %1125 = vmatprep.mubr.f32.mxu0 0.0
        %1126 = vmatmul.mubr.f32.gmra.mrb[0].mxu0 %v1056
        %v1127 = vpop.f32.mrb[0].mxu0
        %v1128 = vadd.f32 0.0, %v1127
        %v1129 = vpop.f32.mrb[0].mxu0
        %1130 = vmatprep.mubr.f32.mxu0 0.0
        %1131 = vmatmul.mubr.f32.gmra.mrb[0].mxu0 %v1059
        %v1132 = vpop.f32.mrb[0].mxu0
        %v1133 = vadd.f32 0.0, %v1132
        %v1134 = vpop.f32.mrb[0].mxu0
        %1135 = vdwg.mxu0
        %v1137 = vsel %vm427, %v975, 0
        %v1140 = vsel %vm427, %v976, 0
        %1142 = vmatprep.subr.mxu0 0.0
        %1143 = vmatpush1.msra.mxu0 %v309
        %1144 = vmatprep.subr.mxu0 0.0
        %1145 = vmatpush1.msra.mxu0 %v310
        %1146 = vmatprep.subr.mxu0 0.0
        %1147 = vmatpush1.msra.mxu0 0.0
        %1148 = vmatprep.subr.mxu0 0.0
        %1149 = vmatpush1.msra.mxu0 0.0
        %1150 = vmatprep.subr.mxu0 0.0
        %1151 = vmatpush1.msra.mxu0 0.0
        %1152 = vmatprep.subr.mxu0 0.0
        %1153 = vmatpush1.msra.mxu0 0.0
        %1154 = vmatprep.subr.mxu0 0.0
        %1155 = vmatpush1.msra.mxu0 0.0
        %1156 = vmatprep.subr.mxu0 0.0
        %1157 = vmatpush1.msra.mxu0 0.0
        %1158 = vmatprep.subr.mxu0 0.0
        %1159 = vmatpush1.msra.mxu0 0.0
        %1160 = vmatprep.subr.mxu0 0.0
        %1161 = vmatpush1.msra.mxu0 0.0
        %1162 = vmatprep.subr.mxu0 0.0
        %1163 = vmatpush1.msra.mxu0 0.0
        %1164 = vmatprep.subr.mxu0 0.0
        %1165 = vmatpush1.msra.mxu0 0.0
        %1166 = vmatprep.subr.mxu0 0.0
        %1167 = vmatpush1.msra.mxu0 0.0
        %1168 = vmatprep.subr.mxu0 0.0
        %1169 = vmatpush1.msra.mxu0 0.0
        %1170 = vmatprep.subr.mxu0 0.0
        %1171 = vmatpush1.msra.mxu0 0.0
        %1172 = vmatprep.subr.mxu0 0.0
        %1173 = vmatpush1.msra.mxu0 0.0
        %1174 = vmatprep.subr.mxu0 0.0
        %1175 = vmatpush1.msra.mxu0 0.0
        %1176 = vmatprep.subr.mxu0 0.0
        %1177 = vmatpush1.msra.mxu0 0.0
        %1178 = vmatprep.subr.mxu0 0.0
        %1179 = vmatpush1.msra.mxu0 0.0
        %1180 = vmatprep.subr.mxu0 0.0
        %1181 = vmatpush1.msra.mxu0 0.0
        %1182 = vmatprep.subr.mxu0 0.0
        %1183 = vmatpush1.msra.mxu0 0.0
        %1184 = vmatprep.subr.mxu0 0.0
        %1185 = vmatpush1.msra.mxu0 0.0
        %1186 = vmatprep.subr.mxu0 0.0
        %1187 = vmatpush1.msra.mxu0 0.0
        %1188 = vmatprep.subr.mxu0 0.0
        %1189 = vmatpush1.msra.mxu0 0.0
        %1190 = vmatprep.subr.mxu0 0.0
        %1191 = vmatpush1.msra.mxu0 0.0
        %1192 = vmatprep.subr.mxu0 0.0
        %1193 = vmatpush1.msra.mxu0 0.0
        %1194 = vmatprep.subr.mxu0 0.0
        %1195 = vmatpush1.msra.mxu0 0.0
        %1196 = vmatprep.subr.mxu0 0.0
        %1197 = vmatpush1.msra.mxu0 0.0
        %1198 = vmatprep.subr.mxu0 0.0
        %1199 = vmatpush1.msra.mxu0 0.0
        %1200 = vmatprep.subr.mxu0 0.0
        %1201 = vmatpush1.msra.mxu0 0.0
        %1202 = vmatprep.subr.mxu0 0.0
        %1203 = vmatpush1.msra.mxu0 0.0
        %1204 = vmatprep.subr.mxu0 0.0
        %1205 = vmatpush1.msra.mxu0 0.0
        %1206 = vmatprep.mubr.f32.mxu0 0.0
        %1207 = vmatmul.mubr.f32.gmra.mrb[0].mxu0 %v1137
        %v1208 = vpop.f32.mrb[0].mxu0
        %v1209 = vadd.f32 %v1128, %v1208
        %v1210 = vpop.f32.mrb[0].mxu0
        %1211 = vmatprep.mubr.f32.mxu0 0.0
        %1212 = vmatmul.mubr.f32.gmra.mrb[0].mxu0 %v1140
        %v1213 = vpop.f32.mrb[0].mxu0
        %v1214 = vadd.f32 %v1133, %v1213
        %v1215 = vpop.f32.mrb[0].mxu0
        %1216 = vdwg.mxu0
        %v1218 = vsel %vm427, %v1053, 0
        %v1221 = vsel %vm427, %v1054, 0
        %1223 = vmatprep.subr.mxu0 0.0
        %1224 = vmatpush1.msra.mxu0 %v312
        %1225 = vmatprep.subr.mxu0 0.0
        %1226 = vmatpush1.msra.mxu0 %v313
        %1227 = vmatprep.subr.mxu0 0.0
        %1228 = vmatpush1.msra.mxu0 0.0
        %1229 = vmatprep.subr.mxu0 0.0
        %1230 = vmatpush1.msra.mxu0 0.0
        %1231 = vmatprep.subr.mxu0 0.0
        %1232 = vmatpush1.msra.mxu0 0.0
        %1233 = vmatprep.subr.mxu0 0.0
        %1234 = vmatpush1.msra.mxu0 0.0
        %1235 = vmatprep.subr.mxu0 0.0
        %1236 = vmatpush1.msra.mxu0 0.0
        %1237 = vmatprep.subr.mxu0 0.0
        %1238 = vmatpush1.msra.mxu0 0.0
        %1239 = vmatprep.subr.mxu0 0.0
        %1240 = vmatpush1.msra.mxu0 0.0
        %1241 = vmatprep.subr.mxu0 0.0
        %1242 = vmatpush1.msra.mxu0 0.0
        %1243 = vmatprep.subr.mxu0 0.0
        %1244 = vmatpush1.msra.mxu0 0.0
        %1245 = vmatprep.subr.mxu0 0.0
        %1246 = vmatpush1.msra.mxu0 0.0
        %1247 = vmatprep.subr.mxu0 0.0
        %1248 = vmatpush1.msra.mxu0 0.0
        %1249 = vmatprep.subr.mxu0 0.0
        %1250 = vmatpush1.msra.mxu0 0.0
        %1251 = vmatprep.subr.mxu0 0.0
        %1252 = vmatpush1.msra.mxu0 0.0
        %1253 = vmatprep.subr.mxu0 0.0
        %1254 = vmatpush1.msra.mxu0 0.0
        %1255 = vmatprep.subr.mxu0 0.0
        %1256 = vmatpush1.msra.mxu0 0.0
        %1257 = vmatprep.subr.mxu0 0.0
        %1258 = vmatpush1.msra.mxu0 0.0
        %1259 = vmatprep.subr.mxu0 0.0
        %1260 = vmatpush1.msra.mxu0 0.0
        %1261 = vmatprep.subr.mxu0 0.0
        %1262 = vmatpush1.msra.mxu0 0.0
        %1263 = vmatprep.subr.mxu0 0.0
        %1264 = vmatpush1.msra.mxu0 0.0
        %1265 = vmatprep.subr.mxu0 0.0
        %1266 = vmatpush1.msra.mxu0 0.0
        %1267 = vmatprep.subr.mxu0 0.0
        %1268 = vmatpush1.msra.mxu0 0.0
        %1269 = vmatprep.subr.mxu0 0.0
        %1270 = vmatpush1.msra.mxu0 0.0
        %1271 = vmatprep.subr.mxu0 0.0
        %1272 = vmatpush1.msra.mxu0 0.0
        %1273 = vmatprep.subr.mxu0 0.0
        %1274 = vmatpush1.msra.mxu0 0.0
        %1275 = vmatprep.subr.mxu0 0.0
        %1276 = vmatpush1.msra.mxu0 0.0
        %1277 = vmatprep.subr.mxu0 0.0
        %1278 = vmatpush1.msra.mxu0 0.0
        %1279 = vmatprep.subr.mxu0 0.0
        %1280 = vmatpush1.msra.mxu0 0.0
        %1281 = vmatprep.subr.mxu0 0.0
        %1282 = vmatpush1.msra.mxu0 0.0
        %1283 = vmatprep.subr.mxu0 0.0
        %1284 = vmatpush1.msra.mxu0 0.0
        %1285 = vmatprep.subr.mxu0 0.0
        %1286 = vmatpush1.msra.mxu0 0.0
        %1287 = vmatprep.mubr.f32.mxu0 0.0
        %1288 = vmatmul.mubr.f32.gmra.mrb[0].mxu0 %v1218
        %v1289 = vpop.f32.mrb[0].mxu0
        %v1290 = vadd.f32 0.0, %v1289
        %v1291 = vpop.f32.mrb[0].mxu0
        %1292 = vmatprep.mubr.f32.mxu0 0.0
        %1293 = vmatmul.mubr.f32.gmra.mrb[0].mxu0 %v1221
        %v1294 = vpop.f32.mrb[0].mxu0
        %v1295 = vadd.f32 0.0, %v1294
        %v1296 = vpop.f32.mrb[0].mxu0
        %1297 = vdwg.mxu0
        %v1299 = vsel %vm427, %v1027, 0
        %v1302 = vsel %vm427, %v1028, 0
        %1304 = vmatprep.subr.mxu0 0.0
        %1305 = vmatpush1.msra.mxu0 %v309
        %1306 = vmatprep.subr.mxu0 0.0
        %1307 = vmatpush1.msra.mxu0 %v310
        %1308 = vmatprep.subr.mxu0 0.0
        %1309 = vmatpush1.msra.mxu0 0.0
        %1310 = vmatprep.subr.mxu0 0.0
        %1311 = vmatpush1.msra.mxu0 0.0
        %1312 = vmatprep.subr.mxu0 0.0
        %1313 = vmatpush1.msra.mxu0 0.0
        %1314 = vmatprep.subr.mxu0 0.0
        %1315 = vmatpush1.msra.mxu0 0.0
        %1316 = vmatprep.subr.mxu0 0.0
        %1317 = vmatpush1.msra.mxu0 0.0
        %1318 = vmatprep.subr.mxu0 0.0
        %1319 = vmatpush1.msra.mxu0 0.0
        %1320 = vmatprep.subr.mxu0 0.0
        %1321 = vmatpush1.msra.mxu0 0.0
        %1322 = vmatprep.subr.mxu0 0.0
        %1323 = vmatpush1.msra.mxu0 0.0
        %1324 = vmatprep.subr.mxu0 0.0
        %1325 = vmatpush1.msra.mxu0 0.0
        %1326 = vmatprep.subr.mxu0 0.0
        %1327 = vmatpush1.msra.mxu0 0.0
        %1328 = vmatprep.subr.mxu0 0.0
        %1329 = vmatpush1.msra.mxu0 0.0
        %1330 = vmatprep.subr.mxu0 0.0
        %1331 = vmatpush1.msra.mxu0 0.0
        %1332 = vmatprep.subr.mxu0 0.0
        %1333 = vmatpush1.msra.mxu0 0.0
        %1334 = vmatprep.subr.mxu0 0.0
        %1335 = vmatpush1.msra.mxu0 0.0
        %1336 = vmatprep.subr.mxu0 0.0
        %1337 = vmatpush1.msra.mxu0 0.0
        %1338 = vmatprep.subr.mxu0 0.0
        %1339 = vmatpush1.msra.mxu0 0.0
        %1340 = vmatprep.subr.mxu0 0.0
        %1341 = vmatpush1.msra.mxu0 0.0
        %1342 = vmatprep.subr.mxu0 0.0
        %1343 = vmatpush1.msra.mxu0 0.0
        %1344 = vmatprep.subr.mxu0 0.0
        %1345 = vmatpush1.msra.mxu0 0.0
        %1346 = vmatprep.subr.mxu0 0.0
        %1347 = vmatpush1.msra.mxu0 0.0
        %1348 = vmatprep.subr.mxu0 0.0
        %1349 = vmatpush1.msra.mxu0 0.0
        %1350 = vmatprep.subr.mxu0 0.0
        %1351 = vmatpush1.msra.mxu0 0.0
        %1352 = vmatprep.subr.mxu0 0.0
        %1353 = vmatpush1.msra.mxu0 0.0
        %1354 = vmatprep.subr.mxu0 0.0
        %1355 = vmatpush1.msra.mxu0 0.0
        %1356 = vmatprep.subr.mxu0 0.0
        %1357 = vmatpush1.msra.mxu0 0.0
        %1358 = vmatprep.subr.mxu0 0.0
        %1359 = vmatpush1.msra.mxu0 0.0
        %1360 = vmatprep.subr.mxu0 0.0
        %1361 = vmatpush1.msra.mxu0 0.0
        %1362 = vmatprep.subr.mxu0 0.0
        %1363 = vmatpush1.msra.mxu0 0.0
        %1364 = vmatprep.subr.mxu0 0.0
        %1365 = vmatpush1.msra.mxu0 0.0
        %1366 = vmatprep.subr.mxu0 0.0
        %1367 = vmatpush1.msra.mxu0 0.0
        %1368 = vmatprep.mubr.f32.mxu0 0.0
        %1369 = vmatmul.mubr.f32.gmra.mrb[0].mxu0 %v1299
        %v1370 = vpop.f32.mrb[0].mxu0
        %v1371 = vadd.f32 %v1290, %v1370
        %v1372 = vpop.f32.mrb[0].mxu0
        %1373 = vmatprep.mubr.f32.mxu0 0.0
        %1374 = vmatmul.mubr.f32.gmra.mrb[0].mxu0 %v1302
        %v1375 = vpop.f32.mrb[0].mxu0
        %v1376 = vadd.f32 %v1295, %v1375
        %v1377 = vpop.f32.mrb[0].mxu0
        %1378 = vdwg.mxu0
        %1379 = vmatprep.subr.mxu0 0.0
        %1380 = vmatpush1.msra.mxu0 %v1371
        %1381 = vmatprep.subr.mxu0 0.0
        %1382 = vmatpush1.msra.mxu0 %v1376
        %1383 = vmatprep.subr.mxu0 0.0
        %1384 = vmatpush1.msra.mxu0 0.0
        %1385 = vmatprep.subr.mxu0 0.0
        %1386 = vmatpush1.msra.mxu0 0.0
        %1387 = vmatprep.subr.mxu0 0.0
        %1388 = vmatpush1.msra.mxu0 0.0
        %1389 = vmatprep.subr.mxu0 0.0
        %1390 = vmatpush1.msra.mxu0 0.0
        %1391 = vmatprep.subr.mxu0 0.0
        %1392 = vmatpush1.msra.mxu0 0.0
        %1393 = vmatprep.subr.mxu0 0.0
        %1394 = vmatpush1.msra.mxu0 0.0
        %1395 = vmatprep.subr.mxu0 0.0
        %1396 = vmatpush1.msra.mxu0 0.0
        %1397 = vmatprep.subr.mxu0 0.0
        %1398 = vmatpush1.msra.mxu0 0.0
        %1399 = vmatprep.subr.mxu0 0.0
        %1400 = vmatpush1.msra.mxu0 0.0
        %1401 = vmatprep.subr.mxu0 0.0
        %1402 = vmatpush1.msra.mxu0 0.0
        %1403 = vmatprep.subr.mxu0 0.0
        %1404 = vmatpush1.msra.mxu0 0.0
        %1405 = vmatprep.subr.mxu0 0.0
        %1406 = vmatpush1.msra.mxu0 0.0
        %1407 = vmatprep.subr.mxu0 0.0
        %1408 = vmatpush1.msra.mxu0 0.0
        %1409 = vmatprep.subr.mxu0 0.0
        %1410 = vmatpush1.msra.mxu0 0.0
        %1411 = vmatprep.subr.mxu0 0.0
        %1412 = vmatpush1.msra.mxu0 0.0
        %1413 = vmatprep.subr.mxu0 0.0
        %1414 = vmatpush1.msra.mxu0 0.0
        %1415 = vmatprep.subr.mxu0 0.0
        %1416 = vmatpush1.msra.mxu0 0.0
        %1417 = vmatprep.subr.mxu0 0.0
        %1418 = vmatpush1.msra.mxu0 0.0
        %1419 = vmatprep.subr.mxu0 0.0
        %1420 = vmatpush1.msra.mxu0 0.0
        %1421 = vmatprep.subr.mxu0 0.0
        %1422 = vmatpush1.msra.mxu0 0.0
        %1423 = vmatprep.subr.mxu0 0.0
        %1424 = vmatpush1.msra.mxu0 0.0
        %1425 = vmatprep.subr.mxu0 0.0
        %1426 = vmatpush1.msra.mxu0 0.0
        %1427 = vmatprep.subr.mxu0 0.0
        %1428 = vmatpush1.msra.mxu0 0.0
        %1429 = vmatprep.subr.mxu0 0.0
        %1430 = vmatpush1.msra.mxu0 0.0
        %1431 = vmatprep.subr.mxu0 0.0
        %1432 = vmatpush1.msra.mxu0 0.0
        %1433 = vmatprep.subr.mxu0 0.0
        %1434 = vmatpush1.msra.mxu0 0.0
        %1435 = vmatprep.subr.mxu0 0.0
        %1436 = vmatpush1.msra.mxu0 0.0
        %1437 = vmatprep.subr.mxu0 0.0
        %1438 = vmatpush1.msra.mxu0 0.0
        %1439 = vmatprep.subr.mxu0 0.0
        %1440 = vmatpush1.msra.mxu0 0.0
        %1441 = vmatprep.subr.mxu0 0.0
        %1442 = vmatpush1.msra.mxu0 0.0
        %1443 = vmatprep.mubr.f32.mxu0 0.0
        %1444 = vmatmul.mubr.f32.gmra.mrb[0].mxu0 %v753
        %v1445 = vpop.f32.mrb[0].mxu0
        %v1446 = vadd.f32 0.0, %v1445
        %v1447 = vpop.f32.mrb[0].mxu0
        %1448 = vmatprep.mubr.f32.mxu0 0.0
        %1449 = vmatmul.mubr.f32.gmra.mrb[0].mxu0 %v756
        %v1450 = vpop.f32.mrb[0].mxu0
        %v1451 = vadd.f32 0.0, %v1450
        %v1452 = vpop.f32.mrb[0].mxu0
        %1453 = vmatprep.mubr.f32.mxu0 0.0
        %1454 = vmatmul.mubr.f32.gmra.mrb[0].mxu0 %v759
        %v1455 = vpop.f32.mrb[0].mxu0
        %v1456 = vadd.f32 0.0, %v1455
        %v1457 = vpop.f32.mrb[0].mxu0
        %1458 = vmatprep.mubr.f32.mxu0 0.0
        %1459 = vmatmul.mubr.f32.gmra.mrb[0].mxu0 %v762
        %v1460 = vpop.f32.mrb[0].mxu0
        %v1461 = vadd.f32 0.0, %v1460
        %v1462 = vpop.f32.mrb[0].mxu0
        %1463 = vdwg.mxu0
        %1464 = vmatprep.subr.mxu0 0.0
        %1465 = vmatpush1.msra.mxu0 %v1209
        %1466 = vmatprep.subr.mxu0 0.0
        %1467 = vmatpush1.msra.mxu0 %v1214
        %1468 = vmatprep.subr.mxu0 0.0
        %1469 = vmatpush1.msra.mxu0 0.0
        %1470 = vmatprep.subr.mxu0 0.0
        %1471 = vmatpush1.msra.mxu0 0.0
        %1472 = vmatprep.subr.mxu0 0.0
        %1473 = vmatpush1.msra.mxu0 0.0
        %1474 = vmatprep.subr.mxu0 0.0
        %1475 = vmatpush1.msra.mxu0 0.0
        %1476 = vmatprep.subr.mxu0 0.0
        %1477 = vmatpush1.msra.mxu0 0.0
        %1478 = vmatprep.subr.mxu0 0.0
        %1479 = vmatpush1.msra.mxu0 0.0
        %1480 = vmatprep.subr.mxu0 0.0
        %1481 = vmatpush1.msra.mxu0 0.0
        %1482 = vmatprep.subr.mxu0 0.0
        %1483 = vmatpush1.msra.mxu0 0.0
        %1484 = vmatprep.subr.mxu0 0.0
        %1485 = vmatpush1.msra.mxu0 0.0
        %1486 = vmatprep.subr.mxu0 0.0
        %1487 = vmatpush1.msra.mxu0 0.0
        %1488 = vmatprep.subr.mxu0 0.0
        %1489 = vmatpush1.msra.mxu0 0.0
        %1490 = vmatprep.subr.mxu0 0.0
        %1491 = vmatpush1.msra.mxu0 0.0
        %1492 = vmatprep.subr.mxu0 0.0
        %1493 = vmatpush1.msra.mxu0 0.0
        %1494 = vmatprep.subr.mxu0 0.0
        %1495 = vmatpush1.msra.mxu0 0.0
        %1496 = vmatprep.subr.mxu0 0.0
        %1497 = vmatpush1.msra.mxu0 0.0
        %1498 = vmatprep.subr.mxu0 0.0
        %1499 = vmatpush1.msra.mxu0 0.0
        %1500 = vmatprep.subr.mxu0 0.0
        %1501 = vmatpush1.msra.mxu0 0.0
        %1502 = vmatprep.subr.mxu0 0.0
        %1503 = vmatpush1.msra.mxu0 0.0
        %1504 = vmatprep.subr.mxu0 0.0
        %1505 = vmatpush1.msra.mxu0 0.0
        %1506 = vmatprep.subr.mxu0 0.0
        %1507 = vmatpush1.msra.mxu0 0.0
        %1508 = vmatprep.subr.mxu0 0.0
        %1509 = vmatpush1.msra.mxu0 0.0
        %1510 = vmatprep.subr.mxu0 0.0
        %1511 = vmatpush1.msra.mxu0 0.0
        %1512 = vmatprep.subr.mxu0 0.0
        %1513 = vmatpush1.msra.mxu0 0.0
        %1514 = vmatprep.subr.mxu0 0.0
        %1515 = vmatpush1.msra.mxu0 0.0
        %1516 = vmatprep.subr.mxu0 0.0
        %1517 = vmatpush1.msra.mxu0 0.0
        %1518 = vmatprep.subr.mxu0 0.0
        %1519 = vmatpush1.msra.mxu0 0.0
        %1520 = vmatprep.subr.mxu0 0.0
        %1521 = vmatpush1.msra.mxu0 0.0
        %1522 = vmatprep.subr.mxu0 0.0
        %1523 = vmatpush1.msra.mxu0 0.0
        %1524 = vmatprep.subr.mxu0 0.0
        %1525 = vmatpush1.msra.mxu0 0.0
        %1526 = vmatprep.subr.mxu0 0.0
        %1527 = vmatpush1.msra.mxu0 0.0
        %1528 = vmatprep.mubr.f32.mxu0 0.0
        %1529 = vmatmul.mubr.f32.gmra.mrb[0].mxu0 %v850
        %v1530 = vpop.f32.mrb[0].mxu0
        %v1531 = vadd.f32 %v1446, %v1530
        %v1532 = vpop.f32.mrb[0].mxu0
        %1533 = vmatprep.mubr.f32.mxu0 0.0
        %1534 = vmatmul.mubr.f32.gmra.mrb[0].mxu0 %v853
        %v1535 = vpop.f32.mrb[0].mxu0
        %v1536 = vadd.f32 %v1451, %v1535
        %v1537 = vpop.f32.mrb[0].mxu0
        %1538 = vmatprep.mubr.f32.mxu0 0.0
        %1539 = vmatmul.mubr.f32.gmra.mrb[0].mxu0 %v856
        %v1540 = vpop.f32.mrb[0].mxu0
        %v1541 = vadd.f32 %v1456, %v1540
        %v1542 = vpop.f32.mrb[0].mxu0
        %1543 = vmatprep.mubr.f32.mxu0 0.0
        %1544 = vmatmul.mubr.f32.gmra.mrb[0].mxu0 %v859
        %v1545 = vpop.f32.mrb[0].mxu0
        %v1546 = vadd.f32 %v1461, %v1545
        %v1547 = vpop.f32.mrb[0].mxu0
        %1548 = vdwg.mxu0
        %s1549 = scalar_lea.vmem %s286, 32 [#allocation9]
        %1550 = vst.msk [vmem:[%s1549] sm:$0xff] %vm946, %v1531
        %1551 = vst.msk [vmem:[%s1549 + $0x8] sm:$0xff] %vm946, %v1536
        %1552 = vst.msk [vmem:[%s1549 + $0x10] sm:$0xff] %vm946, %v1541
        %1553 = vst.msk [vmem:[%s1549 + $0x18] sm:$0xff] %vm946, %v1546
        %s1554 = sld [smem:[#allocation2 + $0x400]]
        %v1555 = vstv %s1554
        %v1556 = vmul.f32 %v1555, %v298
        %v1557 = vmul.f32 %v1555, %v299
        %s1558 = sld [smem:[#allocation2 + $0x401]]
        %v1559 = vstv %s1558
        %v1560 = vmul.f32 %v1559, %v301
        %v1561 = vmul.f32 %v1559, %v302
        %v1562 = vadd.f32 %v1556, %v1560
        %v1563 = vadd.f32 %v1557, %v1561
        %s1564 = sld [smem:[#allocation2 + $0x402]]
        %v1565 = vstv %s1564
        %v1566 = vmul.f32 %v1565, %v304
        %v1567 = vmul.f32 %v1565, %v305
        %v1568 = vadd.f32 %v1562, %v1566
        %v1569 = vadd.f32 %v1563, %v1567
        %s1570 = sld [smem:[#allocation2 + $0x403]]
        %v1571 = vstv %s1570
        %v1572 = vmul.f32 %v1571, %v307
        %v1573 = vmul.f32 %v1571, %v308
        %v1574 = vadd.f32 %v1568, %v1572
        %v1575 = vadd.f32 %v1569, %v1573
        %s1576 = sld [smem:[#allocation6 + $0x8]]
        %v1577 = vstv %s1576
        %v1578 = vadd.f32 %v1574, %v1577
        %v1579 = vadd.f32 %v1575, %v1577
        %s1580 = sld [smem:[#allocation2 + $0x480]]
        %v1581 = vstv %s1580
        %v1582 = vmul.f32 %v1581, %v298
        %v1583 = vmul.f32 %v1581, %v299
        %s1584 = sld [smem:[#allocation2 + $0x481]]
        %v1585 = vstv %s1584
        %v1586 = vmul.f32 %v1585, %v301
        %v1587 = vmul.f32 %v1585, %v302
        %v1588 = vadd.f32 %v1582, %v1586
        %v1589 = vadd.f32 %v1583, %v1587
        %s1590 = sld [smem:[#allocation2 + $0x482]]
        %v1591 = vstv %s1590
        %v1592 = vmul.f32 %v1591, %v304
        %v1593 = vmul.f32 %v1591, %v305
        %v1594 = vadd.f32 %v1588, %v1592
        %v1595 = vadd.f32 %v1589, %v1593
        %s1596 = sld [smem:[#allocation2 + $0x483]]
        %v1597 = vstv %s1596
        %v1598 = vmul.f32 %v1597, %v307
        %v1599 = vmul.f32 %v1597, %v308
        %v1600 = vadd.f32 %v1594, %v1598
        %v1601 = vadd.f32 %v1595, %v1599
        %s1602 = sld [smem:[#allocation6 + $0x9]]
        %v1603 = vstv %s1602
        %v1604 = vadd.f32 %v1600, %v1603
        %v1605 = vadd.f32 %v1601, %v1603
        %s1606 = sld [smem:[#allocation2 + $0x500]]
        %v1607 = vstv %s1606
        %v1608 = vmul.f32 %v1607, %v298
        %v1609 = vmul.f32 %v1607, %v299
        %s1610 = sld [smem:[#allocation2 + $0x501]]
        %v1611 = vstv %s1610
        %v1612 = vmul.f32 %v1611, %v301
        %v1613 = vmul.f32 %v1611, %v302
        %v1614 = vadd.f32 %v1608, %v1612
        %v1615 = vadd.f32 %v1609, %v1613
        %s1616 = sld [smem:[#allocation2 + $0x502]]
        %v1617 = vstv %s1616
        %v1618 = vmul.f32 %v1617, %v304
        %v1619 = vmul.f32 %v1617, %v305
        %v1620 = vadd.f32 %v1614, %v1618
        %v1621 = vadd.f32 %v1615, %v1619
        %s1622 = sld [smem:[#allocation2 + $0x503]]
        %v1623 = vstv %s1622
        %v1624 = vmul.f32 %v1623, %v307
        %v1625 = vmul.f32 %v1623, %v308
        %v1626 = vadd.f32 %v1620, %v1624
        %v1627 = vadd.f32 %v1621, %v1625
        %s1628 = sld [smem:[#allocation6 + $0xa]]
        %v1629 = vstv %s1628
        %v1630 = vadd.f32 %v1626, %v1629
        %v1631 = vadd.f32 %v1627, %v1629
        %s1632 = sld [smem:[#allocation2 + $0x580]]
        %v1633 = vstv %s1632
        %v1634 = vmul.f32 %v1633, %v298
        %v1635 = vmul.f32 %v1633, %v299
        %s1636 = sld [smem:[#allocation2 + $0x581]]
        %v1637 = vstv %s1636
        %v1638 = vmul.f32 %v1637, %v301
        %v1639 = vmul.f32 %v1637, %v302
        %v1640 = vadd.f32 %v1634, %v1638
        %v1641 = vadd.f32 %v1635, %v1639
        %s1642 = sld [smem:[#allocation2 + $0x582]]
        %v1643 = vstv %s1642
        %v1644 = vmul.f32 %v1643, %v304
        %v1645 = vmul.f32 %v1643, %v305
        %v1646 = vadd.f32 %v1640, %v1644
        %v1647 = vadd.f32 %v1641, %v1645
        %s1648 = sld [smem:[#allocation2 + $0x583]]
        %v1649 = vstv %s1648
        %v1650 = vmul.f32 %v1649, %v307
        %v1651 = vmul.f32 %v1649, %v308
        %v1652 = vadd.f32 %v1646, %v1650
        %v1653 = vadd.f32 %v1647, %v1651
        %s1654 = sld [smem:[#allocation6 + $0xb]]
        %v1655 = vstv %s1654
        %v1656 = vadd.f32 %v1652, %v1655
        %v1657 = vadd.f32 %v1653, %v1655
        %v1659 = vsel %vm427, %v1604, 0
        %v1662 = vsel %vm427, %v1605, 0
        %1664 = vmatprep.subr.mxu0 0.0
        %1665 = vmatpush1.msra.mxu0 %v312
        %1666 = vmatprep.subr.mxu0 0.0
        %1667 = vmatpush1.msra.mxu0 %v313
        %1668 = vmatprep.subr.mxu0 0.0
        %1669 = vmatpush1.msra.mxu0 0.0
        %1670 = vmatprep.subr.mxu0 0.0
        %1671 = vmatpush1.msra.mxu0 0.0
        %1672 = vmatprep.subr.mxu0 0.0
        %1673 = vmatpush1.msra.mxu0 0.0
        %1674 = vmatprep.subr.mxu0 0.0
        %1675 = vmatpush1.msra.mxu0 0.0
        %1676 = vmatprep.subr.mxu0 0.0
        %1677 = vmatpush1.msra.mxu0 0.0
        %1678 = vmatprep.subr.mxu0 0.0
        %1679 = vmatpush1.msra.mxu0 0.0
        %1680 = vmatprep.subr.mxu0 0.0
        %1681 = vmatpush1.msra.mxu0 0.0
        %1682 = vmatprep.subr.mxu0 0.0
        %1683 = vmatpush1.msra.mxu0 0.0
        %1684 = vmatprep.subr.mxu0 0.0
        %1685 = vmatpush1.msra.mxu0 0.0
        %1686 = vmatprep.subr.mxu0 0.0
        %1687 = vmatpush1.msra.mxu0 0.0
        %1688 = vmatprep.subr.mxu0 0.0
        %1689 = vmatpush1.msra.mxu0 0.0
        %1690 = vmatprep.subr.mxu0 0.0
        %1691 = vmatpush1.msra.mxu0 0.0
        %1692 = vmatprep.subr.mxu0 0.0
        %1693 = vmatpush1.msra.mxu0 0.0
        %1694 = vmatprep.subr.mxu0 0.0
        %1695 = vmatpush1.msra.mxu0 0.0
        %1696 = vmatprep.subr.mxu0 0.0
        %1697 = vmatpush1.msra.mxu0 0.0
        %1698 = vmatprep.subr.mxu0 0.0
        %1699 = vmatpush1.msra.mxu0 0.0
        %1700 = vmatprep.subr.mxu0 0.0
        %1701 = vmatpush1.msra.mxu0 0.0
        %1702 = vmatprep.subr.mxu0 0.0
        %1703 = vmatpush1.msra.mxu0 0.0
        %1704 = vmatprep.subr.mxu0 0.0
        %1705 = vmatpush1.msra.mxu0 0.0
        %1706 = vmatprep.subr.mxu0 0.0
        %1707 = vmatpush1.msra.mxu0 0.0
        %1708 = vmatprep.subr.mxu0 0.0
        %1709 = vmatpush1.msra.mxu0 0.0
        %1710 = vmatprep.subr.mxu0 0.0
        %1711 = vmatpush1.msra.mxu0 0.0
        %1712 = vmatprep.subr.mxu0 0.0
        %1713 = vmatpush1.msra.mxu0 0.0
        %1714 = vmatprep.subr.mxu0 0.0
        %1715 = vmatpush1.msra.mxu0 0.0
        %1716 = vmatprep.subr.mxu0 0.0
        %1717 = vmatpush1.msra.mxu0 0.0
        %1718 = vmatprep.subr.mxu0 0.0
        %1719 = vmatpush1.msra.mxu0 0.0
        %1720 = vmatprep.subr.mxu0 0.0
        %1721 = vmatpush1.msra.mxu0 0.0
        %1722 = vmatprep.subr.mxu0 0.0
        %1723 = vmatpush1.msra.mxu0 0.0
        %1724 = vmatprep.subr.mxu0 0.0
        %1725 = vmatpush1.msra.mxu0 0.0
        %1726 = vmatprep.subr.mxu0 0.0
        %1727 = vmatpush1.msra.mxu0 0.0
        %1728 = vmatprep.mubr.f32.mxu0 0.0
        %1729 = vmatmul.mubr.f32.gmra.mrb[0].mxu0 %v1659
        %v1730 = vpop.f32.mrb[0].mxu0
        %v1731 = vadd.f32 0.0, %v1730
        %v1732 = vpop.f32.mrb[0].mxu0
        %1733 = vmatprep.mubr.f32.mxu0 0.0
        %1734 = vmatmul.mubr.f32.gmra.mrb[0].mxu0 %v1662
        %v1735 = vpop.f32.mrb[0].mxu0
        %v1736 = vadd.f32 0.0, %v1735
        %v1737 = vpop.f32.mrb[0].mxu0
        %1738 = vdwg.mxu0
        %v1740 = vsel %vm427, %v1578, 0
        %v1743 = vsel %vm427, %v1579, 0
        %1745 = vmatprep.subr.mxu0 0.0
        %1746 = vmatpush1.msra.mxu0 %v309
        %1747 = vmatprep.subr.mxu0 0.0
        %1748 = vmatpush1.msra.mxu0 %v310
        %1749 = vmatprep.subr.mxu0 0.0
        %1750 = vmatpush1.msra.mxu0 0.0
        %1751 = vmatprep.subr.mxu0 0.0
        %1752 = vmatpush1.msra.mxu0 0.0
        %1753 = vmatprep.subr.mxu0 0.0
        %1754 = vmatpush1.msra.mxu0 0.0
        %1755 = vmatprep.subr.mxu0 0.0
        %1756 = vmatpush1.msra.mxu0 0.0
        %1757 = vmatprep.subr.mxu0 0.0
        %1758 = vmatpush1.msra.mxu0 0.0
        %1759 = vmatprep.subr.mxu0 0.0
        %1760 = vmatpush1.msra.mxu0 0.0
        %1761 = vmatprep.subr.mxu0 0.0
        %1762 = vmatpush1.msra.mxu0 0.0
        %1763 = vmatprep.subr.mxu0 0.0
        %1764 = vmatpush1.msra.mxu0 0.0
        %1765 = vmatprep.subr.mxu0 0.0
        %1766 = vmatpush1.msra.mxu0 0.0
        %1767 = vmatprep.subr.mxu0 0.0
        %1768 = vmatpush1.msra.mxu0 0.0
        %1769 = vmatprep.subr.mxu0 0.0
        %1770 = vmatpush1.msra.mxu0 0.0
        %1771 = vmatprep.subr.mxu0 0.0
        %1772 = vmatpush1.msra.mxu0 0.0
        %1773 = vmatprep.subr.mxu0 0.0
        %1774 = vmatpush1.msra.mxu0 0.0
        %1775 = vmatprep.subr.mxu0 0.0
        %1776 = vmatpush1.msra.mxu0 0.0
        %1777 = vmatprep.subr.mxu0 0.0
        %1778 = vmatpush1.msra.mxu0 0.0
        %1779 = vmatprep.subr.mxu0 0.0
        %1780 = vmatpush1.msra.mxu0 0.0
        %1781 = vmatprep.subr.mxu0 0.0
        %1782 = vmatpush1.msra.mxu0 0.0
        %1783 = vmatprep.subr.mxu0 0.0
        %1784 = vmatpush1.msra.mxu0 0.0
        %1785 = vmatprep.subr.mxu0 0.0
        %1786 = vmatpush1.msra.mxu0 0.0
        %1787 = vmatprep.subr.mxu0 0.0
        %1788 = vmatpush1.msra.mxu0 0.0
        %1789 = vmatprep.subr.mxu0 0.0
        %1790 = vmatpush1.msra.mxu0 0.0
        %1791 = vmatprep.subr.mxu0 0.0
        %1792 = vmatpush1.msra.mxu0 0.0
        %1793 = vmatprep.subr.mxu0 0.0
        %1794 = vmatpush1.msra.mxu0 0.0
        %1795 = vmatprep.subr.mxu0 0.0
        %1796 = vmatpush1.msra.mxu0 0.0
        %1797 = vmatprep.subr.mxu0 0.0
        %1798 = vmatpush1.msra.mxu0 0.0
        %1799 = vmatprep.subr.mxu0 0.0
        %1800 = vmatpush1.msra.mxu0 0.0
        %1801 = vmatprep.subr.mxu0 0.0
        %1802 = vmatpush1.msra.mxu0 0.0
        %1803 = vmatprep.subr.mxu0 0.0
        %1804 = vmatpush1.msra.mxu0 0.0
        %1805 = vmatprep.subr.mxu0 0.0
        %1806 = vmatpush1.msra.mxu0 0.0
        %1807 = vmatprep.subr.mxu0 0.0
        %1808 = vmatpush1.msra.mxu0 0.0
        %1809 = vmatprep.mubr.f32.mxu0 0.0
        %1810 = vmatmul.mubr.f32.gmra.mrb[0].mxu0 %v1740
        %v1811 = vpop.f32.mrb[0].mxu0
        %v1812 = vadd.f32 %v1731, %v1811
        %v1813 = vpop.f32.mrb[0].mxu0
        %1814 = vmatprep.mubr.f32.mxu0 0.0
        %1815 = vmatmul.mubr.f32.gmra.mrb[0].mxu0 %v1743
        %v1816 = vpop.f32.mrb[0].mxu0
        %v1817 = vadd.f32 %v1736, %v1816
        %v1818 = vpop.f32.mrb[0].mxu0
        %1819 = vdwg.mxu0
        %v1821 = vsel %vm427, %v1656, 0
        %v1824 = vsel %vm427, %v1657, 0
        %1826 = vmatprep.subr.mxu0 0.0
        %1827 = vmatpush1.msra.mxu0 %v312
        %1828 = vmatprep.subr.mxu0 0.0
        %1829 = vmatpush1.msra.mxu0 %v313
        %1830 = vmatprep.subr.mxu0 0.0
        %1831 = vmatpush1.msra.mxu0 0.0
        %1832 = vmatprep.subr.mxu0 0.0
        %1833 = vmatpush1.msra.mxu0 0.0
        %1834 = vmatprep.subr.mxu0 0.0
        %1835 = vmatpush1.msra.mxu0 0.0
        %1836 = vmatprep.subr.mxu0 0.0
        %1837 = vmatpush1.msra.mxu0 0.0
        %1838 = vmatprep.subr.mxu0 0.0
        %1839 = vmatpush1.msra.mxu0 0.0
        %1840 = vmatprep.subr.mxu0 0.0
        %1841 = vmatpush1.msra.mxu0 0.0
        %1842 = vmatprep.subr.mxu0 0.0
        %1843 = vmatpush1.msra.mxu0 0.0
        %1844 = vmatprep.subr.mxu0 0.0
        %1845 = vmatpush1.msra.mxu0 0.0
        %1846 = vmatprep.subr.mxu0 0.0
        %1847 = vmatpush1.msra.mxu0 0.0
        %1848 = vmatprep.subr.mxu0 0.0
        %1849 = vmatpush1.msra.mxu0 0.0
        %1850 = vmatprep.subr.mxu0 0.0
        %1851 = vmatpush1.msra.mxu0 0.0
        %1852 = vmatprep.subr.mxu0 0.0
        %1853 = vmatpush1.msra.mxu0 0.0
        %1854 = vmatprep.subr.mxu0 0.0
        %1855 = vmatpush1.msra.mxu0 0.0
        %1856 = vmatprep.subr.mxu0 0.0
        %1857 = vmatpush1.msra.mxu0 0.0
        %1858 = vmatprep.subr.mxu0 0.0
        %1859 = vmatpush1.msra.mxu0 0.0
        %1860 = vmatprep.subr.mxu0 0.0
        %1861 = vmatpush1.msra.mxu0 0.0
        %1862 = vmatprep.subr.mxu0 0.0
        %1863 = vmatpush1.msra.mxu0 0.0
        %1864 = vmatprep.subr.mxu0 0.0
        %1865 = vmatpush1.msra.mxu0 0.0
        %1866 = vmatprep.subr.mxu0 0.0
        %1867 = vmatpush1.msra.mxu0 0.0
        %1868 = vmatprep.subr.mxu0 0.0
        %1869 = vmatpush1.msra.mxu0 0.0
        %1870 = vmatprep.subr.mxu0 0.0
        %1871 = vmatpush1.msra.mxu0 0.0
        %1872 = vmatprep.subr.mxu0 0.0
        %1873 = vmatpush1.msra.mxu0 0.0
        %1874 = vmatprep.subr.mxu0 0.0
        %1875 = vmatpush1.msra.mxu0 0.0
        %1876 = vmatprep.subr.mxu0 0.0
        %1877 = vmatpush1.msra.mxu0 0.0
        %1878 = vmatprep.subr.mxu0 0.0
        %1879 = vmatpush1.msra.mxu0 0.0
        %1880 = vmatprep.subr.mxu0 0.0
        %1881 = vmatpush1.msra.mxu0 0.0
        %1882 = vmatprep.subr.mxu0 0.0
        %1883 = vmatpush1.msra.mxu0 0.0
        %1884 = vmatprep.subr.mxu0 0.0
        %1885 = vmatpush1.msra.mxu0 0.0
        %1886 = vmatprep.subr.mxu0 0.0
        %1887 = vmatpush1.msra.mxu0 0.0
        %1888 = vmatprep.subr.mxu0 0.0
        %1889 = vmatpush1.msra.mxu0 0.0
        %1890 = vmatprep.mubr.f32.mxu0 0.0
        %1891 = vmatmul.mubr.f32.gmra.mrb[0].mxu0 %v1821
        %v1892 = vpop.f32.mrb[0].mxu0
        %v1893 = vadd.f32 0.0, %v1892
        %v1894 = vpop.f32.mrb[0].mxu0
        %1895 = vmatprep.mubr.f32.mxu0 0.0
        %1896 = vmatmul.mubr.f32.gmra.mrb[0].mxu0 %v1824
        %v1897 = vpop.f32.mrb[0].mxu0
        %v1898 = vadd.f32 0.0, %v1897
        %v1899 = vpop.f32.mrb[0].mxu0
        %1900 = vdwg.mxu0
        %v1902 = vsel %vm427, %v1630, 0
        %v1905 = vsel %vm427, %v1631, 0
        %1907 = vmatprep.subr.mxu0 0.0
        %1908 = vmatpush1.msra.mxu0 %v309
        %1909 = vmatprep.subr.mxu0 0.0
        %1910 = vmatpush1.msra.mxu0 %v310
        %1911 = vmatprep.subr.mxu0 0.0
        %1912 = vmatpush1.msra.mxu0 0.0
        %1913 = vmatprep.subr.mxu0 0.0
        %1914 = vmatpush1.msra.mxu0 0.0
        %1915 = vmatprep.subr.mxu0 0.0
        %1916 = vmatpush1.msra.mxu0 0.0
        %1917 = vmatprep.subr.mxu0 0.0
        %1918 = vmatpush1.msra.mxu0 0.0
        %1919 = vmatprep.subr.mxu0 0.0
        %1920 = vmatpush1.msra.mxu0 0.0
        %1921 = vmatprep.subr.mxu0 0.0
        %1922 = vmatpush1.msra.mxu0 0.0
        %1923 = vmatprep.subr.mxu0 0.0
        %1924 = vmatpush1.msra.mxu0 0.0
        %1925 = vmatprep.subr.mxu0 0.0
        %1926 = vmatpush1.msra.mxu0 0.0
        %1927 = vmatprep.subr.mxu0 0.0
        %1928 = vmatpush1.msra.mxu0 0.0
        %1929 = vmatprep.subr.mxu0 0.0
        %1930 = vmatpush1.msra.mxu0 0.0
        %1931 = vmatprep.subr.mxu0 0.0
        %1932 = vmatpush1.msra.mxu0 0.0
        %1933 = vmatprep.subr.mxu0 0.0
        %1934 = vmatpush1.msra.mxu0 0.0
        %1935 = vmatprep.subr.mxu0 0.0
        %1936 = vmatpush1.msra.mxu0 0.0
        %1937 = vmatprep.subr.mxu0 0.0
        %1938 = vmatpush1.msra.mxu0 0.0
        %1939 = vmatprep.subr.mxu0 0.0
        %1940 = vmatpush1.msra.mxu0 0.0
        %1941 = vmatprep.subr.mxu0 0.0
        %1942 = vmatpush1.msra.mxu0 0.0
        %1943 = vmatprep.subr.mxu0 0.0
        %1944 = vmatpush1.msra.mxu0 0.0
        %1945 = vmatprep.subr.mxu0 0.0
        %1946 = vmatpush1.msra.mxu0 0.0
        %1947 = vmatprep.subr.mxu0 0.0
        %1948 = vmatpush1.msra.mxu0 0.0
        %1949 = vmatprep.subr.mxu0 0.0
        %1950 = vmatpush1.msra.mxu0 0.0
        %1951 = vmatprep.subr.mxu0 0.0
        %1952 = vmatpush1.msra.mxu0 0.0
        %1953 = vmatprep.subr.mxu0 0.0
        %1954 = vmatpush1.msra.mxu0 0.0
        %1955 = vmatprep.subr.mxu0 0.0
        %1956 = vmatpush1.msra.mxu0 0.0
        %1957 = vmatprep.subr.mxu0 0.0
        %1958 = vmatpush1.msra.mxu0 0.0
        %1959 = vmatprep.subr.mxu0 0.0
        %1960 = vmatpush1.msra.mxu0 0.0
        %1961 = vmatprep.subr.mxu0 0.0
        %1962 = vmatpush1.msra.mxu0 0.0
        %1963 = vmatprep.subr.mxu0 0.0
        %1964 = vmatpush1.msra.mxu0 0.0
        %1965 = vmatprep.subr.mxu0 0.0
        %1966 = vmatpush1.msra.mxu0 0.0
        %1967 = vmatprep.subr.mxu0 0.0
        %1968 = vmatpush1.msra.mxu0 0.0
        %1969 = vmatprep.subr.mxu0 0.0
        %1970 = vmatpush1.msra.mxu0 0.0
        %1971 = vmatprep.mubr.f32.mxu0 0.0
        %1972 = vmatmul.mubr.f32.gmra.mrb[0].mxu0 %v1902
        %v1973 = vpop.f32.mrb[0].mxu0
        %v1974 = vadd.f32 %v1893, %v1973
        %v1975 = vpop.f32.mrb[0].mxu0
        %1976 = vmatprep.mubr.f32.mxu0 0.0
        %1977 = vmatmul.mubr.f32.gmra.mrb[0].mxu0 %v1905
        %v1978 = vpop.f32.mrb[0].mxu0
        %v1979 = vadd.f32 %v1898, %v1978
        %v1980 = vpop.f32.mrb[0].mxu0
        %1981 = vdwg.mxu0
        %1982 = vmatprep.subr.mxu0 0.0
        %1983 = vmatpush1.msra.mxu0 %v1974
        %1984 = vmatprep.subr.mxu0 0.0
        %1985 = vmatpush1.msra.mxu0 %v1979
        %1986 = vmatprep.subr.mxu0 0.0
        %1987 = vmatpush1.msra.mxu0 0.0
        %1988 = vmatprep.subr.mxu0 0.0
        %1989 = vmatpush1.msra.mxu0 0.0
        %1990 = vmatprep.subr.mxu0 0.0
        %1991 = vmatpush1.msra.mxu0 0.0
        %1992 = vmatprep.subr.mxu0 0.0
        %1993 = vmatpush1.msra.mxu0 0.0
        %1994 = vmatprep.subr.mxu0 0.0
        %1995 = vmatpush1.msra.mxu0 0.0
        %1996 = vmatprep.subr.mxu0 0.0
        %1997 = vmatpush1.msra.mxu0 0.0
        %1998 = vmatprep.subr.mxu0 0.0
        %1999 = vmatpush1.msra.mxu0 0.0
        %2000 = vmatprep.subr.mxu0 0.0
        %2001 = vmatpush1.msra.mxu0 0.0
        %2002 = vmatprep.subr.mxu0 0.0
        %2003 = vmatpush1.msra.mxu0 0.0
        %2004 = vmatprep.subr.mxu0 0.0
        %2005 = vmatpush1.msra.mxu0 0.0
        %2006 = vmatprep.subr.mxu0 0.0
        %2007 = vmatpush1.msra.mxu0 0.0
        %2008 = vmatprep.subr.mxu0 0.0
        %2009 = vmatpush1.msra.mxu0 0.0
        %2010 = vmatprep.subr.mxu0 0.0
        %2011 = vmatpush1.msra.mxu0 0.0
        %2012 = vmatprep.subr.mxu0 0.0
        %2013 = vmatpush1.msra.mxu0 0.0
        %2014 = vmatprep.subr.mxu0 0.0
        %2015 = vmatpush1.msra.mxu0 0.0
        %2016 = vmatprep.subr.mxu0 0.0
        %2017 = vmatpush1.msra.mxu0 0.0
        %2018 = vmatprep.subr.mxu0 0.0
        %2019 = vmatpush1.msra.mxu0 0.0
        %2020 = vmatprep.subr.mxu0 0.0
        %2021 = vmatpush1.msra.mxu0 0.0
        %2022 = vmatprep.subr.mxu0 0.0
        %2023 = vmatpush1.msra.mxu0 0.0
        %2024 = vmatprep.subr.mxu0 0.0
        %2025 = vmatpush1.msra.mxu0 0.0
        %2026 = vmatprep.subr.mxu0 0.0
        %2027 = vmatpush1.msra.mxu0 0.0
        %2028 = vmatprep.subr.mxu0 0.0
        %2029 = vmatpush1.msra.mxu0 0.0
        %2030 = vmatprep.subr.mxu0 0.0
        %2031 = vmatpush1.msra.mxu0 0.0
        %2032 = vmatprep.subr.mxu0 0.0
        %2033 = vmatpush1.msra.mxu0 0.0
        %2034 = vmatprep.subr.mxu0 0.0
        %2035 = vmatpush1.msra.mxu0 0.0
        %2036 = vmatprep.subr.mxu0 0.0
        %2037 = vmatpush1.msra.mxu0 0.0
        %2038 = vmatprep.subr.mxu0 0.0
        %2039 = vmatpush1.msra.mxu0 0.0
        %2040 = vmatprep.subr.mxu0 0.0
        %2041 = vmatpush1.msra.mxu0 0.0
        %2042 = vmatprep.subr.mxu0 0.0
        %2043 = vmatpush1.msra.mxu0 0.0
        %2044 = vmatprep.subr.mxu0 0.0
        %2045 = vmatpush1.msra.mxu0 0.0
        %2046 = vmatprep.mubr.f32.mxu0 0.0
        %2047 = vmatmul.mubr.f32.gmra.mrb[0].mxu0 %v753
        %v2048 = vpop.f32.mrb[0].mxu0
        %v2049 = vadd.f32 0.0, %v2048
        %v2050 = vpop.f32.mrb[0].mxu0
        %2051 = vmatprep.mubr.f32.mxu0 0.0
        %2052 = vmatmul.mubr.f32.gmra.mrb[0].mxu0 %v756
        %v2053 = vpop.f32.mrb[0].mxu0
        %v2054 = vadd.f32 0.0, %v2053
        %v2055 = vpop.f32.mrb[0].mxu0
        %2056 = vmatprep.mubr.f32.mxu0 0.0
        %2057 = vmatmul.mubr.f32.gmra.mrb[0].mxu0 %v759
        %v2058 = vpop.f32.mrb[0].mxu0
        %v2059 = vadd.f32 0.0, %v2058
        %v2060 = vpop.f32.mrb[0].mxu0
        %2061 = vmatprep.mubr.f32.mxu0 0.0
        %2062 = vmatmul.mubr.f32.gmra.mrb[0].mxu0 %v762
        %v2063 = vpop.f32.mrb[0].mxu0
        %v2064 = vadd.f32 0.0, %v2063
        %v2065 = vpop.f32.mrb[0].mxu0
        %2066 = vdwg.mxu0
        %2067 = vmatprep.subr.mxu0 0.0
        %2068 = vmatpush1.msra.mxu0 %v1812
        %2069 = vmatprep.subr.mxu0 0.0
        %2070 = vmatpush1.msra.mxu0 %v1817
        %2071 = vmatprep.subr.mxu0 0.0
        %2072 = vmatpush1.msra.mxu0 0.0
        %2073 = vmatprep.subr.mxu0 0.0
        %2074 = vmatpush1.msra.mxu0 0.0
        %2075 = vmatprep.subr.mxu0 0.0
        %2076 = vmatpush1.msra.mxu0 0.0
        %2077 = vmatprep.subr.mxu0 0.0
        %2078 = vmatpush1.msra.mxu0 0.0
        %2079 = vmatprep.subr.mxu0 0.0
        %2080 = vmatpush1.msra.mxu0 0.0
        %2081 = vmatprep.subr.mxu0 0.0
        %2082 = vmatpush1.msra.mxu0 0.0
        %2083 = vmatprep.subr.mxu0 0.0
        %2084 = vmatpush1.msra.mxu0 0.0
        %2085 = vmatprep.subr.mxu0 0.0
        %2086 = vmatpush1.msra.mxu0 0.0
        %2087 = vmatprep.subr.mxu0 0.0
        %2088 = vmatpush1.msra.mxu0 0.0
        %2089 = vmatprep.subr.mxu0 0.0
        %2090 = vmatpush1.msra.mxu0 0.0
        %2091 = vmatprep.subr.mxu0 0.0
        %2092 = vmatpush1.msra.mxu0 0.0
        %2093 = vmatprep.subr.mxu0 0.0
        %2094 = vmatpush1.msra.mxu0 0.0
        %2095 = vmatprep.subr.mxu0 0.0
        %2096 = vmatpush1.msra.mxu0 0.0
        %2097 = vmatprep.subr.mxu0 0.0
        %2098 = vmatpush1.msra.mxu0 0.0
        %2099 = vmatprep.subr.mxu0 0.0
        %2100 = vmatpush1.msra.mxu0 0.0
        %2101 = vmatprep.subr.mxu0 0.0
        %2102 = vmatpush1.msra.mxu0 0.0
        %2103 = vmatprep.subr.mxu0 0.0
        %2104 = vmatpush1.msra.mxu0 0.0
        %2105 = vmatprep.subr.mxu0 0.0
        %2106 = vmatpush1.msra.mxu0 0.0
        %2107 = vmatprep.subr.mxu0 0.0
        %2108 = vmatpush1.msra.mxu0 0.0
        %2109 = vmatprep.subr.mxu0 0.0
        %2110 = vmatpush1.msra.mxu0 0.0
        %2111 = vmatprep.subr.mxu0 0.0
        %2112 = vmatpush1.msra.mxu0 0.0
        %2113 = vmatprep.subr.mxu0 0.0
        %2114 = vmatpush1.msra.mxu0 0.0
        %2115 = vmatprep.subr.mxu0 0.0
        %2116 = vmatpush1.msra.mxu0 0.0
        %2117 = vmatprep.subr.mxu0 0.0
        %2118 = vmatpush1.msra.mxu0 0.0
        %2119 = vmatprep.subr.mxu0 0.0
        %2120 = vmatpush1.msra.mxu0 0.0
        %2121 = vmatprep.subr.mxu0 0.0
        %2122 = vmatpush1.msra.mxu0 0.0
        %2123 = vmatprep.subr.mxu0 0.0
        %2124 = vmatpush1.msra.mxu0 0.0
        %2125 = vmatprep.subr.mxu0 0.0
        %2126 = vmatpush1.msra.mxu0 0.0
        %2127 = vmatprep.subr.mxu0 0.0
        %2128 = vmatpush1.msra.mxu0 0.0
        %2129 = vmatprep.subr.mxu0 0.0
        %2130 = vmatpush1.msra.mxu0 0.0
        %2131 = vmatprep.mubr.f32.mxu0 0.0
        %2132 = vmatmul.mubr.f32.gmra.mrb[0].mxu0 %v850
        %v2133 = vpop.f32.mrb[0].mxu0
        %v2134 = vadd.f32 %v2049, %v2133
        %v2135 = vpop.f32.mrb[0].mxu0
        %2136 = vmatprep.mubr.f32.mxu0 0.0
        %2137 = vmatmul.mubr.f32.gmra.mrb[0].mxu0 %v853
        %v2138 = vpop.f32.mrb[0].mxu0
        %v2139 = vadd.f32 %v2054, %v2138
        %v2140 = vpop.f32.mrb[0].mxu0
        %2141 = vmatprep.mubr.f32.mxu0 0.0
        %2142 = vmatmul.mubr.f32.gmra.mrb[0].mxu0 %v856
        %v2143 = vpop.f32.mrb[0].mxu0
        %v2144 = vadd.f32 %v2059, %v2143
        %v2145 = vpop.f32.mrb[0].mxu0
        %2146 = vmatprep.mubr.f32.mxu0 0.0
        %2147 = vmatmul.mubr.f32.gmra.mrb[0].mxu0 %v859
        %v2148 = vpop.f32.mrb[0].mxu0
        %v2149 = vadd.f32 %v2064, %v2148
        %v2150 = vpop.f32.mrb[0].mxu0
        %2151 = vdwg.mxu0
        %s2152 = scalar_lea.vmem %s286, 64 [#allocation9]
        %2153 = vst.msk [vmem:[%s2152] sm:$0xff] %vm946, %v2134
        %2154 = vst.msk [vmem:[%s2152 + $0x8] sm:$0xff] %vm946, %v2139
        %2155 = vst.msk [vmem:[%s2152 + $0x10] sm:$0xff] %vm946, %v2144
        %2156 = vst.msk [vmem:[%s2152 + $0x18] sm:$0xff] %vm946, %v2149
        %s2157 = sld [smem:[#allocation2 + $0x600]]
        %v2158 = vstv %s2157
        %v2159 = vmul.f32 %v2158, %v298
        %v2160 = vmul.f32 %v2158, %v299
        %s2161 = sld [smem:[#allocation2 + $0x601]]
        %v2162 = vstv %s2161
        %v2163 = vmul.f32 %v2162, %v301
        %v2164 = vmul.f32 %v2162, %v302
        %v2165 = vadd.f32 %v2159, %v2163
        %v2166 = vadd.f32 %v2160, %v2164
        %s2167 = sld [smem:[#allocation2 + $0x602]]
        %v2168 = vstv %s2167
        %v2169 = vmul.f32 %v2168, %v304
        %v2170 = vmul.f32 %v2168, %v305
        %v2171 = vadd.f32 %v2165, %v2169
        %v2172 = vadd.f32 %v2166, %v2170
        %s2173 = sld [smem:[#allocation2 + $0x603]]
        %v2174 = vstv %s2173
        %v2175 = vmul.f32 %v2174, %v307
        %v2176 = vmul.f32 %v2174, %v308
        %v2177 = vadd.f32 %v2171, %v2175
        %v2178 = vadd.f32 %v2172, %v2176
        %s2179 = sld [smem:[#allocation6 + $0xc]]
        %v2180 = vstv %s2179
        %v2181 = vadd.f32 %v2177, %v2180
        %v2182 = vadd.f32 %v2178, %v2180
        %s2183 = sld [smem:[#allocation2 + $0x680]]
        %v2184 = vstv %s2183
        %v2185 = vmul.f32 %v2184, %v298
        %v2186 = vmul.f32 %v2184, %v299
        %s2187 = sld [smem:[#allocation2 + $0x681]]
        %v2188 = vstv %s2187
        %v2189 = vmul.f32 %v2188, %v301
        %v2190 = vmul.f32 %v2188, %v302
        %v2191 = vadd.f32 %v2185, %v2189
        %v2192 = vadd.f32 %v2186, %v2190
        %s2193 = sld [smem:[#allocation2 + $0x682]]
        %v2194 = vstv %s2193
        %v2195 = vmul.f32 %v2194, %v304
        %v2196 = vmul.f32 %v2194, %v305
        %v2197 = vadd.f32 %v2191, %v2195
        %v2198 = vadd.f32 %v2192, %v2196
        %s2199 = sld [smem:[#allocation2 + $0x683]]
        %v2200 = vstv %s2199
        %v2201 = vmul.f32 %v2200, %v307
        %v2202 = vmul.f32 %v2200, %v308
        %v2203 = vadd.f32 %v2197, %v2201
        %v2204 = vadd.f32 %v2198, %v2202
        %s2205 = sld [smem:[#allocation6 + $0xd]]
        %v2206 = vstv %s2205
        %v2207 = vadd.f32 %v2203, %v2206
        %v2208 = vadd.f32 %v2204, %v2206
        %s2209 = sld [smem:[#allocation2 + $0x700]]
        %v2210 = vstv %s2209
        %v2211 = vmul.f32 %v2210, %v298
        %v2212 = vmul.f32 %v2210, %v299
        %s2213 = sld [smem:[#allocation2 + $0x701]]
        %v2214 = vstv %s2213
        %v2215 = vmul.f32 %v2214, %v301
        %v2216 = vmul.f32 %v2214, %v302
        %v2217 = vadd.f32 %v2211, %v2215
        %v2218 = vadd.f32 %v2212, %v2216
        %s2219 = sld [smem:[#allocation2 + $0x702]]
        %v2220 = vstv %s2219
        %v2221 = vmul.f32 %v2220, %v304
        %v2222 = vmul.f32 %v2220, %v305
        %v2223 = vadd.f32 %v2217, %v2221
        %v2224 = vadd.f32 %v2218, %v2222
        %s2225 = sld [smem:[#allocation2 + $0x703]]
        %v2226 = vstv %s2225
        %v2227 = vmul.f32 %v2226, %v307
        %v2228 = vmul.f32 %v2226, %v308
        %v2229 = vadd.f32 %v2223, %v2227
        %v2230 = vadd.f32 %v2224, %v2228
        %s2231 = sld [smem:[#allocation6 + $0xe]]
        %v2232 = vstv %s2231
        %v2233 = vadd.f32 %v2229, %v2232
        %v2234 = vadd.f32 %v2230, %v2232
        %s2235 = sld [smem:[#allocation2 + $0x780]]
        %v2236 = vstv %s2235
        %v2237 = vmul.f32 %v2236, %v298
        %v2238 = vmul.f32 %v2236, %v299
        %s2239 = sld [smem:[#allocation2 + $0x781]]
        %v2240 = vstv %s2239
        %v2241 = vmul.f32 %v2240, %v301
        %v2242 = vmul.f32 %v2240, %v302
        %v2243 = vadd.f32 %v2237, %v2241
        %v2244 = vadd.f32 %v2238, %v2242
        %s2245 = sld [smem:[#allocation2 + $0x782]]
        %v2246 = vstv %s2245
        %v2247 = vmul.f32 %v2246, %v304
        %v2248 = vmul.f32 %v2246, %v305
        %v2249 = vadd.f32 %v2243, %v2247
        %v2250 = vadd.f32 %v2244, %v2248
        %s2251 = sld [smem:[#allocation2 + $0x783]]
        %v2252 = vstv %s2251
        %v2253 = vmul.f32 %v2252, %v307
        %v2254 = vmul.f32 %v2252, %v308
        %v2255 = vadd.f32 %v2249, %v2253
        %v2256 = vadd.f32 %v2250, %v2254
        %s2257 = sld [smem:[#allocation6 + $0xf]]
        %v2258 = vstv %s2257
        %v2259 = vadd.f32 %v2255, %v2258
        %v2260 = vadd.f32 %v2256, %v2258
        %v2262 = vsel %vm427, %v2207, 0
        %v2265 = vsel %vm427, %v2208, 0
        %2267 = vmatprep.subr.mxu0 0.0
        %2268 = vmatpush1.msra.mxu0 %v312
        %2269 = vmatprep.subr.mxu0 0.0
        %2270 = vmatpush1.msra.mxu0 %v313
        %2271 = vmatprep.subr.mxu0 0.0
        %2272 = vmatpush1.msra.mxu0 0.0
        %2273 = vmatprep.subr.mxu0 0.0
        %2274 = vmatpush1.msra.mxu0 0.0
        %2275 = vmatprep.subr.mxu0 0.0
        %2276 = vmatpush1.msra.mxu0 0.0
        %2277 = vmatprep.subr.mxu0 0.0
        %2278 = vmatpush1.msra.mxu0 0.0
        %2279 = vmatprep.subr.mxu0 0.0
        %2280 = vmatpush1.msra.mxu0 0.0
        %2281 = vmatprep.subr.mxu0 0.0
        %2282 = vmatpush1.msra.mxu0 0.0
        %2283 = vmatprep.subr.mxu0 0.0
        %2284 = vmatpush1.msra.mxu0 0.0
        %2285 = vmatprep.subr.mxu0 0.0
        %2286 = vmatpush1.msra.mxu0 0.0
        %2287 = vmatprep.subr.mxu0 0.0
        %2288 = vmatpush1.msra.mxu0 0.0
        %2289 = vmatprep.subr.mxu0 0.0
        %2290 = vmatpush1.msra.mxu0 0.0
        %2291 = vmatprep.subr.mxu0 0.0
        %2292 = vmatpush1.msra.mxu0 0.0
        %2293 = vmatprep.subr.mxu0 0.0
        %2294 = vmatpush1.msra.mxu0 0.0
        %2295 = vmatprep.subr.mxu0 0.0
        %2296 = vmatpush1.msra.mxu0 0.0
        %2297 = vmatprep.subr.mxu0 0.0
        %2298 = vmatpush1.msra.mxu0 0.0
        %2299 = vmatprep.subr.mxu0 0.0
        %2300 = vmatpush1.msra.mxu0 0.0
        %2301 = vmatprep.subr.mxu0 0.0
        %2302 = vmatpush1.msra.mxu0 0.0
        %2303 = vmatprep.subr.mxu0 0.0
        %2304 = vmatpush1.msra.mxu0 0.0
        %2305 = vmatprep.subr.mxu0 0.0
        %2306 = vmatpush1.msra.mxu0 0.0
        %2307 = vmatprep.subr.mxu0 0.0
        %2308 = vmatpush1.msra.mxu0 0.0
        %2309 = vmatprep.subr.mxu0 0.0
        %2310 = vmatpush1.msra.mxu0 0.0
        %2311 = vmatprep.subr.mxu0 0.0
        %2312 = vmatpush1.msra.mxu0 0.0
        %2313 = vmatprep.subr.mxu0 0.0
        %2314 = vmatpush1.msra.mxu0 0.0
        %2315 = vmatprep.subr.mxu0 0.0
        %2316 = vmatpush1.msra.mxu0 0.0
        %2317 = vmatprep.subr.mxu0 0.0
        %2318 = vmatpush1.msra.mxu0 0.0
        %2319 = vmatprep.subr.mxu0 0.0
        %2320 = vmatpush1.msra.mxu0 0.0
        %2321 = vmatprep.subr.mxu0 0.0
        %2322 = vmatpush1.msra.mxu0 0.0
        %2323 = vmatprep.subr.mxu0 0.0
        %2324 = vmatpush1.msra.mxu0 0.0
        %2325 = vmatprep.subr.mxu0 0.0
        %2326 = vmatpush1.msra.mxu0 0.0
        %2327 = vmatprep.subr.mxu0 0.0
        %2328 = vmatpush1.msra.mxu0 0.0
        %2329 = vmatprep.subr.mxu0 0.0
        %2330 = vmatpush1.msra.mxu0 0.0
        %2331 = vmatprep.mubr.f32.mxu0 0.0
        %2332 = vmatmul.mubr.f32.gmra.mrb[0].mxu0 %v2262
        %v2333 = vpop.f32.mrb[0].mxu0
        %v2334 = vadd.f32 0.0, %v2333
        %v2335 = vpop.f32.mrb[0].mxu0
        %2336 = vmatprep.mubr.f32.mxu0 0.0
        %2337 = vmatmul.mubr.f32.gmra.mrb[0].mxu0 %v2265
        %v2338 = vpop.f32.mrb[0].mxu0
        %v2339 = vadd.f32 0.0, %v2338
        %v2340 = vpop.f32.mrb[0].mxu0
        %2341 = vdwg.mxu0
        %v2343 = vsel %vm427, %v2181, 0
        %v2346 = vsel %vm427, %v2182, 0
        %2348 = vmatprep.subr.mxu0 0.0
        %2349 = vmatpush1.msra.mxu0 %v309
        %2350 = vmatprep.subr.mxu0 0.0
        %2351 = vmatpush1.msra.mxu0 %v310
        %2352 = vmatprep.subr.mxu0 0.0
        %2353 = vmatpush1.msra.mxu0 0.0
        %2354 = vmatprep.subr.mxu0 0.0
        %2355 = vmatpush1.msra.mxu0 0.0
        %2356 = vmatprep.subr.mxu0 0.0
        %2357 = vmatpush1.msra.mxu0 0.0
        %2358 = vmatprep.subr.mxu0 0.0
        %2359 = vmatpush1.msra.mxu0 0.0
        %2360 = vmatprep.subr.mxu0 0.0
        %2361 = vmatpush1.msra.mxu0 0.0
        %2362 = vmatprep.subr.mxu0 0.0
        %2363 = vmatpush1.msra.mxu0 0.0
        %2364 = vmatprep.subr.mxu0 0.0
        %2365 = vmatpush1.msra.mxu0 0.0
        %2366 = vmatprep.subr.mxu0 0.0
        %2367 = vmatpush1.msra.mxu0 0.0
        %2368 = vmatprep.subr.mxu0 0.0
        %2369 = vmatpush1.msra.mxu0 0.0
        %2370 = vmatprep.subr.mxu0 0.0
        %2371 = vmatpush1.msra.mxu0 0.0
        %2372 = vmatprep.subr.mxu0 0.0
        %2373 = vmatpush1.msra.mxu0 0.0
        %2374 = vmatprep.subr.mxu0 0.0
        %2375 = vmatpush1.msra.mxu0 0.0
        %2376 = vmatprep.subr.mxu0 0.0
        %2377 = vmatpush1.msra.mxu0 0.0
        %2378 = vmatprep.subr.mxu0 0.0
        %2379 = vmatpush1.msra.mxu0 0.0
        %2380 = vmatprep.subr.mxu0 0.0
        %2381 = vmatpush1.msra.mxu0 0.0
        %2382 = vmatprep.subr.mxu0 0.0
        %2383 = vmatpush1.msra.mxu0 0.0
        %2384 = vmatprep.subr.mxu0 0.0
        %2385 = vmatpush1.msra.mxu0 0.0
        %2386 = vmatprep.subr.mxu0 0.0
        %2387 = vmatpush1.msra.mxu0 0.0
        %2388 = vmatprep.subr.mxu0 0.0
        %2389 = vmatpush1.msra.mxu0 0.0
        %2390 = vmatprep.subr.mxu0 0.0
        %2391 = vmatpush1.msra.mxu0 0.0
        %2392 = vmatprep.subr.mxu0 0.0
        %2393 = vmatpush1.msra.mxu0 0.0
        %2394 = vmatprep.subr.mxu0 0.0
        %2395 = vmatpush1.msra.mxu0 0.0
        %2396 = vmatprep.subr.mxu0 0.0
        %2397 = vmatpush1.msra.mxu0 0.0
        %2398 = vmatprep.subr.mxu0 0.0
        %2399 = vmatpush1.msra.mxu0 0.0
        %2400 = vmatprep.subr.mxu0 0.0
        %2401 = vmatpush1.msra.mxu0 0.0
        %2402 = vmatprep.subr.mxu0 0.0
        %2403 = vmatpush1.msra.mxu0 0.0
        %2404 = vmatprep.subr.mxu0 0.0
        %2405 = vmatpush1.msra.mxu0 0.0
        %2406 = vmatprep.subr.mxu0 0.0
        %2407 = vmatpush1.msra.mxu0 0.0
        %2408 = vmatprep.subr.mxu0 0.0
        %2409 = vmatpush1.msra.mxu0 0.0
        %2410 = vmatprep.subr.mxu0 0.0
        %2411 = vmatpush1.msra.mxu0 0.0
        %2412 = vmatprep.mubr.f32.mxu0 0.0
        %2413 = vmatmul.mubr.f32.gmra.mrb[0].mxu0 %v2343
        %v2414 = vpop.f32.mrb[0].mxu0
        %v2415 = vadd.f32 %v2334, %v2414
        %v2416 = vpop.f32.mrb[0].mxu0
        %2417 = vmatprep.mubr.f32.mxu0 0.0
        %2418 = vmatmul.mubr.f32.gmra.mrb[0].mxu0 %v2346
        %v2419 = vpop.f32.mrb[0].mxu0
        %v2420 = vadd.f32 %v2339, %v2419
        %v2421 = vpop.f32.mrb[0].mxu0
        %2422 = vdwg.mxu0
        %v2424 = vsel %vm427, %v2259, 0
        %v2427 = vsel %vm427, %v2260, 0
        %2429 = vmatprep.subr.mxu0 0.0
        %2430 = vmatpush1.msra.mxu0 %v312
        %2431 = vmatprep.subr.mxu0 0.0
        %2432 = vmatpush1.msra.mxu0 %v313
        %2433 = vmatprep.subr.mxu0 0.0
        %2434 = vmatpush1.msra.mxu0 0.0
        %2435 = vmatprep.subr.mxu0 0.0
        %2436 = vmatpush1.msra.mxu0 0.0
        %2437 = vmatprep.subr.mxu0 0.0
        %2438 = vmatpush1.msra.mxu0 0.0
        %2439 = vmatprep.subr.mxu0 0.0
        %2440 = vmatpush1.msra.mxu0 0.0
        %2441 = vmatprep.subr.mxu0 0.0
        %2442 = vmatpush1.msra.mxu0 0.0
        %2443 = vmatprep.subr.mxu0 0.0
        %2444 = vmatpush1.msra.mxu0 0.0
        %2445 = vmatprep.subr.mxu0 0.0
        %2446 = vmatpush1.msra.mxu0 0.0
        %2447 = vmatprep.subr.mxu0 0.0
        %2448 = vmatpush1.msra.mxu0 0.0
        %2449 = vmatprep.subr.mxu0 0.0
        %2450 = vmatpush1.msra.mxu0 0.0
        %2451 = vmatprep.subr.mxu0 0.0
        %2452 = vmatpush1.msra.mxu0 0.0
        %2453 = vmatprep.subr.mxu0 0.0
        %2454 = vmatpush1.msra.mxu0 0.0
        %2455 = vmatprep.subr.mxu0 0.0
        %2456 = vmatpush1.msra.mxu0 0.0
        %2457 = vmatprep.subr.mxu0 0.0
        %2458 = vmatpush1.msra.mxu0 0.0
        %2459 = vmatprep.subr.mxu0 0.0
        %2460 = vmatpush1.msra.mxu0 0.0
        %2461 = vmatprep.subr.mxu0 0.0
        %2462 = vmatpush1.msra.mxu0 0.0
        %2463 = vmatprep.subr.mxu0 0.0
        %2464 = vmatpush1.msra.mxu0 0.0
        %2465 = vmatprep.subr.mxu0 0.0
        %2466 = vmatpush1.msra.mxu0 0.0
        %2467 = vmatprep.subr.mxu0 0.0
        %2468 = vmatpush1.msra.mxu0 0.0
        %2469 = vmatprep.subr.mxu0 0.0
        %2470 = vmatpush1.msra.mxu0 0.0
        %2471 = vmatprep.subr.mxu0 0.0
        %2472 = vmatpush1.msra.mxu0 0.0
        %2473 = vmatprep.subr.mxu0 0.0
        %2474 = vmatpush1.msra.mxu0 0.0
        %2475 = vmatprep.subr.mxu0 0.0
        %2476 = vmatpush1.msra.mxu0 0.0
        %2477 = vmatprep.subr.mxu0 0.0
        %2478 = vmatpush1.msra.mxu0 0.0
        %2479 = vmatprep.subr.mxu0 0.0
        %2480 = vmatpush1.msra.mxu0 0.0
        %2481 = vmatprep.subr.mxu0 0.0
        %2482 = vmatpush1.msra.mxu0 0.0
        %2483 = vmatprep.subr.mxu0 0.0
        %2484 = vmatpush1.msra.mxu0 0.0
        %2485 = vmatprep.subr.mxu0 0.0
        %2486 = vmatpush1.msra.mxu0 0.0
        %2487 = vmatprep.subr.mxu0 0.0
        %2488 = vmatpush1.msra.mxu0 0.0
        %2489 = vmatprep.subr.mxu0 0.0
        %2490 = vmatpush1.msra.mxu0 0.0
        %2491 = vmatprep.subr.mxu0 0.0
        %2492 = vmatpush1.msra.mxu0 0.0
        %2493 = vmatprep.mubr.f32.mxu0 0.0
        %2494 = vmatmul.mubr.f32.gmra.mrb[0].mxu0 %v2424
        %v2495 = vpop.f32.mrb[0].mxu0
        %v2496 = vadd.f32 0.0, %v2495
        %v2497 = vpop.f32.mrb[0].mxu0
        %2498 = vmatprep.mubr.f32.mxu0 0.0
        %2499 = vmatmul.mubr.f32.gmra.mrb[0].mxu0 %v2427
        %v2500 = vpop.f32.mrb[0].mxu0
        %v2501 = vadd.f32 0.0, %v2500
        %v2502 = vpop.f32.mrb[0].mxu0
        %2503 = vdwg.mxu0
        %v2505 = vsel %vm427, %v2233, 0
        %v2508 = vsel %vm427, %v2234, 0
        %2510 = vmatprep.subr.mxu0 0.0
        %2511 = vmatpush1.msra.mxu0 %v309
        %2512 = vmatprep.subr.mxu0 0.0
        %2513 = vmatpush1.msra.mxu0 %v310
        %2514 = vmatprep.subr.mxu0 0.0
        %2515 = vmatpush1.msra.mxu0 0.0
        %2516 = vmatprep.subr.mxu0 0.0
        %2517 = vmatpush1.msra.mxu0 0.0
        %2518 = vmatprep.subr.mxu0 0.0
        %2519 = vmatpush1.msra.mxu0 0.0
        %2520 = vmatprep.subr.mxu0 0.0
        %2521 = vmatpush1.msra.mxu0 0.0
        %2522 = vmatprep.subr.mxu0 0.0
        %2523 = vmatpush1.msra.mxu0 0.0
        %2524 = vmatprep.subr.mxu0 0.0
        %2525 = vmatpush1.msra.mxu0 0.0
        %2526 = vmatprep.subr.mxu0 0.0
        %2527 = vmatpush1.msra.mxu0 0.0
        %2528 = vmatprep.subr.mxu0 0.0
        %2529 = vmatpush1.msra.mxu0 0.0
        %2530 = vmatprep.subr.mxu0 0.0
        %2531 = vmatpush1.msra.mxu0 0.0
        %2532 = vmatprep.subr.mxu0 0.0
        %2533 = vmatpush1.msra.mxu0 0.0
        %2534 = vmatprep.subr.mxu0 0.0
        %2535 = vmatpush1.msra.mxu0 0.0
        %2536 = vmatprep.subr.mxu0 0.0
        %2537 = vmatpush1.msra.mxu0 0.0
        %2538 = vmatprep.subr.mxu0 0.0
        %2539 = vmatpush1.msra.mxu0 0.0
        %2540 = vmatprep.subr.mxu0 0.0
        %2541 = vmatpush1.msra.mxu0 0.0
        %2542 = vmatprep.subr.mxu0 0.0
        %2543 = vmatpush1.msra.mxu0 0.0
        %2544 = vmatprep.subr.mxu0 0.0
        %2545 = vmatpush1.msra.mxu0 0.0
        %2546 = vmatprep.subr.mxu0 0.0
        %2547 = vmatpush1.msra.mxu0 0.0
        %2548 = vmatprep.subr.mxu0 0.0
        %2549 = vmatpush1.msra.mxu0 0.0
        %2550 = vmatprep.subr.mxu0 0.0
        %2551 = vmatpush1.msra.mxu0 0.0
        %2552 = vmatprep.subr.mxu0 0.0
        %2553 = vmatpush1.msra.mxu0 0.0
        %2554 = vmatprep.subr.mxu0 0.0
        %2555 = vmatpush1.msra.mxu0 0.0
        %2556 = vmatprep.subr.mxu0 0.0
        %2557 = vmatpush1.msra.mxu0 0.0
        %2558 = vmatprep.subr.mxu0 0.0
        %2559 = vmatpush1.msra.mxu0 0.0
        %2560 = vmatprep.subr.mxu0 0.0
        %2561 = vmatpush1.msra.mxu0 0.0
        %2562 = vmatprep.subr.mxu0 0.0
        %2563 = vmatpush1.msra.mxu0 0.0
        %2564 = vmatprep.subr.mxu0 0.0
        %2565 = vmatpush1.msra.mxu0 0.0
        %2566 = vmatprep.subr.mxu0 0.0
        %2567 = vmatpush1.msra.mxu0 0.0
        %2568 = vmatprep.subr.mxu0 0.0
        %2569 = vmatpush1.msra.mxu0 0.0
        %2570 = vmatprep.subr.mxu0 0.0
        %2571 = vmatpush1.msra.mxu0 0.0
        %2572 = vmatprep.subr.mxu0 0.0
        %2573 = vmatpush1.msra.mxu0 0.0
        %2574 = vmatprep.mubr.f32.mxu0 0.0
        %2575 = vmatmul.mubr.f32.gmra.mrb[0].mxu0 %v2505
        %v2576 = vpop.f32.mrb[0].mxu0
        %v2577 = vadd.f32 %v2496, %v2576
        %v2578 = vpop.f32.mrb[0].mxu0
        %2579 = vmatprep.mubr.f32.mxu0 0.0
        %2580 = vmatmul.mubr.f32.gmra.mrb[0].mxu0 %v2508
        %v2581 = vpop.f32.mrb[0].mxu0
        %v2582 = vadd.f32 %v2501, %v2581
        %v2583 = vpop.f32.mrb[0].mxu0
        %2584 = vdwg.mxu0
        %2585 = vmatprep.subr.mxu0 0.0
        %2586 = vmatpush1.msra.mxu0 %v2577
        %2587 = vmatprep.subr.mxu0 0.0
        %2588 = vmatpush1.msra.mxu0 %v2582
        %2589 = vmatprep.subr.mxu0 0.0
        %2590 = vmatpush1.msra.mxu0 0.0
        %2591 = vmatprep.subr.mxu0 0.0
        %2592 = vmatpush1.msra.mxu0 0.0
        %2593 = vmatprep.subr.mxu0 0.0
        %2594 = vmatpush1.msra.mxu0 0.0
        %2595 = vmatprep.subr.mxu0 0.0
        %2596 = vmatpush1.msra.mxu0 0.0
        %2597 = vmatprep.subr.mxu0 0.0
        %2598 = vmatpush1.msra.mxu0 0.0
        %2599 = vmatprep.subr.mxu0 0.0
        %2600 = vmatpush1.msra.mxu0 0.0
        %2601 = vmatprep.subr.mxu0 0.0
        %2602 = vmatpush1.msra.mxu0 0.0
        %2603 = vmatprep.subr.mxu0 0.0
        %2604 = vmatpush1.msra.mxu0 0.0
        %2605 = vmatprep.subr.mxu0 0.0
        %2606 = vmatpush1.msra.mxu0 0.0
        %2607 = vmatprep.subr.mxu0 0.0
        %2608 = vmatpush1.msra.mxu0 0.0
        %2609 = vmatprep.subr.mxu0 0.0
        %2610 = vmatpush1.msra.mxu0 0.0
        %2611 = vmatprep.subr.mxu0 0.0
        %2612 = vmatpush1.msra.mxu0 0.0
        %2613 = vmatprep.subr.mxu0 0.0
        %2614 = vmatpush1.msra.mxu0 0.0
        %2615 = vmatprep.subr.mxu0 0.0
        %2616 = vmatpush1.msra.mxu0 0.0
        %2617 = vmatprep.subr.mxu0 0.0
        %2618 = vmatpush1.msra.mxu0 0.0
        %2619 = vmatprep.subr.mxu0 0.0
        %2620 = vmatpush1.msra.mxu0 0.0
        %2621 = vmatprep.subr.mxu0 0.0
        %2622 = vmatpush1.msra.mxu0 0.0
        %2623 = vmatprep.subr.mxu0 0.0
        %2624 = vmatpush1.msra.mxu0 0.0
        %2625 = vmatprep.subr.mxu0 0.0
        %2626 = vmatpush1.msra.mxu0 0.0
        %2627 = vmatprep.subr.mxu0 0.0
        %2628 = vmatpush1.msra.mxu0 0.0
        %2629 = vmatprep.subr.mxu0 0.0
        %2630 = vmatpush1.msra.mxu0 0.0
        %2631 = vmatprep.subr.mxu0 0.0
        %2632 = vmatpush1.msra.mxu0 0.0
        %2633 = vmatprep.subr.mxu0 0.0
        %2634 = vmatpush1.msra.mxu0 0.0
        %2635 = vmatprep.subr.mxu0 0.0
        %2636 = vmatpush1.msra.mxu0 0.0
        %2637 = vmatprep.subr.mxu0 0.0
        %2638 = vmatpush1.msra.mxu0 0.0
        %2639 = vmatprep.subr.mxu0 0.0
        %2640 = vmatpush1.msra.mxu0 0.0
        %2641 = vmatprep.subr.mxu0 0.0
        %2642 = vmatpush1.msra.mxu0 0.0
        %2643 = vmatprep.subr.mxu0 0.0
        %2644 = vmatpush1.msra.mxu0 0.0
        %2645 = vmatprep.subr.mxu0 0.0
        %2646 = vmatpush1.msra.mxu0 0.0
        %2647 = vmatprep.subr.mxu0 0.0
        %2648 = vmatpush1.msra.mxu0 0.0
        %2649 = vmatprep.mubr.f32.mxu0 0.0
        %2650 = vmatmul.mubr.f32.gmra.mrb[0].mxu0 %v753
        %v2651 = vpop.f32.mrb[0].mxu0
        %v2652 = vadd.f32 0.0, %v2651
        %v2653 = vpop.f32.mrb[0].mxu0
        %2654 = vmatprep.mubr.f32.mxu0 0.0
        %2655 = vmatmul.mubr.f32.gmra.mrb[0].mxu0 %v756
        %v2656 = vpop.f32.mrb[0].mxu0
        %v2657 = vadd.f32 0.0, %v2656
        %v2658 = vpop.f32.mrb[0].mxu0
        %2659 = vmatprep.mubr.f32.mxu0 0.0
        %2660 = vmatmul.mubr.f32.gmra.mrb[0].mxu0 %v759
        %v2661 = vpop.f32.mrb[0].mxu0
        %v2662 = vadd.f32 0.0, %v2661
        %v2663 = vpop.f32.mrb[0].mxu0
        %2664 = vmatprep.mubr.f32.mxu0 0.0
        %2665 = vmatmul.mubr.f32.gmra.mrb[0].mxu0 %v762
        %v2666 = vpop.f32.mrb[0].mxu0
        %v2667 = vadd.f32 0.0, %v2666
        %v2668 = vpop.f32.mrb[0].mxu0
        %2669 = vdwg.mxu0
        %2670 = vmatprep.subr.mxu0 0.0
        %2671 = vmatpush1.msra.mxu0 %v2415
        %2672 = vmatprep.subr.mxu0 0.0
        %2673 = vmatpush1.msra.mxu0 %v2420
        %2674 = vmatprep.subr.mxu0 0.0
        %2675 = vmatpush1.msra.mxu0 0.0
        %2676 = vmatprep.subr.mxu0 0.0
        %2677 = vmatpush1.msra.mxu0 0.0
        %2678 = vmatprep.subr.mxu0 0.0
        %2679 = vmatpush1.msra.mxu0 0.0
        %2680 = vmatprep.subr.mxu0 0.0
        %2681 = vmatpush1.msra.mxu0 0.0
        %2682 = vmatprep.subr.mxu0 0.0
        %2683 = vmatpush1.msra.mxu0 0.0
        %2684 = vmatprep.subr.mxu0 0.0
        %2685 = vmatpush1.msra.mxu0 0.0
        %2686 = vmatprep.subr.mxu0 0.0
        %2687 = vmatpush1.msra.mxu0 0.0
        %2688 = vmatprep.subr.mxu0 0.0
        %2689 = vmatpush1.msra.mxu0 0.0
        %2690 = vmatprep.subr.mxu0 0.0
        %2691 = vmatpush1.msra.mxu0 0.0
        %2692 = vmatprep.subr.mxu0 0.0
        %2693 = vmatpush1.msra.mxu0 0.0
        %2694 = vmatprep.subr.mxu0 0.0
        %2695 = vmatpush1.msra.mxu0 0.0
        %2696 = vmatprep.subr.mxu0 0.0
        %2697 = vmatpush1.msra.mxu0 0.0
        %2698 = vmatprep.subr.mxu0 0.0
        %2699 = vmatpush1.msra.mxu0 0.0
        %2700 = vmatprep.subr.mxu0 0.0
        %2701 = vmatpush1.msra.mxu0 0.0
        %2702 = vmatprep.subr.mxu0 0.0
        %2703 = vmatpush1.msra.mxu0 0.0
        %2704 = vmatprep.subr.mxu0 0.0
        %2705 = vmatpush1.msra.mxu0 0.0
        %2706 = vmatprep.subr.mxu0 0.0
        %2707 = vmatpush1.msra.mxu0 0.0
        %2708 = vmatprep.subr.mxu0 0.0
        %2709 = vmatpush1.msra.mxu0 0.0
        %2710 = vmatprep.subr.mxu0 0.0
        %2711 = vmatpush1.msra.mxu0 0.0
        %2712 = vmatprep.subr.mxu0 0.0
        %2713 = vmatpush1.msra.mxu0 0.0
        %2714 = vmatprep.subr.mxu0 0.0
        %2715 = vmatpush1.msra.mxu0 0.0
        %2716 = vmatprep.subr.mxu0 0.0
        %2717 = vmatpush1.msra.mxu0 0.0
        %2718 = vmatprep.subr.mxu0 0.0
        %2719 = vmatpush1.msra.mxu0 0.0
        %2720 = vmatprep.subr.mxu0 0.0
        %2721 = vmatpush1.msra.mxu0 0.0
        %2722 = vmatprep.subr.mxu0 0.0
        %2723 = vmatpush1.msra.mxu0 0.0
        %2724 = vmatprep.subr.mxu0 0.0
        %2725 = vmatpush1.msra.mxu0 0.0
        %2726 = vmatprep.subr.mxu0 0.0
        %2727 = vmatpush1.msra.mxu0 0.0
        %2728 = vmatprep.subr.mxu0 0.0
        %2729 = vmatpush1.msra.mxu0 0.0
        %2730 = vmatprep.subr.mxu0 0.0
        %2731 = vmatpush1.msra.mxu0 0.0
        %2732 = vmatprep.subr.mxu0 0.0
        %2733 = vmatpush1.msra.mxu0 0.0
        %2734 = vmatprep.mubr.f32.mxu0 0.0
        %2735 = vmatmul.mubr.f32.gmra.mrb[0].mxu0 %v850
        %v2736 = vpop.f32.mrb[0].mxu0
        %v2737 = vadd.f32 %v2652, %v2736
        %v2738 = vpop.f32.mrb[0].mxu0
        %2739 = vmatprep.mubr.f32.mxu0 0.0
        %2740 = vmatmul.mubr.f32.gmra.mrb[0].mxu0 %v853
        %v2741 = vpop.f32.mrb[0].mxu0
        %v2742 = vadd.f32 %v2657, %v2741
        %v2743 = vpop.f32.mrb[0].mxu0
        %2744 = vmatprep.mubr.f32.mxu0 0.0
        %2745 = vmatmul.mubr.f32.gmra.mrb[0].mxu0 %v856
        %v2746 = vpop.f32.mrb[0].mxu0
        %v2747 = vadd.f32 %v2662, %v2746
        %v2748 = vpop.f32.mrb[0].mxu0
        %2749 = vmatprep.mubr.f32.mxu0 0.0
        %2750 = vmatmul.mubr.f32.gmra.mrb[0].mxu0 %v859
        %v2751 = vpop.f32.mrb[0].mxu0
        %v2752 = vadd.f32 %v2667, %v2751
        %v2753 = vpop.f32.mrb[0].mxu0
        %2754 = vdwg.mxu0
        %s2755 = scalar_lea.vmem %s286, 96 [#allocation9]
        %2756 = vst.msk [vmem:[%s2755] sm:$0xff] %vm946, %v2737
        %2757 = vst.msk [vmem:[%s2755 + $0x8] sm:$0xff] %vm946, %v2742
        %2758 = vst.msk [vmem:[%s2755 + $0x10] sm:$0xff] %vm946, %v2747
        %2759 = vst.msk [vmem:[%s2755 + $0x18] sm:$0xff] %vm946, %v2752
        %s2760 = sand.u32 %s156, 1
        %s2761 = scalar_lea.sflag [#allocation4], %s2760
        %s2762 = sand.u32 %s156, 1
        %s2763 = smul.addr %s2762, 128
        %s2764 = scalar_lea.vmem [#allocation9], %s2763
        // Predicated region
        $region53: #{tpu_custom_call.1} parent=39 // pred_check
          %p2765 = pneg %p166
        $region54: #{tpu_custom_call.1} parent=39 // pred_check_branch
          %2767 = sbr.rel (%p2765) target = $region56
        $region55: #{tpu_custom_call.1} parent=39 // pred_region
          %s2768 = smul.u32 4, %s27
          %s2770 = ssub.s32 2048, 2048
          %2771 = vsyncadd %s2761, %s2770
          %s2772 = smul.addr %s26, 16
          %s2773 = sadd.s32 %s2768, %s2772
          %s2774 = smul.addr %s2773, 128
          %s2775 = scalar_lea.hbm %s5, %s2774
          %s2776 = sshll.u32 %s2764, 4
          %s2777 = int_to_ptr.vmem [resolvable:$true] %s2776
          %2782 = dma.vmem_to_hbm [thread:$0]  %s2777, 2048, %s2775, %s2761, 128, 128, 8
        $region56: #{tpu_custom_call.1} parent=39 // pred_fallthru
          _
      $region40: #{tpu_custom_call.1} parent=5 // pred_fallthru
        _
      %p2783 = scmp.le.s32.totalorder 2, %s17
      // Predicated region
      $region57: #{tpu_custom_call.1} parent=5 // pred_check
        %p2784 = pneg %p2783
      $region58: #{tpu_custom_call.1} parent=5 // pred_check_branch
        %2786 = sbr.rel (%p2784) target = $region60
      $region59: #{tpu_custom_call.1} parent=5 // pred_region
        %s2787 = ssub.s32 %s17, 2
        // Predicated region
        $region61: #{tpu_custom_call.1} parent=59 // pred_check
          %p2788 = pneg %p172
        $region62: #{tpu_custom_call.1} parent=59 // pred_check_branch
          %2790 = sbr.rel (%p2788) target = $region64
        $region63: #{tpu_custom_call.1} parent=59 // pred_region
          %s2791 = sand.u32 %s157, 1
          %s2792 = scalar_lea.sflag [#allocation4], %s2791
          %s2793 = sand.u32 %s157, 1
          %s2794 = smul.addr %s2793, 128
          %s2795 = scalar_lea.vmem [#allocation9], %s2794
          %2796 = dma.done %s2792, 2048
        $region64: #{tpu_custom_call.1} parent=59 // pred_fallthru
          _
      $region60: #{tpu_custom_call.1} parent=5 // pred_fallthru
        _
    $region6: #{tpu_custom_call.1} parent=1 // loop_footer
      %s21 = sadd.s32 1, %s17
    $region7: #{tpu_custom_call.1} parent=1 // loop_footer_branch
      %16 = sbr.rel target = $region3
    $region8: #{tpu_custom_call.1} parent=1 // loop_exit
      _
    %2797 = vsyncpa [#allocation3], 1
    %s2798 = scalar_lea.sflag [#allocation3], 1
    %2799 = vsyncpa %s2798, 1
    %2800 = vsyncpa [#allocation4], 1
    %s2801 = scalar_lea.sflag [#allocation4], 1
    %2802 = vsyncpa %s2801, 1
    %2803 = vsyncpa [#allocation5], 1
    %s2804 = scalar_lea.sflag [#allocation5], 1
    %2805 = vsyncpa %s2804, 1
    %2806 = vsyncpa [#allocation7], 1

</llo_original>
